<compile_context>
chip_gen: v7x
topology: tpu7x:2x2x1
jax: 0.10.0
libtpu: 0.0.40
codegen_flags: <defaults>
</compile_context>

<pallas_src>
import functools

import numpy as np

import jax
import jax.numpy as jnp
from jax.experimental import pallas as pl
from jax.experimental.pallas import tpu as pltpu


_HEIGHT = 6
_WIDTHS = (16, 16, 8, 4, 2)     # input width of each conv layer (pool halves W)
_CIN = (1, 8, 16, 32, 32)       # input channels of each conv layer


# ----------------------------------------------------------------------------
# The single fused Pallas kernel
# ----------------------------------------------------------------------------
def _fused_forward_kernel(*refs, widths, height, tb):
    """Whole Multitask_cnn forward on VMEM-resident data (one batch tile).

    refs = (x, [w_mat, affine, mask] * 5, w_head, b_head, out, pool_buf)
      x        : (tb*height*widths[0], 1) f32  flat NHWC input rows (b,h,w order)
      w_mat    : (9*Cin, Cout) f32             conv weight in im2col layout
      affine   : (3, Cout) f32                 rows = [conv bias, BN scale, BN shift]
      mask     : (M, 9*Cin) f32                lane-dense validity of each 3x3 tap
      w_head   : (192, 3) f32                  [out_sl | out_rw], NHWC-permuted rows
      b_head   : (1, 3) f32
      out      : (tb, 8) f32                   [sl, rw0, rw1, sm0, sm1, 0, 0, 0]
      pool_buf : (tb*96, 32) f32 VMEM scratch  staging for strided pool/flatten reads
    """
    x_ref = refs[0]
    layer_refs = refs[1:1 + 3 * len(widths)]
    wh_ref, bh_ref, o_ref, buf_ref = refs[-4], refs[-3], refs[-2], refs[-1]

    x = x_ref[...]                                        # (tb*6*16, 1)
    for li, w_in in enumerate(widths):
        w_ref = layer_refs[3 * li]
        a_ref = layer_refs[3 * li + 1]
        m_ref = layer_refs[3 * li + 2]
        m_rows, cin = x.shape
        cout = w_ref.shape[1]

        # ---- in-kernel im2col: 9 cyclically rolled copies (XLU sublane roll).
        # Wrapped rows are exactly the out-of-image taps -> zeroed by the mask.
        taps = []
        for dy in (-1, 0, 1):
            for dx in (-1, 0, 1):
                s = dy * w_in + dx                       # flat row shift of this tap
                if s == 0:
                    taps.append(x)
                else:
                    taps.append(pltpu.roll(x, (-s) % m_rows, axis=0))
        patches = jnp.concatenate(taps, axis=1) * m_ref[...]      # (M, 9*Cin)

        # ---- conv (+bias) -> ReLU -> BatchNorm (inference affine), DEFAULT prec
        y = jnp.dot(patches, w_ref[...], preferred_element_type=jnp.float32)
        y = jnp.maximum(y + a_ref[0:1, :], 0.0)
        y = y * a_ref[1:2, :] + a_ref[2:3, :]

        # ---- MaxPool2d(kernel_size=[1, 2]) for conv2..conv5 ------------------
        # Rows are (b, h, w) with w fastest and W even, so the pool pairs are
        # adjacent rows: stage through scratch and read even/odd strided slices.
        if li > 0:
            m_out = m_rows // 2
            buf_ref[0:m_rows, 0:cout] = y
            even = buf_ref[pl.ds(0, m_out, stride=2), 0:cout]
            odd = buf_ref[pl.ds(1, m_out, stride=2), 0:cout]
            y = jnp.maximum(even, odd)
        x = y

    # ---- flatten (head weights pre-permuted to NHWC h*C+c order) + both heads
    rows, cout = x.shape                      # rows = tb*height, W == 1 now
    buf_ref[0:rows, 0:cout] = x
    parts = [buf_ref[pl.ds(h, tb, stride=height), 0:cout] for h in range(height)]
    feat = jnp.concatenate(parts, axis=1)                         # (tb, 192)

    logits = jnp.dot(feat, wh_ref[...], preferred_element_type=jnp.float32)
    logits = logits + bh_ref[...]
    sl = logits[:, 0:1]
    rw = logits[:, 1:3]
    mx = jnp.max(rw, axis=-1, keepdims=True)
    ex = jnp.exp(rw - mx)
    sm = ex / jnp.sum(ex, axis=-1, keepdims=True)
    o_ref[...] = jnp.concatenate(
        [sl, rw, sm, jnp.zeros((tb, 3), jnp.float32)], axis=1)


# ----------------------------------------------------------------------------
# Wrapper (one pallas_call, batch-tiled grid; all prep is one-time layout work)
# ----------------------------------------------------------------------------
def _tap_mask(batch, height, width, cin):
    """(M, 9*cin) f32 lane-dense mask: validity of each 3x3 tap per flat row."""
    r = np.arange(batch * height * width)
    h = (r // width) % height
    w = r % width
    cols = []
    for dy in (-1, 0, 1):
        for dx in (-1, 0, 1):
            ok = ((h + dy >= 0) & (h + dy < height) &
                  (w + dx >= 0) & (w + dx < width))
            cols.append(ok.astype(np.float32))
    m9 = np.stack(cols, axis=1)                        # (M, 9)
    return jnp.asarray(np.repeat(m9, cin, axis=1))     # (M, 9*cin), matches patches


def forward(x_nchw, params):
    """Fused Pallas forward. x_nchw: (B, 1, 6, 16) -> (sl, rw, softmax(rw))."""
    batch = x_nchw.shape[0]
    # Batch tile: 8 samples / grid step when divisible (keeps out-block rows a
    # multiple of 8), otherwise a single block.  "parallel" shards across the
    # two TensorCores on v7x; working set per block is << 1 MiB on all gens.
    tb = 8 if batch % 8 == 0 else batch
    grid = (batch // tb,)
    rows0 = _HEIGHT * _WIDTHS[0]                       # 96 rows per sample

    # NCHW (B,1,6,16) -> flat NHWC rows (B*6*16, 1); C == 1 so a pure reshape.
    x_flat = x_nchw.astype(jnp.float32).reshape(batch * rows0, 1)

    inputs = [x_flat]
    in_specs = [pl.BlockSpec((tb * rows0, 1), lambda i: (i, 0))]
    for li, layer in enumerate(params['conv']):
        cin, w_in = _CIN[li], _WIDTHS[li]
        cout = layer['w'].shape[0]
        # OIHW -> (ky, kx, ci, co) -> (9*Cin, Cout), matching in-kernel tap order.
        w_mat = jnp.transpose(layer['w'], (2, 3, 1, 0)).reshape(9 * cin, cout)
        affine = jnp.stack([layer['b'], layer['scale'], layer['shift']], axis=0)
        mask = _tap_mask(tb, _HEIGHT, w_in, cin)       # per-tile mask, reused
        inputs += [w_mat, affine, mask]
        in_specs += [pl.BlockSpec((9 * cin, cout), lambda i: (0, 0)),
                     pl.BlockSpec((3, cout), lambda i: (0, 0)),
                     pl.BlockSpec(mask.shape, lambda i: (0, 0))]

    # Merge both heads into one (192, 3) matrix and pre-permute rows from
    # PyTorch NCHW-flatten order (c*6 + h) to the kernel's NHWC order (h*32 + c).
    chan = params['sl_w'].shape[0] // _HEIGHT
    w_head = jnp.concatenate([params['sl_w'], params['rw_w']], axis=1)  # (192, 3)
    w_head = w_head.reshape(chan, _HEIGHT, 3).transpose(1, 0, 2).reshape(-1, 3)
    b_head = jnp.concatenate([params['sl_b'], params['rw_b']]).reshape(1, 3)
    inputs += [w_head, b_head]
    in_specs += [pl.BlockSpec((chan * _HEIGHT, 3), lambda i: (0, 0)),
                 pl.BlockSpec((1, 3), lambda i: (0, 0))]

    packed = pl.pallas_call(
        functools.partial(_fused_forward_kernel,
                          widths=_WIDTHS, height=_HEIGHT, tb=tb),
        out_shape=jax.ShapeDtypeStruct((batch, 8), jnp.float32),
        grid_spec=pltpu.PrefetchScalarGridSpec(
            num_scalar_prefetch=0,
            grid=grid,
            in_specs=in_specs,
            out_specs=pl.BlockSpec((tb, 8), lambda i: (i, 0)),
            scratch_shapes=[pltpu.VMEM((tb * rows0, 32), jnp.float32)]),
        compiler_params=pltpu.CompilerParams(
            dimension_semantics=("parallel",)),
    )(*inputs)
    return packed[:, 0:1], packed[:, 1:3], packed[:, 3:5]


# ----------------------------------------------------------------------------
# Pure-JAX reference (mirrors the PyTorch forward; full f32 matmuls)
# ----------------------------------------------------------------------------
def forward_reference(x_nchw, params):
    prec = jax.lax.Precision.HIGHEST
    x = jnp.transpose(x_nchw, (0, 2, 3, 1)).astype(jnp.float32)   # NCHW -> NHWC
    for li, layer in enumerate(params['conv']):
        B, H, W, cin = x.shape
        cout = layer['w'].shape[0]
        xpad = jnp.pad(x, ((0, 0), (1, 1), (1, 1), (0, 0)))
        wins = [xpad[:, ky:ky + H, kx:kx + W, :]
                for ky in range(3) for kx in range(3)]
        patches = jnp.concatenate(wins, axis=-1).reshape(B * H * W, 9 * cin)
        w_mat = jnp.transpose(layer['w'], (2, 3, 1, 0)).reshape(9 * cin, cout)
        y = jnp.dot(patches, w_mat, precision=prec)
        y = jnp.maximum(y + layer['b'][None, :], 0.0)               # Conv -> ReLU
        y = y * layer['scale'][None, :] + layer['shift'][None, :]   # -> BatchNorm
        x = y.reshape(B, H, W, cout)
        if li > 0:                                                  # MaxPool [1,2]
            x = x.reshape(B, H, W // 2, 2, cout).max(axis=3)
    B, H, W, C = x.shape
    feat = jnp.transpose(x, (0, 3, 1, 2)).reshape(B, C * H * W)     # NCHW flatten
    sl = jnp.dot(feat, params['sl_w'], precision=prec) + params['sl_b'][None, :]
    rw = jnp.dot(feat, params['rw_w'], precision=prec) + params['rw_b'][None, :]
    return sl, rw, jax.nn.softmax(rw, axis=1)


# ----------------------------------------------------------------------------
# Deterministic parameter initialization (shapes follow the PyTorch __init__)
# ----------------------------------------------------------------------------
def init_params(key):
    chans = [(1, 8), (8, 16), (16, 32), (32, 32), (32, 32)]
    params = {'conv': []}
    for cin, cout in chans:
        key, k1, k2, k3, k4, k5, k6 = jax.random.split(key, 7)
        w = 0.1 * jax.random.normal(k1, (cout, cin, 3, 3), jnp.float32)  # OIHW
        b = 0.1 * jax.random.normal(k2, (cout,), jnp.float32)
        gamma = jax.random.uniform(k3, (cout,), jnp.float32, 0.8, 1.2)
        beta = 0.1 * jax.random.normal(k4, (cout,), jnp.float32)
        rmean = 0.1 * jax.random.normal(k5, (cout,), jnp.float32)
        rvar = jax.random.uniform(k6, (cout,), jnp.float32, 0.5, 1.5)
        scale = gamma * jax.lax.rsqrt(rvar + 1e-5)
        shift = beta - rmean * scale
        params['conv'].append(dict(w=w, b=b, scale=scale, shift=shift))
    key, k1, k2, k3, k4 = jax.random.split(key, 5)
    params['sl_w'] = 0.1 * jax.random.normal(k1, (192, 1), jnp.float32)  # (in, out)
    params['sl_b'] = 0.1 * jax.random.normal(k2, (1,), jnp.float32)
    params['rw_w'] = 0.1 * jax.random.normal(k3, (192, 2), jnp.float32)
    params['rw_b'] = 0.1 * jax.random.normal(k4, (2,), jnp.float32)
    return params


if __name__ == "__main__":
    key = jax.random.PRNGKey(0)
    pkey, xkey = jax.random.split(key)
    params = init_params(pkey)
    # Input (B, C=1, H=6, W=16): after 4 width-halving pools -> 32*6*1 = 192 feats
    x = jax.random.normal(xkey, (2, 1, 6, 16), jnp.float32)

    out_sl, out_rw, out_sm = jax.block_until_ready(jax.jit(forward)(x, params))
    ref_sl, ref_rw, ref_sm = forward_reference(x, params)

    assert out_sl.shape == (2, 1) and out_rw.shape == (2, 2) and out_sm.shape == (2, 2)
    # Kernel matmuls use DEFAULT MXU precision (bf16 passes, per perf review);
    # the reference is full f32, so allow bf16-pass-level drift — structural
    # bugs would show up as O(0.1-1) errors, far above this tolerance.
    assert jnp.allclose(out_sl, ref_sl, atol=3e-2, rtol=3e-2)
    assert jnp.allclose(out_rw, ref_rw, atol=3e-2, rtol=3e-2)
    assert jnp.allclose(out_sm, ref_sm, atol=3e-2, rtol=3e-2)
    print("KERNEL_OK")
</pallas_src>

<mosaic_0001>
module attributes {stable_mosaic.version = 11 : i64} {
  func.func @_fused_forward_kernel(%arg0: i32, %arg1: memref<192x1xf32, #tpu.memory_space<vmem>>, %arg2: memref<9x8xf32, #tpu.memory_space<vmem>>, %arg3: memref<3x8xf32, #tpu.memory_space<vmem>>, %arg4: memref<192x9xf32, #tpu.memory_space<vmem>>, %arg5: memref<72x16xf32, #tpu.memory_space<vmem>>, %arg6: memref<3x16xf32, #tpu.memory_space<vmem>>, %arg7: memref<192x72xf32, #tpu.memory_space<vmem>>, %arg8: memref<144x32xf32, #tpu.memory_space<vmem>>, %arg9: memref<3x32xf32, #tpu.memory_space<vmem>>, %arg10: memref<96x144xf32, #tpu.memory_space<vmem>>, %arg11: memref<288x32xf32, #tpu.memory_space<vmem>>, %arg12: memref<3x32xf32, #tpu.memory_space<vmem>>, %arg13: memref<48x288xf32, #tpu.memory_space<vmem>>, %arg14: memref<288x32xf32, #tpu.memory_space<vmem>>, %arg15: memref<3x32xf32, #tpu.memory_space<vmem>>, %arg16: memref<24x288xf32, #tpu.memory_space<vmem>>, %arg17: memref<192x3xf32, #tpu.memory_space<vmem>>, %arg18: memref<1x3xf32, #tpu.memory_space<vmem>>, %arg19: memref<2x8xf32, #tpu.memory_space<vmem>>, %arg20: memref<192x32xf32, #tpu.memory_space<vmem>>) attributes {dimension_semantics = [#tpu.dimension_semantics<parallel>], iteration_bounds = array<i64: 1>, scalar_prefetch = 0 : i64, scratch_operands = 1 : i64, tpu.core_type = #tpu.core_type<tc>, window_params = [{transform_indices = @transform_0, window_bounds = array<i64: 192, 1>}, {pipeline_mode = #tpu.pipeline_mode<synchronous>, transform_indices = @transform_1, window_bounds = array<i64: 9, 8>}, {pipeline_mode = #tpu.pipeline_mode<synchronous>, transform_indices = @transform_2, window_bounds = array<i64: 3, 8>}, {pipeline_mode = #tpu.pipeline_mode<synchronous>, transform_indices = @transform_3, window_bounds = array<i64: 192, 9>}, {pipeline_mode = #tpu.pipeline_mode<synchronous>, transform_indices = @transform_4, window_bounds = array<i64: 72, 16>}, {pipeline_mode = #tpu.pipeline_mode<synchronous>, transform_indices = @transform_5, window_bounds = array<i64: 3, 16>}, {pipeline_mode = #tpu.pipeline_mode<synchronous>, transform_indices = @transform_6, window_bounds = array<i64: 192, 72>}, {pipeline_mode = #tpu.pipeline_mode<synchronous>, transform_indices = @transform_7, window_bounds = array<i64: 144, 32>}, {pipeline_mode = #tpu.pipeline_mode<synchronous>, transform_indices = @transform_8, window_bounds = array<i64: 3, 32>}, {pipeline_mode = #tpu.pipeline_mode<synchronous>, transform_indices = @transform_9, window_bounds = array<i64: 96, 144>}, {pipeline_mode = #tpu.pipeline_mode<synchronous>, transform_indices = @transform_10, window_bounds = array<i64: 288, 32>}, {pipeline_mode = #tpu.pipeline_mode<synchronous>, transform_indices = @transform_11, window_bounds = array<i64: 3, 32>}, {pipeline_mode = #tpu.pipeline_mode<synchronous>, transform_indices = @transform_12, window_bounds = array<i64: 48, 288>}, {pipeline_mode = #tpu.pipeline_mode<synchronous>, transform_indices = @transform_13, window_bounds = array<i64: 288, 32>}, {pipeline_mode = #tpu.pipeline_mode<synchronous>, transform_indices = @transform_14, window_bounds = array<i64: 3, 32>}, {pipeline_mode = #tpu.pipeline_mode<synchronous>, transform_indices = @transform_15, window_bounds = array<i64: 24, 288>}, {pipeline_mode = #tpu.pipeline_mode<synchronous>, transform_indices = @transform_16, window_bounds = array<i64: 192, 3>}, {pipeline_mode = #tpu.pipeline_mode<synchronous>, transform_indices = @transform_17, window_bounds = array<i64: 1, 3>}, {transform_indices = @transform_18, window_bounds = array<i64: 2, 8>}]} {
    %c0 = arith.constant 0 : index
    %c0_0 = arith.constant 0 : index
    %0 = vector.load %arg1[%c0, %c0_0] : memref<192x1xf32, #tpu.memory_space<vmem>>, vector<192x1xf32>
    %c17_i32 = arith.constant 17 : i32
    %1 = tpu.dynamic_rotate %0 by %c17_i32 dim 0 : vector<192x1xf32>, i32 -> vector<192x1xf32>
    %c16_i32 = arith.constant 16 : i32
    %2 = tpu.dynamic_rotate %0 by %c16_i32 dim 0 : vector<192x1xf32>, i32 -> vector<192x1xf32>
    %c15_i32 = arith.constant 15 : i32
    %3 = tpu.dynamic_rotate %0 by %c15_i32 dim 0 : vector<192x1xf32>, i32 -> vector<192x1xf32>
    %c1_i32 = arith.constant 1 : i32
    %4 = tpu.dynamic_rotate %0 by %c1_i32 dim 0 : vector<192x1xf32>, i32 -> vector<192x1xf32>
    %c191_i32 = arith.constant 191 : i32
    %5 = tpu.dynamic_rotate %0 by %c191_i32 dim 0 : vector<192x1xf32>, i32 -> vector<192x1xf32>
    %c177_i32 = arith.constant 177 : i32
    %6 = tpu.dynamic_rotate %0 by %c177_i32 dim 0 : vector<192x1xf32>, i32 -> vector<192x1xf32>
    %c176_i32 = arith.constant 176 : i32
    %7 = tpu.dynamic_rotate %0 by %c176_i32 dim 0 : vector<192x1xf32>, i32 -> vector<192x1xf32>
    %c175_i32 = arith.constant 175 : i32
    %8 = tpu.dynamic_rotate %0 by %c175_i32 dim 0 : vector<192x1xf32>, i32 -> vector<192x1xf32>
    %9 = tpu.concatenate %1, %2, %3, %4, %0, %5, %6, %7, %8 in 1 : vector<192x1xf32>, vector<192x1xf32>, vector<192x1xf32>, vector<192x1xf32>, vector<192x1xf32>, vector<192x1xf32>, vector<192x1xf32>, vector<192x1xf32>, vector<192x1xf32> -> vector<192x9xf32>
    %c0_1 = arith.constant 0 : index
    %c0_2 = arith.constant 0 : index
    %10 = vector.load %arg4[%c0_1, %c0_2] : memref<192x9xf32, #tpu.memory_space<vmem>>, vector<192x9xf32>
    %11 = arith.mulf %9, %10 : vector<192x9xf32>
    %c0_3 = arith.constant 0 : index
    %c0_4 = arith.constant 0 : index
    %12 = vector.load %arg2[%c0_3, %c0_4] : memref<9x8xf32, #tpu.memory_space<vmem>>, vector<9x8xf32>
    %cst = arith.constant dense<0.000000e+00> : vector<192x8xf32>
    %13 = tpu.matmul %11, %12, %cst {dimension_numbers = #tpu.dot_dimension_numbers<[1], [0], [0], [1], [0, 0, 1, 1], [], []>} : vector<192x9xf32>, vector<9x8xf32>, vector<192x8xf32> -> vector<192x8xf32>
    %c0_5 = arith.constant 0 : index
    %c0_6 = arith.constant 0 : index
    %14 = vector.load %arg3[%c0_5, %c0_6] : memref<3x8xf32, #tpu.memory_space<vmem>>, vector<1x8xf32>
    %15 = vector.broadcast %14 : vector<1x8xf32> to vector<192x8xf32>
    %16 = arith.addf %13, %15 : vector<192x8xf32>
    %cst_7 = arith.constant 0.000000e+00 : f32
    %17 = vector.broadcast %cst_7 : f32 to vector<192x8xf32>
    %18 = arith.maximumf %16, %17 : vector<192x8xf32>
    %c1 = arith.constant 1 : index
    %c0_8 = arith.constant 0 : index
    %19 = vector.load %arg3[%c1, %c0_8] : memref<3x8xf32, #tpu.memory_space<vmem>>, vector<1x8xf32>
    %20 = vector.broadcast %19 : vector<1x8xf32> to vector<192x8xf32>
    %21 = arith.mulf %18, %20 : vector<192x8xf32>
    %c2 = arith.constant 2 : index
    %c0_9 = arith.constant 0 : index
    %22 = vector.load %arg3[%c2, %c0_9] : memref<3x8xf32, #tpu.memory_space<vmem>>, vector<1x8xf32>
    %23 = vector.broadcast %22 : vector<1x8xf32> to vector<192x8xf32>
    %24 = arith.addf %21, %23 : vector<192x8xf32>
    %c17_i32_10 = arith.constant 17 : i32
    %25 = tpu.dynamic_rotate %24 by %c17_i32_10 dim 0 : vector<192x8xf32>, i32 -> vector<192x8xf32>
    %c16_i32_11 = arith.constant 16 : i32
    %26 = tpu.dynamic_rotate %24 by %c16_i32_11 dim 0 : vector<192x8xf32>, i32 -> vector<192x8xf32>
    %c15_i32_12 = arith.constant 15 : i32
    %27 = tpu.dynamic_rotate %24 by %c15_i32_12 dim 0 : vector<192x8xf32>, i32 -> vector<192x8xf32>
    %c1_i32_13 = arith.constant 1 : i32
    %28 = tpu.dynamic_rotate %24 by %c1_i32_13 dim 0 : vector<192x8xf32>, i32 -> vector<192x8xf32>
    %c191_i32_14 = arith.constant 191 : i32
    %29 = tpu.dynamic_rotate %24 by %c191_i32_14 dim 0 : vector<192x8xf32>, i32 -> vector<192x8xf32>
    %c177_i32_15 = arith.constant 177 : i32
    %30 = tpu.dynamic_rotate %24 by %c177_i32_15 dim 0 : vector<192x8xf32>, i32 -> vector<192x8xf32>
    %c176_i32_16 = arith.constant 176 : i32
    %31 = tpu.dynamic_rotate %24 by %c176_i32_16 dim 0 : vector<192x8xf32>, i32 -> vector<192x8xf32>
    %c175_i32_17 = arith.constant 175 : i32
    %32 = tpu.dynamic_rotate %24 by %c175_i32_17 dim 0 : vector<192x8xf32>, i32 -> vector<192x8xf32>
    %33 = tpu.concatenate %25, %26, %27, %28, %24, %29, %30, %31, %32 in 1 : vector<192x8xf32>, vector<192x8xf32>, vector<192x8xf32>, vector<192x8xf32>, vector<192x8xf32>, vector<192x8xf32>, vector<192x8xf32>, vector<192x8xf32>, vector<192x8xf32> -> vector<192x72xf32>
    %c0_18 = arith.constant 0 : index
    %c0_19 = arith.constant 0 : index
    %34 = vector.load %arg7[%c0_18, %c0_19] : memref<192x72xf32, #tpu.memory_space<vmem>>, vector<192x72xf32>
    %35 = arith.mulf %33, %34 : vector<192x72xf32>
    %c0_20 = arith.constant 0 : index
    %c0_21 = arith.constant 0 : index
    %36 = vector.load %arg5[%c0_20, %c0_21] : memref<72x16xf32, #tpu.memory_space<vmem>>, vector<72x16xf32>
    %cst_22 = arith.constant dense<0.000000e+00> : vector<192x16xf32>
    %37 = tpu.matmul %35, %36, %cst_22 {dimension_numbers = #tpu.dot_dimension_numbers<[1], [0], [0], [1], [0, 0, 1, 1], [], []>} : vector<192x72xf32>, vector<72x16xf32>, vector<192x16xf32> -> vector<192x16xf32>
    %c0_23 = arith.constant 0 : index
    %c0_24 = arith.constant 0 : index
    %38 = vector.load %arg6[%c0_23, %c0_24] : memref<3x16xf32, #tpu.memory_space<vmem>>, vector<1x16xf32>
    %39 = vector.broadcast %38 : vector<1x16xf32> to vector<192x16xf32>
    %40 = arith.addf %37, %39 : vector<192x16xf32>
    %cst_25 = arith.constant 0.000000e+00 : f32
    %41 = vector.broadcast %cst_25 : f32 to vector<192x16xf32>
    %42 = arith.maximumf %40, %41 : vector<192x16xf32>
    %c1_26 = arith.constant 1 : index
    %c0_27 = arith.constant 0 : index
    %43 = vector.load %arg6[%c1_26, %c0_27] : memref<3x16xf32, #tpu.memory_space<vmem>>, vector<1x16xf32>
    %44 = vector.broadcast %43 : vector<1x16xf32> to vector<192x16xf32>
    %45 = arith.mulf %42, %44 : vector<192x16xf32>
    %c2_28 = arith.constant 2 : index
    %c0_29 = arith.constant 0 : index
    %46 = vector.load %arg6[%c2_28, %c0_29] : memref<3x16xf32, #tpu.memory_space<vmem>>, vector<1x16xf32>
    %47 = vector.broadcast %46 : vector<1x16xf32> to vector<192x16xf32>
    %48 = arith.addf %45, %47 : vector<192x16xf32>
    %c0_30 = arith.constant 0 : index
    %c0_31 = arith.constant 0 : index
    %49 = vector.load %arg20[%c0_30, %c0_31] : memref<192x32xf32, #tpu.memory_space<vmem>>, vector<192x16xf32>
    tpu.vector_store %arg20[%c0_30, %c0_31], %48 {strides = array<i32>} : memref<192x32xf32, #tpu.memory_space<vmem>>, vector<192x16xf32>,
    %c0_32 = arith.constant 0 : index
    %c0_33 = arith.constant 0 : index
    %50 = tpu.strided_load %arg20[%c0_32, %c0_33] {strides = array<i32: 2, 1>} : memref<192x32xf32, #tpu.memory_space<vmem>>, vector<96x16xf32>
    %c1_34 = arith.constant 1 : index
    %c0_35 = arith.constant 0 : index
    %51 = tpu.strided_load %arg20[%c1_34, %c0_35] {strides = array<i32: 2, 1>} : memref<192x32xf32, #tpu.memory_space<vmem>>, vector<96x16xf32>
    %52 = arith.maximumf %50, %51 : vector<96x16xf32>
    %c9_i32 = arith.constant 9 : i32
    %53 = tpu.dynamic_rotate %52 by %c9_i32 dim 0 : vector<96x16xf32>, i32 -> vector<96x16xf32>
    %c8_i32 = arith.constant 8 : i32
    %54 = tpu.dynamic_rotate %52 by %c8_i32 dim 0 : vector<96x16xf32>, i32 -> vector<96x16xf32>
    %c7_i32 = arith.constant 7 : i32
    %55 = tpu.dynamic_rotate %52 by %c7_i32 dim 0 : vector<96x16xf32>, i32 -> vector<96x16xf32>
    %c1_i32_36 = arith.constant 1 : i32
    %56 = tpu.dynamic_rotate %52 by %c1_i32_36 dim 0 : vector<96x16xf32>, i32 -> vector<96x16xf32>
    %c95_i32 = arith.constant 95 : i32
    %57 = tpu.dynamic_rotate %52 by %c95_i32 dim 0 : vector<96x16xf32>, i32 -> vector<96x16xf32>
    %c89_i32 = arith.constant 89 : i32
    %58 = tpu.dynamic_rotate %52 by %c89_i32 dim 0 : vector<96x16xf32>, i32 -> vector<96x16xf32>
    %c88_i32 = arith.constant 88 : i32
    %59 = tpu.dynamic_rotate %52 by %c88_i32 dim 0 : vector<96x16xf32>, i32 -> vector<96x16xf32>
    %c87_i32 = arith.constant 87 : i32
    %60 = tpu.dynamic_rotate %52 by %c87_i32 dim 0 : vector<96x16xf32>, i32 -> vector<96x16xf32>
    %61 = tpu.concatenate %53, %54, %55, %56, %52, %57, %58, %59, %60 in 1 : vector<96x16xf32>, vector<96x16xf32>, vector<96x16xf32>, vector<96x16xf32>, vector<96x16xf32>, vector<96x16xf32>, vector<96x16xf32>, vector<96x16xf32>, vector<96x16xf32> -> vector<96x144xf32>
    %c0_37 = arith.constant 0 : index
    %c0_38 = arith.constant 0 : index
    %62 = vector.load %arg10[%c0_37, %c0_38] : memref<96x144xf32, #tpu.memory_space<vmem>>, vector<96x144xf32>
    %63 = arith.mulf %61, %62 : vector<96x144xf32>
    %c0_39 = arith.constant 0 : index
    %c0_40 = arith.constant 0 : index
    %64 = vector.load %arg8[%c0_39, %c0_40] : memref<144x32xf32, #tpu.memory_space<vmem>>, vector<144x32xf32>
    %cst_41 = arith.constant dense<0.000000e+00> : vector<96x32xf32>
    %65 = tpu.matmul %63, %64, %cst_41 {dimension_numbers = #tpu.dot_dimension_numbers<[1], [0], [0], [1], [0, 0, 1, 1], [], []>} : vector<96x144xf32>, vector<144x32xf32>, vector<96x32xf32> -> vector<96x32xf32>
    %c0_42 = arith.constant 0 : index
    %c0_43 = arith.constant 0 : index
    %66 = vector.load %arg9[%c0_42, %c0_43] : memref<3x32xf32, #tpu.memory_space<vmem>>, vector<1x32xf32>
    %67 = vector.broadcast %66 : vector<1x32xf32> to vector<96x32xf32>
    %68 = arith.addf %65, %67 : vector<96x32xf32>
    %cst_44 = arith.constant 0.000000e+00 : f32
    %69 = vector.broadcast %cst_44 : f32 to vector<96x32xf32>
    %70 = arith.maximumf %68, %69 : vector<96x32xf32>
    %c1_45 = arith.constant 1 : index
    %c0_46 = arith.constant 0 : index
    %71 = vector.load %arg9[%c1_45, %c0_46] : memref<3x32xf32, #tpu.memory_space<vmem>>, vector<1x32xf32>
    %72 = vector.broadcast %71 : vector<1x32xf32> to vector<96x32xf32>
    %73 = arith.mulf %70, %72 : vector<96x32xf32>
    %c2_47 = arith.constant 2 : index
    %c0_48 = arith.constant 0 : index
    %74 = vector.load %arg9[%c2_47, %c0_48] : memref<3x32xf32, #tpu.memory_space<vmem>>, vector<1x32xf32>
    %75 = vector.broadcast %74 : vector<1x32xf32> to vector<96x32xf32>
    %76 = arith.addf %73, %75 : vector<96x32xf32>
    %c0_49 = arith.constant 0 : index
    %c0_50 = arith.constant 0 : index
    %77 = vector.load %arg20[%c0_49, %c0_50] : memref<192x32xf32, #tpu.memory_space<vmem>>, vector<96x32xf32>
    tpu.vector_store %arg20[%c0_49, %c0_50], %76 {strides = array<i32>} : memref<192x32xf32, #tpu.memory_space<vmem>>, vector<96x32xf32>,
    %c0_51 = arith.constant 0 : index
    %c0_52 = arith.constant 0 : index
    %78 = tpu.strided_load %arg20[%c0_51, %c0_52] {strides = array<i32: 2, 1>} : memref<192x32xf32, #tpu.memory_space<vmem>>, vector<48x32xf32>
    %c1_53 = arith.constant 1 : index
    %c0_54 = arith.constant 0 : index
    %79 = tpu.strided_load %arg20[%c1_53, %c0_54] {strides = array<i32: 2, 1>} : memref<192x32xf32, #tpu.memory_space<vmem>>, vector<48x32xf32>
    %80 = arith.maximumf %78, %79 : vector<48x32xf32>
    %c5_i32 = arith.constant 5 : i32
    %81 = tpu.dynamic_rotate %80 by %c5_i32 dim 0 : vector<48x32xf32>, i32 -> vector<48x32xf32>
    %c4_i32 = arith.constant 4 : i32
    %82 = tpu.dynamic_rotate %80 by %c4_i32 dim 0 : vector<48x32xf32>, i32 -> vector<48x32xf32>
    %c3_i32 = arith.constant 3 : i32
    %83 = tpu.dynamic_rotate %80 by %c3_i32 dim 0 : vector<48x32xf32>, i32 -> vector<48x32xf32>
    %c1_i32_55 = arith.constant 1 : i32
    %84 = tpu.dynamic_rotate %80 by %c1_i32_55 dim 0 : vector<48x32xf32>, i32 -> vector<48x32xf32>
    %c47_i32 = arith.constant 47 : i32
    %85 = tpu.dynamic_rotate %80 by %c47_i32 dim 0 : vector<48x32xf32>, i32 -> vector<48x32xf32>
    %c45_i32 = arith.constant 45 : i32
    %86 = tpu.dynamic_rotate %80 by %c45_i32 dim 0 : vector<48x32xf32>, i32 -> vector<48x32xf32>
    %c44_i32 = arith.constant 44 : i32
    %87 = tpu.dynamic_rotate %80 by %c44_i32 dim 0 : vector<48x32xf32>, i32 -> vector<48x32xf32>
    %c43_i32 = arith.constant 43 : i32
    %88 = tpu.dynamic_rotate %80 by %c43_i32 dim 0 : vector<48x32xf32>, i32 -> vector<48x32xf32>
    %89 = tpu.concatenate %81, %82, %83, %84, %80, %85, %86, %87, %88 in 1 : vector<48x32xf32>, vector<48x32xf32>, vector<48x32xf32>, vector<48x32xf32>, vector<48x32xf32>, vector<48x32xf32>, vector<48x32xf32>, vector<48x32xf32>, vector<48x32xf32> -> vector<48x288xf32>
    %c0_56 = arith.constant 0 : index
    %c0_57 = arith.constant 0 : index
    %90 = vector.load %arg13[%c0_56, %c0_57] : memref<48x288xf32, #tpu.memory_space<vmem>>, vector<48x288xf32>
    %91 = arith.mulf %89, %90 : vector<48x288xf32>
    %c0_58 = arith.constant 0 : index
    %c0_59 = arith.constant 0 : index
    %92 = vector.load %arg11[%c0_58, %c0_59] : memref<288x32xf32, #tpu.memory_space<vmem>>, vector<288x32xf32>
    %cst_60 = arith.constant dense<0.000000e+00> : vector<48x32xf32>
    %93 = tpu.matmul %91, %92, %cst_60 {dimension_numbers = #tpu.dot_dimension_numbers<[1], [0], [0], [1], [0, 0, 1, 1], [], []>} : vector<48x288xf32>, vector<288x32xf32>, vector<48x32xf32> -> vector<48x32xf32>
    %c0_61 = arith.constant 0 : index
    %c0_62 = arith.constant 0 : index
    %94 = vector.load %arg12[%c0_61, %c0_62] : memref<3x32xf32, #tpu.memory_space<vmem>>, vector<1x32xf32>
    %95 = vector.broadcast %94 : vector<1x32xf32> to vector<48x32xf32>
    %96 = arith.addf %93, %95 : vector<48x32xf32>
    %cst_63 = arith.constant 0.000000e+00 : f32
    %97 = vector.broadcast %cst_63 : f32 to vector<48x32xf32>
    %98 = arith.maximumf %96, %97 : vector<48x32xf32>
    %c1_64 = arith.constant 1 : index
    %c0_65 = arith.constant 0 : index
    %99 = vector.load %arg12[%c1_64, %c0_65] : memref<3x32xf32, #tpu.memory_space<vmem>>, vector<1x32xf32>
    %100 = vector.broadcast %99 : vector<1x32xf32> to vector<48x32xf32>
    %101 = arith.mulf %98, %100 : vector<48x32xf32>
    %c2_66 = arith.constant 2 : index
    %c0_67 = arith.constant 0 : index
    %102 = vector.load %arg12[%c2_66, %c0_67] : memref<3x32xf32, #tpu.memory_space<vmem>>, vector<1x32xf32>
    %103 = vector.broadcast %102 : vector<1x32xf32> to vector<48x32xf32>
    %104 = arith.addf %101, %103 : vector<48x32xf32>
    %c0_68 = arith.constant 0 : index
    %c0_69 = arith.constant 0 : index
    %105 = vector.load %arg20[%c0_68, %c0_69] : memref<192x32xf32, #tpu.memory_space<vmem>>, vector<48x32xf32>
    tpu.vector_store %arg20[%c0_68, %c0_69], %104 {strides = array<i32>} : memref<192x32xf32, #tpu.memory_space<vmem>>, vector<48x32xf32>,
    %c0_70 = arith.constant 0 : index
    %c0_71 = arith.constant 0 : index
    %106 = tpu.strided_load %arg20[%c0_70, %c0_71] {strides = array<i32: 2, 1>} : memref<192x32xf32, #tpu.memory_space<vmem>>, vector<24x32xf32>
    %c1_72 = arith.constant 1 : index
    %c0_73 = arith.constant 0 : index
    %107 = tpu.strided_load %arg20[%c1_72, %c0_73] {strides = array<i32: 2, 1>} : memref<192x32xf32, #tpu.memory_space<vmem>>, vector<24x32xf32>
    %108 = arith.maximumf %106, %107 : vector<24x32xf32>
    %c3_i32_74 = arith.constant 3 : i32
    %109 = tpu.dynamic_rotate %108 by %c3_i32_74 dim 0 : vector<24x32xf32>, i32 -> vector<24x32xf32>
    %c2_i32 = arith.constant 2 : i32
    %110 = tpu.dynamic_rotate %108 by %c2_i32 dim 0 : vector<24x32xf32>, i32 -> vector<24x32xf32>
    %c1_i32_75 = arith.constant 1 : i32
    %111 = tpu.dynamic_rotate %108 by %c1_i32_75 dim 0 : vector<24x32xf32>, i32 -> vector<24x32xf32>
    %c1_i32_76 = arith.constant 1 : i32
    %112 = tpu.dynamic_rotate %108 by %c1_i32_76 dim 0 : vector<24x32xf32>, i32 -> vector<24x32xf32>
    %c23_i32 = arith.constant 23 : i32
    %113 = tpu.dynamic_rotate %108 by %c23_i32 dim 0 : vector<24x32xf32>, i32 -> vector<24x32xf32>
    %c23_i32_77 = arith.constant 23 : i32
    %114 = tpu.dynamic_rotate %108 by %c23_i32_77 dim 0 : vector<24x32xf32>, i32 -> vector<24x32xf32>
    %c22_i32 = arith.constant 22 : i32
    %115 = tpu.dynamic_rotate %108 by %c22_i32 dim 0 : vector<24x32xf32>, i32 -> vector<24x32xf32>
    %c21_i32 = arith.constant 21 : i32
    %116 = tpu.dynamic_rotate %108 by %c21_i32 dim 0 : vector<24x32xf32>, i32 -> vector<24x32xf32>
    %117 = tpu.concatenate %109, %110, %111, %112, %108, %113, %114, %115, %116 in 1 : vector<24x32xf32>, vector<24x32xf32>, vector<24x32xf32>, vector<24x32xf32>, vector<24x32xf32>, vector<24x32xf32>, vector<24x32xf32>, vector<24x32xf32>, vector<24x32xf32> -> vector<24x288xf32>
    %c0_78 = arith.constant 0 : index
    %c0_79 = arith.constant 0 : index
    %118 = vector.load %arg16[%c0_78, %c0_79] : memref<24x288xf32, #tpu.memory_space<vmem>>, vector<24x288xf32>
    %119 = arith.mulf %117, %118 : vector<24x288xf32>
    %c0_80 = arith.constant 0 : index
    %c0_81 = arith.constant 0 : index
    %120 = vector.load %arg14[%c0_80, %c0_81] : memref<288x32xf32, #tpu.memory_space<vmem>>, vector<288x32xf32>
    %cst_82 = arith.constant dense<0.000000e+00> : vector<24x32xf32>
    %121 = tpu.matmul %119, %120, %cst_82 {dimension_numbers = #tpu.dot_dimension_numbers<[1], [0], [0], [1], [0, 0, 1, 1], [], []>} : vector<24x288xf32>, vector<288x32xf32>, vector<24x32xf32> -> vector<24x32xf32>
    %c0_83 = arith.constant 0 : index
    %c0_84 = arith.constant 0 : index
    %122 = vector.load %arg15[%c0_83, %c0_84] : memref<3x32xf32, #tpu.memory_space<vmem>>, vector<1x32xf32>
    %123 = vector.broadcast %122 : vector<1x32xf32> to vector<24x32xf32>
    %124 = arith.addf %121, %123 : vector<24x32xf32>
    %cst_85 = arith.constant 0.000000e+00 : f32
    %125 = vector.broadcast %cst_85 : f32 to vector<24x32xf32>
    %126 = arith.maximumf %124, %125 : vector<24x32xf32>
    %c1_86 = arith.constant 1 : index
    %c0_87 = arith.constant 0 : index
    %127 = vector.load %arg15[%c1_86, %c0_87] : memref<3x32xf32, #tpu.memory_space<vmem>>, vector<1x32xf32>
    %128 = vector.broadcast %127 : vector<1x32xf32> to vector<24x32xf32>
    %129 = arith.mulf %126, %128 : vector<24x32xf32>
    %c2_88 = arith.constant 2 : index
    %c0_89 = arith.constant 0 : index
    %130 = vector.load %arg15[%c2_88, %c0_89] : memref<3x32xf32, #tpu.memory_space<vmem>>, vector<1x32xf32>
    %131 = vector.broadcast %130 : vector<1x32xf32> to vector<24x32xf32>
    %132 = arith.addf %129, %131 : vector<24x32xf32>
    %c0_90 = arith.constant 0 : index
    %c0_91 = arith.constant 0 : index
    %133 = vector.load %arg20[%c0_90, %c0_91] : memref<192x32xf32, #tpu.memory_space<vmem>>, vector<24x32xf32>
    tpu.vector_store %arg20[%c0_90, %c0_91], %132 {strides = array<i32>} : memref<192x32xf32, #tpu.memory_space<vmem>>, vector<24x32xf32>,
    %c0_92 = arith.constant 0 : index
    %c0_93 = arith.constant 0 : index
    %134 = tpu.strided_load %arg20[%c0_92, %c0_93] {strides = array<i32: 2, 1>} : memref<192x32xf32, #tpu.memory_space<vmem>>, vector<12x32xf32>
    %c1_94 = arith.constant 1 : index
    %c0_95 = arith.constant 0 : index
    %135 = tpu.strided_load %arg20[%c1_94, %c0_95] {strides = array<i32: 2, 1>} : memref<192x32xf32, #tpu.memory_space<vmem>>, vector<12x32xf32>
    %136 = arith.maximumf %134, %135 : vector<12x32xf32>
    %c0_96 = arith.constant 0 : index
    %c0_97 = arith.constant 0 : index
    %137 = vector.load %arg20[%c0_96, %c0_97] : memref<192x32xf32, #tpu.memory_space<vmem>>, vector<12x32xf32>
    tpu.vector_store %arg20[%c0_96, %c0_97], %136 {strides = array<i32>} : memref<192x32xf32, #tpu.memory_space<vmem>>, vector<12x32xf32>,
    %c0_98 = arith.constant 0 : index
    %c0_99 = arith.constant 0 : index
    %138 = tpu.strided_load %arg20[%c0_98, %c0_99] {strides = array<i32: 6, 1>} : memref<192x32xf32, #tpu.memory_space<vmem>>, vector<2x32xf32>
    %c1_100 = arith.constant 1 : index
    %c0_101 = arith.constant 0 : index
    %139 = tpu.strided_load %arg20[%c1_100, %c0_101] {strides = array<i32: 6, 1>} : memref<192x32xf32, #tpu.memory_space<vmem>>, vector<2x32xf32>
    %c2_102 = arith.constant 2 : index
    %c0_103 = arith.constant 0 : index
    %140 = tpu.strided_load %arg20[%c2_102, %c0_103] {strides = array<i32: 6, 1>} : memref<192x32xf32, #tpu.memory_space<vmem>>, vector<2x32xf32>
    %c3 = arith.constant 3 : index
    %c0_104 = arith.constant 0 : index
    %141 = tpu.strided_load %arg20[%c3, %c0_104] {strides = array<i32: 6, 1>} : memref<192x32xf32, #tpu.memory_space<vmem>>, vector<2x32xf32>
    %c4 = arith.constant 4 : index
    %c0_105 = arith.constant 0 : index
    %142 = tpu.strided_load %arg20[%c4, %c0_105] {strides = array<i32: 6, 1>} : memref<192x32xf32, #tpu.memory_space<vmem>>, vector<2x32xf32>
    %c5 = arith.constant 5 : index
    %c0_106 = arith.constant 0 : index
    %143 = tpu.strided_load %arg20[%c5, %c0_106] {strides = array<i32: 6, 1>} : memref<192x32xf32, #tpu.memory_space<vmem>>, vector<2x32xf32>
    %144 = tpu.concatenate %138, %139, %140, %141, %142, %143 in 1 : vector<2x32xf32>, vector<2x32xf32>, vector<2x32xf32>, vector<2x32xf32>, vector<2x32xf32>, vector<2x32xf32> -> vector<2x192xf32>
    %c0_107 = arith.constant 0 : index
    %c0_108 = arith.constant 0 : index
    %145 = vector.load %arg17[%c0_107, %c0_108] : memref<192x3xf32, #tpu.memory_space<vmem>>, vector<192x3xf32>
    %cst_109 = arith.constant dense<0.000000e+00> : vector<2x3xf32>
    %146 = tpu.matmul %144, %145, %cst_109 {dimension_numbers = #tpu.dot_dimension_numbers<[1], [0], [0], [1], [0, 0, 1, 1], [], []>} : vector<2x192xf32>, vector<192x3xf32>, vector<2x3xf32> -> vector<2x3xf32>
    %c0_110 = arith.constant 0 : index
    %c0_111 = arith.constant 0 : index
    %147 = vector.load %arg18[%c0_110, %c0_111] : memref<1x3xf32, #tpu.memory_space<vmem>>, vector<1x3xf32>
    %148 = vector.broadcast %147 : vector<1x3xf32> to vector<2x3xf32>
    %149 = arith.addf %146, %148 : vector<2x3xf32>
    %150 = vector.extract_strided_slice %149 {offsets = [0, 0], sizes = [2, 1], strides = [1, 1]} : vector<2x3xf32> to vector<2x1xf32>
    %151 = vector.extract_strided_slice %149 {offsets = [0, 1], sizes = [2, 2], strides = [1, 1]} : vector<2x3xf32> to vector<2x2xf32>
    %cst_112 = arith.constant dense<0xFF800000> : vector<2xf32>
    %152 = vector.multi_reduction <maximumf>, %151, %cst_112 [1] : vector<2x2xf32> to vector<2xf32>
    %153 = vector.shape_cast %152 : vector<2xf32> to vector<2x1xf32>
    %154 = vector.broadcast %153 : vector<2x1xf32> to vector<2x2xf32>
    %155 = arith.subf %151, %154 : vector<2x2xf32>
    %156 = math.exp %155 : vector<2x2xf32>
    %cst_113 = arith.constant dense<0.000000e+00> : vector<2xf32>
    %157 = vector.multi_reduction <add>, %156, %cst_113 [1] : vector<2x2xf32> to vector<2xf32>
    %158 = vector.shape_cast %157 : vector<2xf32> to vector<2x1xf32>
    %159 = vector.broadcast %158 : vector<2x1xf32> to vector<2x2xf32>
    %160 = arith.divf %156, %159 : vector<2x2xf32>
    %cst_114 = arith.constant 0.000000e+00 : f32
    %161 = vector.broadcast %cst_114 : f32 to vector<2x3xf32>
    %162 = tpu.concatenate %150, %151, %160, %161 in 1 : vector<2x1xf32>, vector<2x2xf32>, vector<2x2xf32>, vector<2x3xf32> -> vector<2x8xf32>
    %c0_115 = arith.constant 0 : index
    %c0_116 = arith.constant 0 : index
    %163 = vector.load %arg19[%c0_115, %c0_116] : memref<2x8xf32, #tpu.memory_space<vmem>>, vector<2x8xf32>
    tpu.vector_store %arg19[%c0_115, %c0_116], %162 {strides = array<i32>} : memref<2x8xf32, #tpu.memory_space<vmem>>, vector<2x8xf32>,
    return
  }
  func.func @transform_0(%arg0: i32) -> (i32, i32) {
    %c0_i32 = arith.constant 0 : i32
    %c0_i32_0 = arith.constant 0 : i32
    return %arg0, %c0_i32 : i32, i32
  }
  func.func @transform_1(%arg0: i32) -> (i32, i32) {
    %c0_i32 = arith.constant 0 : i32
    %c0_i32_0 = arith.constant 0 : i32
    %c0_i32_1 = arith.constant 0 : i32
    return %c0_i32, %c0_i32_0 : i32, i32
  }
  func.func @transform_2(%arg0: i32) -> (i32, i32) {
    %c0_i32 = arith.constant 0 : i32
    %c0_i32_0 = arith.constant 0 : i32
    %c0_i32_1 = arith.constant 0 : i32
    return %c0_i32, %c0_i32_0 : i32, i32
  }
  func.func @transform_3(%arg0: i32) -> (i32, i32) {
    %c0_i32 = arith.constant 0 : i32
    %c0_i32_0 = arith.constant 0 : i32
    %c0_i32_1 = arith.constant 0 : i32
    return %c0_i32, %c0_i32_0 : i32, i32
  }
  func.func @transform_4(%arg0: i32) -> (i32, i32) {
    %c0_i32 = arith.constant 0 : i32
    %c0_i32_0 = arith.constant 0 : i32
    %c0_i32_1 = arith.constant 0 : i32
    return %c0_i32, %c0_i32_0 : i32, i32
  }
  func.func @transform_5(%arg0: i32) -> (i32, i32) {
    %c0_i32 = arith.constant 0 : i32
    %c0_i32_0 = arith.constant 0 : i32
    %c0_i32_1 = arith.constant 0 : i32
    return %c0_i32, %c0_i32_0 : i32, i32
  }
  func.func @transform_6(%arg0: i32) -> (i32, i32) {
    %c0_i32 = arith.constant 0 : i32
    %c0_i32_0 = arith.constant 0 : i32
    %c0_i32_1 = arith.constant 0 : i32
    return %c0_i32, %c0_i32_0 : i32, i32
  }
  func.func @transform_7(%arg0: i32) -> (i32, i32) {
    %c0_i32 = arith.constant 0 : i32
    %c0_i32_0 = arith.constant 0 : i32
    %c0_i32_1 = arith.constant 0 : i32
    return %c0_i32, %c0_i32_0 : i32, i32
  }
  func.func @transform_8(%arg0: i32) -> (i32, i32) {
    %c0_i32 = arith.constant 0 : i32
    %c0_i32_0 = arith.constant 0 : i32
    %c0_i32_1 = arith.constant 0 : i32
    return %c0_i32, %c0_i32_0 : i32, i32
  }
  func.func @transform_9(%arg0: i32) -> (i32, i32) {
    %c0_i32 = arith.constant 0 : i32
    %c0_i32_0 = arith.constant 0 : i32
    %c0_i32_1 = arith.constant 0 : i32
    return %c0_i32, %c0_i32_0 : i32, i32
  }
  func.func @transform_10(%arg0: i32) -> (i32, i32) {
    %c0_i32 = arith.constant 0 : i32
    %c0_i32_0 = arith.constant 0 : i32
    %c0_i32_1 = arith.constant 0 : i32
    return %c0_i32, %c0_i32_0 : i32, i32
  }
  func.func @transform_11(%arg0: i32) -> (i32, i32) {
    %c0_i32 = arith.constant 0 : i32
    %c0_i32_0 = arith.constant 0 : i32
    %c0_i32_1 = arith.constant 0 : i32
    return %c0_i32, %c0_i32_0 : i32, i32
  }
  func.func @transform_12(%arg0: i32) -> (i32, i32) {
    %c0_i32 = arith.constant 0 : i32
    %c0_i32_0 = arith.constant 0 : i32
    %c0_i32_1 = arith.constant 0 : i32
    return %c0_i32, %c0_i32_0 : i32, i32
  }
  func.func @transform_13(%arg0: i32) -> (i32, i32) {
    %c0_i32 = arith.constant 0 : i32
    %c0_i32_0 = arith.constant 0 : i32
    %c0_i32_1 = arith.constant 0 : i32
    return %c0_i32, %c0_i32_0 : i32, i32
  }
  func.func @transform_14(%arg0: i32) -> (i32, i32) {
    %c0_i32 = arith.constant 0 : i32
    %c0_i32_0 = arith.constant 0 : i32
    %c0_i32_1 = arith.constant 0 : i32
    return %c0_i32, %c0_i32_0 : i32, i32
  }
  func.func @transform_15(%arg0: i32) -> (i32, i32) {
    %c0_i32 = arith.constant 0 : i32
    %c0_i32_0 = arith.constant 0 : i32
    %c0_i32_1 = arith.constant 0 : i32
    return %c0_i32, %c0_i32_0 : i32, i32
  }
  func.func @transform_16(%arg0: i32) -> (i32, i32) {
    %c0_i32 = arith.constant 0 : i32
    %c0_i32_0 = arith.constant 0 : i32
    %c0_i32_1 = arith.constant 0 : i32
    return %c0_i32, %c0_i32_0 : i32, i32
  }
  func.func @transform_17(%arg0: i32) -> (i32, i32) {
    %c0_i32 = arith.constant 0 : i32
    %c0_i32_0 = arith.constant 0 : i32
    %c0_i32_1 = arith.constant 0 : i32
    return %c0_i32, %c0_i32_0 : i32, i32
  }
  func.func @transform_18(%arg0: i32) -> (i32, i32) {
    %c0_i32 = arith.constant 0 : i32
    %c0_i32_0 = arith.constant 0 : i32
    return %arg0, %c0_i32 : i32, i32
  }
}

</mosaic_0001>

<llo_original>
// kernel: forward.1
$region0: #{forward.1}
  #allocation0 [shape = 'u32[]', space=smem, size = 0x4, offset = 0x4, fixed_abs, tag = 'smem constant byte address 0x4 - core index']
  #allocation1 [shape = 'u32[144,128]{1,0:T(1,128)}', space=vmem, size = 0x12000, scoped, tag = 'internal scratch']
  #allocation2 [shape = 'f32[192,32]{1,0:T(8,128)}', space=vmem, size = 0x18000, scoped, tag = 'scratch operand']
  %s0 = inlined_call_operand.vmem [shape: f32[192,1], index: 0, kind: input, shape index: {}]
  %s1 = inlined_call_operand.vmem [shape: f32[9,8], index: 1, kind: input, shape index: {}]
  %s2 = inlined_call_operand.vmem [shape: f32[3,8], index: 2, kind: input, shape index: {}]
  %s3 = inlined_call_operand.vmem [shape: f32[192,9], index: 3, kind: input, shape index: {}]
  %s4 = inlined_call_operand.vmem [shape: f32[72,16], index: 4, kind: input, shape index: {}]
  %s5 = inlined_call_operand.vmem [shape: f32[3,16], index: 5, kind: input, shape index: {}]
  %s6 = inlined_call_operand.vmem [shape: f32[192,72], index: 6, kind: input, shape index: {}]
  %s7 = inlined_call_operand.vmem [shape: f32[144,32], index: 7, kind: input, shape index: {}]
  %s8 = inlined_call_operand.vmem [shape: f32[3,32], index: 8, kind: input, shape index: {}]
  %s9 = inlined_call_operand.vmem [shape: f32[96,144], index: 9, kind: input, shape index: {}]
  %s10 = inlined_call_operand.vmem [shape: f32[288,32], index: 10, kind: input, shape index: {}]
  %s11 = inlined_call_operand.vmem [shape: f32[3,32], index: 11, kind: input, shape index: {}]
  %s12 = inlined_call_operand.vmem [shape: f32[48,288], index: 12, kind: input, shape index: {}]
  %s13 = inlined_call_operand.vmem [shape: f32[288,32], index: 13, kind: input, shape index: {}]
  %s14 = inlined_call_operand.vmem [shape: f32[3,32], index: 14, kind: input, shape index: {}]
  %s15 = inlined_call_operand.vmem [shape: f32[24,288], index: 15, kind: input, shape index: {}]
  %s16 = inlined_call_operand.vmem [shape: f32[192,3], index: 16, kind: input, shape index: {}]
  %s17 = inlined_call_operand.vmem [shape: f32[1,3], index: 17, kind: input, shape index: {}]
  %s18 = inlined_call_operand.vmem [shape: f32[2,8], index: 18, kind: output, shape index: {}]
  %s19 = sld [smem:[#allocation0]]
  $region82: #{forward.1} parent=0
    _
  %s21 = ssub.s32 1, %s19
  %s22 = scalar_select 0, %s21, %s19
  // Predicated region
  $region2: #{forward.1} parent=0 // pred_check
    _
  $region3: #{forward.1} parent=0 // pred_check_branch
    %24 = sbr.rel (0) target = $region5
  $region4: #{forward.1} parent=0 // pred_region
    _
  $region5: #{forward.1} parent=0 // pred_fallthru
    _
  // Predicated region
  $region6: #{forward.1} parent=0 // pred_check
    _
  $region7: #{forward.1} parent=0 // pred_check_branch
    %26 = sbr.rel (0) target = $region9
  $region8: #{forward.1} parent=0 // pred_region
    _
  $region9: #{forward.1} parent=0 // pred_fallthru
    _
  // Predicated region
  $region10: #{forward.1} parent=0 // pred_check
    _
  $region11: #{forward.1} parent=0 // pred_check_branch
    %28 = sbr.rel (0) target = $region13
  $region12: #{forward.1} parent=0 // pred_region
    _
  $region13: #{forward.1} parent=0 // pred_fallthru
    _
  // Predicated region
  $region14: #{forward.1} parent=0 // pred_check
    _
  $region15: #{forward.1} parent=0 // pred_check_branch
    %30 = sbr.rel (0) target = $region17
  $region16: #{forward.1} parent=0 // pred_region
    _
  $region17: #{forward.1} parent=0 // pred_fallthru
    _
  // Predicated region
  $region18: #{forward.1} parent=0 // pred_check
    _
  $region19: #{forward.1} parent=0 // pred_check_branch
    %32 = sbr.rel (0) target = $region21
  $region20: #{forward.1} parent=0 // pred_region
    _
  $region21: #{forward.1} parent=0 // pred_fallthru
    _
  // Predicated region
  $region22: #{forward.1} parent=0 // pred_check
    _
  $region23: #{forward.1} parent=0 // pred_check_branch
    %34 = sbr.rel (0) target = $region25
  $region24: #{forward.1} parent=0 // pred_region
    _
  $region25: #{forward.1} parent=0 // pred_fallthru
    _
  // Predicated region
  $region26: #{forward.1} parent=0 // pred_check
    _
  $region27: #{forward.1} parent=0 // pred_check_branch
    %36 = sbr.rel (0) target = $region29
  $region28: #{forward.1} parent=0 // pred_region
    _
  $region29: #{forward.1} parent=0 // pred_fallthru
    _
  // Predicated region
  $region30: #{forward.1} parent=0 // pred_check
    _
  $region31: #{forward.1} parent=0 // pred_check_branch
    %38 = sbr.rel (0) target = $region33
  $region32: #{forward.1} parent=0 // pred_region
    _
  $region33: #{forward.1} parent=0 // pred_fallthru
    _
  // Predicated region
  $region34: #{forward.1} parent=0 // pred_check
    _
  $region35: #{forward.1} parent=0 // pred_check_branch
    %40 = sbr.rel (0) target = $region37
  $region36: #{forward.1} parent=0 // pred_region
    _
  $region37: #{forward.1} parent=0 // pred_fallthru
    _
  // Predicated region
  $region38: #{forward.1} parent=0 // pred_check
    _
  $region39: #{forward.1} parent=0 // pred_check_branch
    %42 = sbr.rel (0) target = $region41
  $region40: #{forward.1} parent=0 // pred_region
    _
  $region41: #{forward.1} parent=0 // pred_fallthru
    _
  // Predicated region
  $region42: #{forward.1} parent=0 // pred_check
    _
  $region43: #{forward.1} parent=0 // pred_check_branch
    %44 = sbr.rel (0) target = $region45
  $region44: #{forward.1} parent=0 // pred_region
    _
  $region45: #{forward.1} parent=0 // pred_fallthru
    _
  // Predicated region
  $region46: #{forward.1} parent=0 // pred_check
    _
  $region47: #{forward.1} parent=0 // pred_check_branch
    %46 = sbr.rel (0) target = $region49
  $region48: #{forward.1} parent=0 // pred_region
    _
  $region49: #{forward.1} parent=0 // pred_fallthru
    _
  // Predicated region
  $region50: #{forward.1} parent=0 // pred_check
    _
  $region51: #{forward.1} parent=0 // pred_check_branch
    %48 = sbr.rel (0) target = $region53
  $region52: #{forward.1} parent=0 // pred_region
    _
  $region53: #{forward.1} parent=0 // pred_fallthru
    _
  // Predicated region
  $region54: #{forward.1} parent=0 // pred_check
    _
  $region55: #{forward.1} parent=0 // pred_check_branch
    %50 = sbr.rel (0) target = $region57
  $region56: #{forward.1} parent=0 // pred_region
    _
  $region57: #{forward.1} parent=0 // pred_fallthru
    _
  // Predicated region
  $region58: #{forward.1} parent=0 // pred_check
    _
  $region59: #{forward.1} parent=0 // pred_check_branch
    %52 = sbr.rel (0) target = $region61
  $region60: #{forward.1} parent=0 // pred_region
    _
  $region61: #{forward.1} parent=0 // pred_fallthru
    _
  // Predicated region
  $region62: #{forward.1} parent=0 // pred_check
    _
  $region63: #{forward.1} parent=0 // pred_check_branch
    %54 = sbr.rel (0) target = $region65
  $region64: #{forward.1} parent=0 // pred_region
    _
  $region65: #{forward.1} parent=0 // pred_fallthru
    _
  // Predicated region
  $region66: #{forward.1} parent=0 // pred_check
    _
  $region67: #{forward.1} parent=0 // pred_check_branch
    %56 = sbr.rel (0) target = $region69
  $region68: #{forward.1} parent=0 // pred_region
    _
  $region69: #{forward.1} parent=0 // pred_fallthru
    _
  // Predicated region
  $region70: #{forward.1} parent=0 // pred_check
    _
  $region71: #{forward.1} parent=0 // pred_check_branch
    %58 = sbr.rel (0) target = $region73
  $region72: #{forward.1} parent=0 // pred_region
    _
  $region73: #{forward.1} parent=0 // pred_fallthru
    _
  %v59 = vld [vmem:[%s0] sm:$0xff]
  %v60 = vld [vmem:[%s0 + $0x8] sm:$0xff]
  %v61 = vld [vmem:[%s0 + $0x10] sm:$0xff]
  %v62 = vld [vmem:[%s0 + $0x18] sm:$0xff]
  %v63 = vld [vmem:[%s0 + $0x20] sm:$0xff]
  %v64 = vld [vmem:[%s0 + $0x28] sm:$0xff]
  %v65 = vld [vmem:[%s0 + $0x30] sm:$0xff]
  %v66 = vld [vmem:[%s0 + $0x38] sm:$0xff]
  %v67 = vld [vmem:[%s0 + $0x40] sm:$0xff]
  %v68 = vld [vmem:[%s0 + $0x48] sm:$0xff]
  %v69 = vld [vmem:[%s0 + $0x50] sm:$0xff]
  %v70 = vld [vmem:[%s0 + $0x58] sm:$0xff]
  %v71 = vld [vmem:[%s0 + $0x60] sm:$0xff]
  %v72 = vld [vmem:[%s0 + $0x68] sm:$0xff]
  %v73 = vld [vmem:[%s0 + $0x70] sm:$0xff]
  %v74 = vld [vmem:[%s0 + $0x78] sm:$0xff]
  %v75 = vld [vmem:[%s0 + $0x80] sm:$0xff]
  %v76 = vld [vmem:[%s0 + $0x88] sm:$0xff]
  %v77 = vld [vmem:[%s0 + $0x90] sm:$0xff]
  %v78 = vld [vmem:[%s0 + $0x98] sm:$0xff]
  %v79 = vld [vmem:[%s0 + $0xa0] sm:$0xff]
  %v80 = vld [vmem:[%s0 + $0xa8] sm:$0xff]
  %v81 = vld [vmem:[%s0 + $0xb0] sm:$0xff]
  %v82 = vld [vmem:[%s0 + $0xb8] sm:$0xff]
  %v83 = vrot.slane %v59, 7
  %v84 = vrot.slane %v60, 7
  %v85 = vrot.slane %v61, 7
  %v86 = vrot.slane %v62, 7
  %v87 = vrot.slane %v63, 7
  %v88 = vrot.slane %v64, 7
  %v89 = vrot.slane %v65, 7
  %v90 = vrot.slane %v66, 7
  %v91 = vrot.slane %v67, 7
  %v92 = vrot.slane %v68, 7
  %v93 = vrot.slane %v69, 7
  %v94 = vrot.slane %v70, 7
  %v95 = vrot.slane %v71, 7
  %v96 = vrot.slane %v72, 7
  %v97 = vrot.slane %v73, 7
  %v98 = vrot.slane %v74, 7
  %v99 = vrot.slane %v75, 7
  %v100 = vrot.slane %v76, 7
  %v101 = vrot.slane %v77, 7
  %v102 = vrot.slane %v78, 7
  %v103 = vrot.slane %v79, 7
  %v104 = vrot.slane %v80, 7
  %v105 = vrot.slane %v81, 7
  %v106 = vrot.slane %v82, 7
  %v107 = vlaneseq
  %v108 = vshrl.u32 %v107, 7
  %vm109 = vcmp.lt.s32.totalorder %v108, 1
  %v110 = vsel %vm109, %v105, %v106
  %v111 = vsel %vm109, %v104, %v105
  %v112 = vsel %vm109, %v103, %v104
  %v113 = vsel %vm109, %v102, %v103
  %v114 = vsel %vm109, %v101, %v102
  %v115 = vsel %vm109, %v100, %v101
  %v116 = vsel %vm109, %v99, %v100
  %v117 = vsel %vm109, %v98, %v99
  %v118 = vsel %vm109, %v97, %v98
  %v119 = vsel %vm109, %v96, %v97
  %v120 = vsel %vm109, %v95, %v96
  %v121 = vsel %vm109, %v94, %v95
  %v122 = vsel %vm109, %v93, %v94
  %v123 = vsel %vm109, %v92, %v93
  %v124 = vsel %vm109, %v91, %v92
  %v125 = vsel %vm109, %v90, %v91
  %v126 = vsel %vm109, %v89, %v90
  %v127 = vsel %vm109, %v88, %v89
  %v128 = vsel %vm109, %v87, %v88
  %v129 = vsel %vm109, %v86, %v87
  %v130 = vsel %vm109, %v85, %v86
  %v131 = vsel %vm109, %v84, %v85
  %v132 = vsel %vm109, %v83, %v84
  %v133 = vsel %vm109, %v106, %v83
  %v134 = vrot.slane %v59, 1
  %v135 = vrot.slane %v60, 1
  %v136 = vrot.slane %v61, 1
  %v137 = vrot.slane %v62, 1
  %v138 = vrot.slane %v63, 1
  %v139 = vrot.slane %v64, 1
  %v140 = vrot.slane %v65, 1
  %v141 = vrot.slane %v66, 1
  %v142 = vrot.slane %v67, 1
  %v143 = vrot.slane %v68, 1
  %v144 = vrot.slane %v69, 1
  %v145 = vrot.slane %v70, 1
  %v146 = vrot.slane %v71, 1
  %v147 = vrot.slane %v72, 1
  %v148 = vrot.slane %v73, 1
  %v149 = vrot.slane %v74, 1
  %v150 = vrot.slane %v75, 1
  %v151 = vrot.slane %v76, 1
  %v152 = vrot.slane %v77, 1
  %v153 = vrot.slane %v78, 1
  %v154 = vrot.slane %v79, 1
  %v155 = vrot.slane %v80, 1
  %v156 = vrot.slane %v81, 1
  %v157 = vrot.slane %v82, 1
  %vm158 = vcmp.lt.s32.totalorder %v108, 7
  %v159 = vsel %vm158, %v156, %v157
  %v160 = vsel %vm158, %v155, %v156
  %v161 = vsel %vm158, %v154, %v155
  %v162 = vsel %vm158, %v153, %v154
  %v163 = vsel %vm158, %v152, %v153
  %v164 = vsel %vm158, %v151, %v152
  %v165 = vsel %vm158, %v150, %v151
  %v166 = vsel %vm158, %v149, %v150
  %v167 = vsel %vm158, %v148, %v149
  %v168 = vsel %vm158, %v147, %v148
  %v169 = vsel %vm158, %v146, %v147
  %v170 = vsel %vm158, %v145, %v146
  %v171 = vsel %vm158, %v144, %v145
  %v172 = vsel %vm158, %v143, %v144
  %v173 = vsel %vm158, %v142, %v143
  %v174 = vsel %vm158, %v141, %v142
  %v175 = vsel %vm158, %v140, %v141
  %v176 = vsel %vm158, %v139, %v140
  %v177 = vsel %vm158, %v138, %v139
  %v178 = vsel %vm158, %v137, %v138
  %v179 = vsel %vm158, %v136, %v137
  %v180 = vsel %vm158, %v135, %v136
  %v181 = vsel %vm158, %v134, %v135
  %v182 = vsel %vm158, %v157, %v134
  %207 = vrot.lane.b32.xlu0 %v81, 1
  %v208 = vpop.permute.xlu0 %207
  %209 = vrot.lane.b32.xlu0 %v82, 1
  %v210 = vpop.permute.xlu0 %209
  %211 = vrot.lane.b32.xlu0 %v59, 1
  %v212 = vpop.permute.xlu0 %211
  %213 = vrot.lane.b32.xlu0 %v60, 1
  %v214 = vpop.permute.xlu0 %213
  %215 = vrot.lane.b32.xlu0 %v61, 1
  %v216 = vpop.permute.xlu0 %215
  %217 = vrot.lane.b32.xlu0 %v62, 1
  %v218 = vpop.permute.xlu0 %217
  %219 = vrot.lane.b32.xlu0 %v63, 1
  %v220 = vpop.permute.xlu0 %219
  %221 = vrot.lane.b32.xlu0 %v64, 1
  %v222 = vpop.permute.xlu0 %221
  %223 = vrot.lane.b32.xlu0 %v65, 1
  %v224 = vpop.permute.xlu0 %223
  %225 = vrot.lane.b32.xlu0 %v66, 1
  %v226 = vpop.permute.xlu0 %225
  %227 = vrot.lane.b32.xlu0 %v67, 1
  %v228 = vpop.permute.xlu0 %227
  %229 = vrot.lane.b32.xlu0 %v68, 1
  %v230 = vpop.permute.xlu0 %229
  %231 = vrot.lane.b32.xlu0 %v69, 1
  %v232 = vpop.permute.xlu0 %231
  %233 = vrot.lane.b32.xlu0 %v70, 1
  %v234 = vpop.permute.xlu0 %233
  %235 = vrot.lane.b32.xlu0 %v71, 1
  %v236 = vpop.permute.xlu0 %235
  %237 = vrot.lane.b32.xlu0 %v72, 1
  %v238 = vpop.permute.xlu0 %237
  %239 = vrot.lane.b32.xlu0 %v73, 1
  %v240 = vpop.permute.xlu0 %239
  %241 = vrot.lane.b32.xlu0 %v74, 1
  %v242 = vpop.permute.xlu0 %241
  %243 = vrot.lane.b32.xlu0 %v75, 1
  %v244 = vpop.permute.xlu0 %243
  %245 = vrot.lane.b32.xlu0 %v76, 1
  %v246 = vpop.permute.xlu0 %245
  %247 = vrot.lane.b32.xlu0 %v77, 1
  %v248 = vpop.permute.xlu0 %247
  %249 = vrot.lane.b32.xlu0 %v78, 1
  %v250 = vpop.permute.xlu0 %249
  %251 = vrot.lane.b32.xlu0 %v79, 1
  %v252 = vpop.permute.xlu0 %251
  %253 = vrot.lane.b32.xlu0 %v80, 1
  %v254 = vpop.permute.xlu0 %253
  %303 = vrot.lane.b32.xlu0 %v159, 2
  %v304 = vpop.permute.xlu0 %303
  %305 = vrot.lane.b32.xlu0 %v182, 2
  %v306 = vpop.permute.xlu0 %305
  %307 = vrot.lane.b32.xlu0 %v181, 2
  %v308 = vpop.permute.xlu0 %307
  %309 = vrot.lane.b32.xlu0 %v180, 2
  %v310 = vpop.permute.xlu0 %309
  %311 = vrot.lane.b32.xlu0 %v179, 2
  %v312 = vpop.permute.xlu0 %311
  %313 = vrot.lane.b32.xlu0 %v178, 2
  %v314 = vpop.permute.xlu0 %313
  %315 = vrot.lane.b32.xlu0 %v177, 2
  %v316 = vpop.permute.xlu0 %315
  %317 = vrot.lane.b32.xlu0 %v176, 2
  %v318 = vpop.permute.xlu0 %317
  %319 = vrot.lane.b32.xlu0 %v175, 2
  %v320 = vpop.permute.xlu0 %319
  %321 = vrot.lane.b32.xlu0 %v174, 2
  %v322 = vpop.permute.xlu0 %321
  %323 = vrot.lane.b32.xlu0 %v173, 2
  %v324 = vpop.permute.xlu0 %323
  %325 = vrot.lane.b32.xlu0 %v172, 2
  %v326 = vpop.permute.xlu0 %325
  %327 = vrot.lane.b32.xlu0 %v171, 2
  %v328 = vpop.permute.xlu0 %327
  %329 = vrot.lane.b32.xlu0 %v170, 2
  %v330 = vpop.permute.xlu0 %329
  %331 = vrot.lane.b32.xlu0 %v169, 2
  %v332 = vpop.permute.xlu0 %331
  %333 = vrot.lane.b32.xlu0 %v168, 2
  %v334 = vpop.permute.xlu0 %333
  %335 = vrot.lane.b32.xlu0 %v167, 2
  %v336 = vpop.permute.xlu0 %335
  %337 = vrot.lane.b32.xlu0 %v166, 2
  %v338 = vpop.permute.xlu0 %337
  %339 = vrot.lane.b32.xlu0 %v165, 2
  %v340 = vpop.permute.xlu0 %339
  %341 = vrot.lane.b32.xlu0 %v164, 2
  %v342 = vpop.permute.xlu0 %341
  %343 = vrot.lane.b32.xlu0 %v163, 2
  %v344 = vpop.permute.xlu0 %343
  %345 = vrot.lane.b32.xlu0 %v162, 2
  %v346 = vpop.permute.xlu0 %345
  %347 = vrot.lane.b32.xlu0 %v161, 2
  %v348 = vpop.permute.xlu0 %347
  %349 = vrot.lane.b32.xlu0 %v160, 2
  %v350 = vpop.permute.xlu0 %349
  %399 = vrot.lane.b32.xlu0 %v133, 3
  %v400 = vpop.permute.xlu0 %399
  %401 = vrot.lane.b32.xlu0 %v132, 3
  %v402 = vpop.permute.xlu0 %401
  %403 = vrot.lane.b32.xlu0 %v131, 3
  %v404 = vpop.permute.xlu0 %403
  %405 = vrot.lane.b32.xlu0 %v130, 3
  %v406 = vpop.permute.xlu0 %405
  %407 = vrot.lane.b32.xlu0 %v129, 3
  %v408 = vpop.permute.xlu0 %407
  %409 = vrot.lane.b32.xlu0 %v128, 3
  %v410 = vpop.permute.xlu0 %409
  %411 = vrot.lane.b32.xlu0 %v127, 3
  %v412 = vpop.permute.xlu0 %411
  %413 = vrot.lane.b32.xlu0 %v126, 3
  %v414 = vpop.permute.xlu0 %413
  %415 = vrot.lane.b32.xlu0 %v125, 3
  %v416 = vpop.permute.xlu0 %415
  %417 = vrot.lane.b32.xlu0 %v124, 3
  %v418 = vpop.permute.xlu0 %417
  %419 = vrot.lane.b32.xlu0 %v123, 3
  %v420 = vpop.permute.xlu0 %419
  %421 = vrot.lane.b32.xlu0 %v122, 3
  %v422 = vpop.permute.xlu0 %421
  %423 = vrot.lane.b32.xlu0 %v121, 3
  %v424 = vpop.permute.xlu0 %423
  %425 = vrot.lane.b32.xlu0 %v120, 3
  %v426 = vpop.permute.xlu0 %425
  %427 = vrot.lane.b32.xlu0 %v119, 3
  %v428 = vpop.permute.xlu0 %427
  %429 = vrot.lane.b32.xlu0 %v118, 3
  %v430 = vpop.permute.xlu0 %429
  %431 = vrot.lane.b32.xlu0 %v117, 3
  %v432 = vpop.permute.xlu0 %431
  %433 = vrot.lane.b32.xlu0 %v116, 3
  %v434 = vpop.permute.xlu0 %433
  %435 = vrot.lane.b32.xlu0 %v115, 3
  %v436 = vpop.permute.xlu0 %435
  %437 = vrot.lane.b32.xlu0 %v114, 3
  %v438 = vpop.permute.xlu0 %437
  %439 = vrot.lane.b32.xlu0 %v113, 3
  %v440 = vpop.permute.xlu0 %439
  %441 = vrot.lane.b32.xlu0 %v112, 3
  %v442 = vpop.permute.xlu0 %441
  %443 = vrot.lane.b32.xlu0 %v111, 3
  %v444 = vpop.permute.xlu0 %443
  %445 = vrot.lane.b32.xlu0 %v110, 3
  %v446 = vpop.permute.xlu0 %445
  %471 = vrot.lane.b32.xlu0 %v59, 4
  %v472 = vpop.permute.xlu0 %471
  %473 = vrot.lane.b32.xlu0 %v60, 4
  %v474 = vpop.permute.xlu0 %473
  %475 = vrot.lane.b32.xlu0 %v61, 4
  %v476 = vpop.permute.xlu0 %475
  %477 = vrot.lane.b32.xlu0 %v62, 4
  %v478 = vpop.permute.xlu0 %477
  %479 = vrot.lane.b32.xlu0 %v63, 4
  %v480 = vpop.permute.xlu0 %479
  %481 = vrot.lane.b32.xlu0 %v64, 4
  %v482 = vpop.permute.xlu0 %481
  %483 = vrot.lane.b32.xlu0 %v65, 4
  %v484 = vpop.permute.xlu0 %483
  %485 = vrot.lane.b32.xlu0 %v66, 4
  %v486 = vpop.permute.xlu0 %485
  %487 = vrot.lane.b32.xlu0 %v67, 4
  %v488 = vpop.permute.xlu0 %487
  %489 = vrot.lane.b32.xlu0 %v68, 4
  %v490 = vpop.permute.xlu0 %489
  %491 = vrot.lane.b32.xlu0 %v69, 4
  %v492 = vpop.permute.xlu0 %491
  %493 = vrot.lane.b32.xlu0 %v70, 4
  %v494 = vpop.permute.xlu0 %493
  %495 = vrot.lane.b32.xlu0 %v71, 4
  %v496 = vpop.permute.xlu0 %495
  %497 = vrot.lane.b32.xlu0 %v72, 4
  %v498 = vpop.permute.xlu0 %497
  %499 = vrot.lane.b32.xlu0 %v73, 4
  %v500 = vpop.permute.xlu0 %499
  %501 = vrot.lane.b32.xlu0 %v74, 4
  %v502 = vpop.permute.xlu0 %501
  %503 = vrot.lane.b32.xlu0 %v75, 4
  %v504 = vpop.permute.xlu0 %503
  %505 = vrot.lane.b32.xlu0 %v76, 4
  %v506 = vpop.permute.xlu0 %505
  %507 = vrot.lane.b32.xlu0 %v77, 4
  %v508 = vpop.permute.xlu0 %507
  %509 = vrot.lane.b32.xlu0 %v78, 4
  %v510 = vpop.permute.xlu0 %509
  %511 = vrot.lane.b32.xlu0 %v79, 4
  %v512 = vpop.permute.xlu0 %511
  %513 = vrot.lane.b32.xlu0 %v80, 4
  %v514 = vpop.permute.xlu0 %513
  %515 = vrot.lane.b32.xlu0 %v81, 4
  %v516 = vpop.permute.xlu0 %515
  %517 = vrot.lane.b32.xlu0 %v82, 4
  %v518 = vpop.permute.xlu0 %517
  %543 = vrot.lane.b32.xlu0 %v181, 5
  %v544 = vpop.permute.xlu0 %543
  %545 = vrot.lane.b32.xlu0 %v180, 5
  %v546 = vpop.permute.xlu0 %545
  %547 = vrot.lane.b32.xlu0 %v179, 5
  %v548 = vpop.permute.xlu0 %547
  %549 = vrot.lane.b32.xlu0 %v178, 5
  %v550 = vpop.permute.xlu0 %549
  %551 = vrot.lane.b32.xlu0 %v177, 5
  %v552 = vpop.permute.xlu0 %551
  %553 = vrot.lane.b32.xlu0 %v176, 5
  %v554 = vpop.permute.xlu0 %553
  %555 = vrot.lane.b32.xlu0 %v175, 5
  %v556 = vpop.permute.xlu0 %555
  %557 = vrot.lane.b32.xlu0 %v174, 5
  %v558 = vpop.permute.xlu0 %557
  %559 = vrot.lane.b32.xlu0 %v173, 5
  %v560 = vpop.permute.xlu0 %559
  %561 = vrot.lane.b32.xlu0 %v172, 5
  %v562 = vpop.permute.xlu0 %561
  %563 = vrot.lane.b32.xlu0 %v171, 5
  %v564 = vpop.permute.xlu0 %563
  %565 = vrot.lane.b32.xlu0 %v170, 5
  %v566 = vpop.permute.xlu0 %565
  %567 = vrot.lane.b32.xlu0 %v169, 5
  %v568 = vpop.permute.xlu0 %567
  %569 = vrot.lane.b32.xlu0 %v168, 5
  %v570 = vpop.permute.xlu0 %569
  %571 = vrot.lane.b32.xlu0 %v167, 5
  %v572 = vpop.permute.xlu0 %571
  %573 = vrot.lane.b32.xlu0 %v166, 5
  %v574 = vpop.permute.xlu0 %573
  %575 = vrot.lane.b32.xlu0 %v165, 5
  %v576 = vpop.permute.xlu0 %575
  %577 = vrot.lane.b32.xlu0 %v164, 5
  %v578 = vpop.permute.xlu0 %577
  %579 = vrot.lane.b32.xlu0 %v163, 5
  %v580 = vpop.permute.xlu0 %579
  %581 = vrot.lane.b32.xlu0 %v162, 5
  %v582 = vpop.permute.xlu0 %581
  %583 = vrot.lane.b32.xlu0 %v161, 5
  %v584 = vpop.permute.xlu0 %583
  %585 = vrot.lane.b32.xlu0 %v160, 5
  %v586 = vpop.permute.xlu0 %585
  %587 = vrot.lane.b32.xlu0 %v159, 5
  %v588 = vpop.permute.xlu0 %587
  %589 = vrot.lane.b32.xlu0 %v182, 5
  %v590 = vpop.permute.xlu0 %589
  %615 = vrot.lane.b32.xlu0 %v131, 6
  %v616 = vpop.permute.xlu0 %615
  %617 = vrot.lane.b32.xlu0 %v130, 6
  %v618 = vpop.permute.xlu0 %617
  %619 = vrot.lane.b32.xlu0 %v129, 6
  %v620 = vpop.permute.xlu0 %619
  %621 = vrot.lane.b32.xlu0 %v128, 6
  %v622 = vpop.permute.xlu0 %621
  %623 = vrot.lane.b32.xlu0 %v127, 6
  %v624 = vpop.permute.xlu0 %623
  %625 = vrot.lane.b32.xlu0 %v126, 6
  %v626 = vpop.permute.xlu0 %625
  %627 = vrot.lane.b32.xlu0 %v125, 6
  %v628 = vpop.permute.xlu0 %627
  %629 = vrot.lane.b32.xlu0 %v124, 6
  %v630 = vpop.permute.xlu0 %629
  %631 = vrot.lane.b32.xlu0 %v123, 6
  %v632 = vpop.permute.xlu0 %631
  %633 = vrot.lane.b32.xlu0 %v122, 6
  %v634 = vpop.permute.xlu0 %633
  %635 = vrot.lane.b32.xlu0 %v121, 6
  %v636 = vpop.permute.xlu0 %635
  %637 = vrot.lane.b32.xlu0 %v120, 6
  %v638 = vpop.permute.xlu0 %637
  %639 = vrot.lane.b32.xlu0 %v119, 6
  %v640 = vpop.permute.xlu0 %639
  %641 = vrot.lane.b32.xlu0 %v118, 6
  %v642 = vpop.permute.xlu0 %641
  %643 = vrot.lane.b32.xlu0 %v117, 6
  %v644 = vpop.permute.xlu0 %643
  %645 = vrot.lane.b32.xlu0 %v116, 6
  %v646 = vpop.permute.xlu0 %645
  %647 = vrot.lane.b32.xlu0 %v115, 6
  %v648 = vpop.permute.xlu0 %647
  %649 = vrot.lane.b32.xlu0 %v114, 6
  %v650 = vpop.permute.xlu0 %649
  %651 = vrot.lane.b32.xlu0 %v113, 6
  %v652 = vpop.permute.xlu0 %651
  %653 = vrot.lane.b32.xlu0 %v112, 6
  %v654 = vpop.permute.xlu0 %653
  %655 = vrot.lane.b32.xlu0 %v111, 6
  %v656 = vpop.permute.xlu0 %655
  %657 = vrot.lane.b32.xlu0 %v110, 6
  %v658 = vpop.permute.xlu0 %657
  %659 = vrot.lane.b32.xlu0 %v133, 6
  %v660 = vpop.permute.xlu0 %659
  %661 = vrot.lane.b32.xlu0 %v132, 6
  %v662 = vpop.permute.xlu0 %661
  %687 = vrot.lane.b32.xlu0 %v61, 7
  %v688 = vpop.permute.xlu0 %687
  %689 = vrot.lane.b32.xlu0 %v62, 7
  %v690 = vpop.permute.xlu0 %689
  %691 = vrot.lane.b32.xlu0 %v63, 7
  %v692 = vpop.permute.xlu0 %691
  %693 = vrot.lane.b32.xlu0 %v64, 7
  %v694 = vpop.permute.xlu0 %693
  %695 = vrot.lane.b32.xlu0 %v65, 7
  %v696 = vpop.permute.xlu0 %695
  %697 = vrot.lane.b32.xlu0 %v66, 7
  %v698 = vpop.permute.xlu0 %697
  %699 = vrot.lane.b32.xlu0 %v67, 7
  %v700 = vpop.permute.xlu0 %699
  %701 = vrot.lane.b32.xlu0 %v68, 7
  %v702 = vpop.permute.xlu0 %701
  %703 = vrot.lane.b32.xlu0 %v69, 7
  %v704 = vpop.permute.xlu0 %703
  %705 = vrot.lane.b32.xlu0 %v70, 7
  %v706 = vpop.permute.xlu0 %705
  %707 = vrot.lane.b32.xlu0 %v71, 7
  %v708 = vpop.permute.xlu0 %707
  %709 = vrot.lane.b32.xlu0 %v72, 7
  %v710 = vpop.permute.xlu0 %709
  %711 = vrot.lane.b32.xlu0 %v73, 7
  %v712 = vpop.permute.xlu0 %711
  %713 = vrot.lane.b32.xlu0 %v74, 7
  %v714 = vpop.permute.xlu0 %713
  %715 = vrot.lane.b32.xlu0 %v75, 7
  %v716 = vpop.permute.xlu0 %715
  %717 = vrot.lane.b32.xlu0 %v76, 7
  %v718 = vpop.permute.xlu0 %717
  %719 = vrot.lane.b32.xlu0 %v77, 7
  %v720 = vpop.permute.xlu0 %719
  %721 = vrot.lane.b32.xlu0 %v78, 7
  %v722 = vpop.permute.xlu0 %721
  %723 = vrot.lane.b32.xlu0 %v79, 7
  %v724 = vpop.permute.xlu0 %723
  %725 = vrot.lane.b32.xlu0 %v80, 7
  %v726 = vpop.permute.xlu0 %725
  %727 = vrot.lane.b32.xlu0 %v81, 7
  %v728 = vpop.permute.xlu0 %727
  %729 = vrot.lane.b32.xlu0 %v82, 7
  %v730 = vpop.permute.xlu0 %729
  %731 = vrot.lane.b32.xlu0 %v59, 7
  %v732 = vpop.permute.xlu0 %731
  %733 = vrot.lane.b32.xlu0 %v60, 7
  %v734 = vpop.permute.xlu0 %733
  %759 = vrot.lane.b32.xlu0 %v179, 8
  %v760 = vpop.permute.xlu0 %759
  %761 = vrot.lane.b32.xlu0 %v178, 8
  %v762 = vpop.permute.xlu0 %761
  %763 = vrot.lane.b32.xlu0 %v177, 8
  %v764 = vpop.permute.xlu0 %763
  %765 = vrot.lane.b32.xlu0 %v176, 8
  %v766 = vpop.permute.xlu0 %765
  %767 = vrot.lane.b32.xlu0 %v175, 8
  %v768 = vpop.permute.xlu0 %767
  %769 = vrot.lane.b32.xlu0 %v174, 8
  %v770 = vpop.permute.xlu0 %769
  %771 = vrot.lane.b32.xlu0 %v173, 8
  %v772 = vpop.permute.xlu0 %771
  %773 = vrot.lane.b32.xlu0 %v172, 8
  %v774 = vpop.permute.xlu0 %773
  %775 = vrot.lane.b32.xlu0 %v171, 8
  %v776 = vpop.permute.xlu0 %775
  %777 = vrot.lane.b32.xlu0 %v170, 8
  %v778 = vpop.permute.xlu0 %777
  %779 = vrot.lane.b32.xlu0 %v169, 8
  %v780 = vpop.permute.xlu0 %779
  %781 = vrot.lane.b32.xlu0 %v168, 8
  %v782 = vpop.permute.xlu0 %781
  %783 = vrot.lane.b32.xlu0 %v167, 8
  %v784 = vpop.permute.xlu0 %783
  %785 = vrot.lane.b32.xlu0 %v166, 8
  %v786 = vpop.permute.xlu0 %785
  %787 = vrot.lane.b32.xlu0 %v165, 8
  %v788 = vpop.permute.xlu0 %787
  %789 = vrot.lane.b32.xlu0 %v164, 8
  %v790 = vpop.permute.xlu0 %789
  %791 = vrot.lane.b32.xlu0 %v163, 8
  %v792 = vpop.permute.xlu0 %791
  %793 = vrot.lane.b32.xlu0 %v162, 8
  %v794 = vpop.permute.xlu0 %793
  %795 = vrot.lane.b32.xlu0 %v161, 8
  %v796 = vpop.permute.xlu0 %795
  %797 = vrot.lane.b32.xlu0 %v160, 8
  %v798 = vpop.permute.xlu0 %797
  %799 = vrot.lane.b32.xlu0 %v159, 8
  %v800 = vpop.permute.xlu0 %799
  %801 = vrot.lane.b32.xlu0 %v182, 8
  %v802 = vpop.permute.xlu0 %801
  %803 = vrot.lane.b32.xlu0 %v181, 8
  %v804 = vpop.permute.xlu0 %803
  %805 = vrot.lane.b32.xlu0 %v180, 8
  %v806 = vpop.permute.xlu0 %805
  %vm831 = vcmask 7168
  %v832 = vsel %vm831, %v111, %v208
  %v833 = vsel %vm831, %v110, %v210
  %v834 = vsel %vm831, %v133, %v212
  %v835 = vsel %vm831, %v132, %v214
  %v836 = vsel %vm831, %v131, %v216
  %v837 = vsel %vm831, %v130, %v218
  %v838 = vsel %vm831, %v129, %v220
  %v839 = vsel %vm831, %v128, %v222
  %v840 = vsel %vm831, %v127, %v224
  %v841 = vsel %vm831, %v126, %v226
  %v842 = vsel %vm831, %v125, %v228
  %v843 = vsel %vm831, %v124, %v230
  %v844 = vsel %vm831, %v123, %v232
  %v845 = vsel %vm831, %v122, %v234
  %v846 = vsel %vm831, %v121, %v236
  %v847 = vsel %vm831, %v120, %v238
  %v848 = vsel %vm831, %v119, %v240
  %v849 = vsel %vm831, %v118, %v242
  %v850 = vsel %vm831, %v117, %v244
  %v851 = vsel %vm831, %v116, %v246
  %v852 = vsel %vm831, %v115, %v248
  %v853 = vsel %vm831, %v114, %v250
  %v854 = vsel %vm831, %v113, %v252
  %v855 = vsel %vm831, %v112, %v254
  %vm856 = vcmask 15360
  %v857 = vsel %vm856, %v832, %v304
  %v858 = vsel %vm856, %v833, %v306
  %v859 = vsel %vm856, %v834, %v308
  %v860 = vsel %vm856, %v835, %v310
  %v861 = vsel %vm856, %v836, %v312
  %v862 = vsel %vm856, %v837, %v314
  %v863 = vsel %vm856, %v838, %v316
  %v864 = vsel %vm856, %v839, %v318
  %v865 = vsel %vm856, %v840, %v320
  %v866 = vsel %vm856, %v841, %v322
  %v867 = vsel %vm856, %v842, %v324
  %v868 = vsel %vm856, %v843, %v326
  %v869 = vsel %vm856, %v844, %v328
  %v870 = vsel %vm856, %v845, %v330
  %v871 = vsel %vm856, %v846, %v332
  %v872 = vsel %vm856, %v847, %v334
  %v873 = vsel %vm856, %v848, %v336
  %v874 = vsel %vm856, %v849, %v338
  %v875 = vsel %vm856, %v850, %v340
  %v876 = vsel %vm856, %v851, %v342
  %v877 = vsel %vm856, %v852, %v344
  %v878 = vsel %vm856, %v853, %v346
  %v879 = vsel %vm856, %v854, %v348
  %v880 = vsel %vm856, %v855, %v350
  %vm881 = vcmask 23552
  %v882 = vsel %vm881, %v857, %v400
  %v883 = vsel %vm881, %v858, %v402
  %v884 = vsel %vm881, %v859, %v404
  %v885 = vsel %vm881, %v860, %v406
  %v886 = vsel %vm881, %v861, %v408
  %v887 = vsel %vm881, %v862, %v410
  %v888 = vsel %vm881, %v863, %v412
  %v889 = vsel %vm881, %v864, %v414
  %v890 = vsel %vm881, %v865, %v416
  %v891 = vsel %vm881, %v866, %v418
  %v892 = vsel %vm881, %v867, %v420
  %v893 = vsel %vm881, %v868, %v422
  %v894 = vsel %vm881, %v869, %v424
  %v895 = vsel %vm881, %v870, %v426
  %v896 = vsel %vm881, %v871, %v428
  %v897 = vsel %vm881, %v872, %v430
  %v898 = vsel %vm881, %v873, %v432
  %v899 = vsel %vm881, %v874, %v434
  %v900 = vsel %vm881, %v875, %v436
  %v901 = vsel %vm881, %v876, %v438
  %v902 = vsel %vm881, %v877, %v440
  %v903 = vsel %vm881, %v878, %v442
  %v904 = vsel %vm881, %v879, %v444
  %v905 = vsel %vm881, %v880, %v446
  %vm906 = vcmask 31744
  %v907 = vsel %vm906, %v882, %v472
  %v908 = vsel %vm906, %v883, %v474
  %v909 = vsel %vm906, %v884, %v476
  %v910 = vsel %vm906, %v885, %v478
  %v911 = vsel %vm906, %v886, %v480
  %v912 = vsel %vm906, %v887, %v482
  %v913 = vsel %vm906, %v888, %v484
  %v914 = vsel %vm906, %v889, %v486
  %v915 = vsel %vm906, %v890, %v488
  %v916 = vsel %vm906, %v891, %v490
  %v917 = vsel %vm906, %v892, %v492
  %v918 = vsel %vm906, %v893, %v494
  %v919 = vsel %vm906, %v894, %v496
  %v920 = vsel %vm906, %v895, %v498
  %v921 = vsel %vm906, %v896, %v500
  %v922 = vsel %vm906, %v897, %v502
  %v923 = vsel %vm906, %v898, %v504
  %v924 = vsel %vm906, %v899, %v506
  %v925 = vsel %vm906, %v900, %v508
  %v926 = vsel %vm906, %v901, %v510
  %v927 = vsel %vm906, %v902, %v512
  %v928 = vsel %vm906, %v903, %v514
  %v929 = vsel %vm906, %v904, %v516
  %v930 = vsel %vm906, %v905, %v518
  %vm931 = vcmask 39936
  %v932 = vsel %vm931, %v907, %v544
  %v933 = vsel %vm931, %v908, %v546
  %v934 = vsel %vm931, %v909, %v548
  %v935 = vsel %vm931, %v910, %v550
  %v936 = vsel %vm931, %v911, %v552
  %v937 = vsel %vm931, %v912, %v554
  %v938 = vsel %vm931, %v913, %v556
  %v939 = vsel %vm931, %v914, %v558
  %v940 = vsel %vm931, %v915, %v560
  %v941 = vsel %vm931, %v916, %v562
  %v942 = vsel %vm931, %v917, %v564
  %v943 = vsel %vm931, %v918, %v566
  %v944 = vsel %vm931, %v919, %v568
  %v945 = vsel %vm931, %v920, %v570
  %v946 = vsel %vm931, %v921, %v572
  %v947 = vsel %vm931, %v922, %v574
  %v948 = vsel %vm931, %v923, %v576
  %v949 = vsel %vm931, %v924, %v578
  %v950 = vsel %vm931, %v925, %v580
  %v951 = vsel %vm931, %v926, %v582
  %v952 = vsel %vm931, %v927, %v584
  %v953 = vsel %vm931, %v928, %v586
  %v954 = vsel %vm931, %v929, %v588
  %v955 = vsel %vm931, %v930, %v590
  %vm956 = vcmask 48128
  %v957 = vsel %vm956, %v932, %v616
  %v958 = vsel %vm956, %v933, %v618
  %v959 = vsel %vm956, %v934, %v620
  %v960 = vsel %vm956, %v935, %v622
  %v961 = vsel %vm956, %v936, %v624
  %v962 = vsel %vm956, %v937, %v626
  %v963 = vsel %vm956, %v938, %v628
  %v964 = vsel %vm956, %v939, %v630
  %v965 = vsel %vm956, %v940, %v632
  %v966 = vsel %vm956, %v941, %v634
  %v967 = vsel %vm956, %v942, %v636
  %v968 = vsel %vm956, %v943, %v638
  %v969 = vsel %vm956, %v944, %v640
  %v970 = vsel %vm956, %v945, %v642
  %v971 = vsel %vm956, %v946, %v644
  %v972 = vsel %vm956, %v947, %v646
  %v973 = vsel %vm956, %v948, %v648
  %v974 = vsel %vm956, %v949, %v650
  %v975 = vsel %vm956, %v950, %v652
  %v976 = vsel %vm956, %v951, %v654
  %v977 = vsel %vm956, %v952, %v656
  %v978 = vsel %vm956, %v953, %v658
  %v979 = vsel %vm956, %v954, %v660
  %v980 = vsel %vm956, %v955, %v662
  %vm981 = vcmask 56320
  %v982 = vsel %vm981, %v957, %v688
  %v983 = vsel %vm981, %v958, %v690
  %v984 = vsel %vm981, %v959, %v692
  %v985 = vsel %vm981, %v960, %v694
  %v986 = vsel %vm981, %v961, %v696
  %v987 = vsel %vm981, %v962, %v698
  %v988 = vsel %vm981, %v963, %v700
  %v989 = vsel %vm981, %v964, %v702
  %v990 = vsel %vm981, %v965, %v704
  %v991 = vsel %vm981, %v966, %v706
  %v992 = vsel %vm981, %v967, %v708
  %v993 = vsel %vm981, %v968, %v710
  %v994 = vsel %vm981, %v969, %v712
  %v995 = vsel %vm981, %v970, %v714
  %v996 = vsel %vm981, %v971, %v716
  %v997 = vsel %vm981, %v972, %v718
  %v998 = vsel %vm981, %v973, %v720
  %v999 = vsel %vm981, %v974, %v722
  %v1000 = vsel %vm981, %v975, %v724
  %v1001 = vsel %vm981, %v976, %v726
  %v1002 = vsel %vm981, %v977, %v728
  %v1003 = vsel %vm981, %v978, %v730
  %v1004 = vsel %vm981, %v979, %v732
  %v1005 = vsel %vm981, %v980, %v734
  %vm1006 = vcmask 64512
  %v1007 = vsel %vm1006, %v982, %v760
  %v1008 = vsel %vm1006, %v983, %v762
  %v1009 = vsel %vm1006, %v984, %v764
  %v1010 = vsel %vm1006, %v985, %v766
  %v1011 = vsel %vm1006, %v986, %v768
  %v1012 = vsel %vm1006, %v987, %v770
  %v1013 = vsel %vm1006, %v988, %v772
  %v1014 = vsel %vm1006, %v989, %v774
  %v1015 = vsel %vm1006, %v990, %v776
  %v1016 = vsel %vm1006, %v991, %v778
  %v1017 = vsel %vm1006, %v992, %v780
  %v1018 = vsel %vm1006, %v993, %v782
  %v1019 = vsel %vm1006, %v994, %v784
  %v1020 = vsel %vm1006, %v995, %v786
  %v1021 = vsel %vm1006, %v996, %v788
  %v1022 = vsel %vm1006, %v997, %v790
  %v1023 = vsel %vm1006, %v998, %v792
  %v1024 = vsel %vm1006, %v999, %v794
  %v1025 = vsel %vm1006, %v1000, %v796
  %v1026 = vsel %vm1006, %v1001, %v798
  %v1027 = vsel %vm1006, %v1002, %v800
  %v1028 = vsel %vm1006, %v1003, %v802
  %v1029 = vsel %vm1006, %v1004, %v804
  %v1030 = vsel %vm1006, %v1005, %v806
  %v1031 = vld [vmem:[%s3] sm:$0xff]
  %v1032 = vld [vmem:[%s3 + $0x8] sm:$0xff]
  %v1033 = vld [vmem:[%s3 + $0x10] sm:$0xff]
  %v1034 = vld [vmem:[%s3 + $0x18] sm:$0xff]
  %v1035 = vld [vmem:[%s3 + $0x20] sm:$0xff]
  %v1036 = vld [vmem:[%s3 + $0x28] sm:$0xff]
  %v1037 = vld [vmem:[%s3 + $0x30] sm:$0xff]
  %v1038 = vld [vmem:[%s3 + $0x38] sm:$0xff]
  %v1039 = vld [vmem:[%s3 + $0x40] sm:$0xff]
  %v1040 = vld [vmem:[%s3 + $0x48] sm:$0xff]
  %v1041 = vld [vmem:[%s3 + $0x50] sm:$0xff]
  %v1042 = vld [vmem:[%s3 + $0x58] sm:$0xff]
  %v1043 = vld [vmem:[%s3 + $0x60] sm:$0xff]
  %v1044 = vld [vmem:[%s3 + $0x68] sm:$0xff]
  %v1045 = vld [vmem:[%s3 + $0x70] sm:$0xff]
  %v1046 = vld [vmem:[%s3 + $0x78] sm:$0xff]
  %v1047 = vld [vmem:[%s3 + $0x80] sm:$0xff]
  %v1048 = vld [vmem:[%s3 + $0x88] sm:$0xff]
  %v1049 = vld [vmem:[%s3 + $0x90] sm:$0xff]
  %v1050 = vld [vmem:[%s3 + $0x98] sm:$0xff]
  %v1051 = vld [vmem:[%s3 + $0xa0] sm:$0xff]
  %v1052 = vld [vmem:[%s3 + $0xa8] sm:$0xff]
  %v1053 = vld [vmem:[%s3 + $0xb0] sm:$0xff]
  %v1054 = vld [vmem:[%s3 + $0xb8] sm:$0xff]
  %v1055 = vmul.f32 %v1007, %v1031
  %v1056 = vmul.f32 %v1008, %v1032
  %v1057 = vmul.f32 %v1009, %v1033
  %v1058 = vmul.f32 %v1010, %v1034
  %v1059 = vmul.f32 %v1011, %v1035
  %v1060 = vmul.f32 %v1012, %v1036
  %v1061 = vmul.f32 %v1013, %v1037
  %v1062 = vmul.f32 %v1014, %v1038
  %v1063 = vmul.f32 %v1015, %v1039
  %v1064 = vmul.f32 %v1016, %v1040
  %v1065 = vmul.f32 %v1017, %v1041
  %v1066 = vmul.f32 %v1018, %v1042
  %v1067 = vmul.f32 %v1019, %v1043
  %v1068 = vmul.f32 %v1020, %v1044
  %v1069 = vmul.f32 %v1021, %v1045
  %v1070 = vmul.f32 %v1022, %v1046
  %v1071 = vmul.f32 %v1023, %v1047
  %v1072 = vmul.f32 %v1024, %v1048
  %v1073 = vmul.f32 %v1025, %v1049
  %v1074 = vmul.f32 %v1026, %v1050
  %v1075 = vmul.f32 %v1027, %v1051
  %v1076 = vmul.f32 %v1028, %v1052
  %v1077 = vmul.f32 %v1029, %v1053
  %v1078 = vmul.f32 %v1030, %v1054
  %v1079 = vld [vmem:[%s1] sm:$0xff]
  %v1080 = vld [vmem:[%s1 + $0x8] sm:$0x1]
  %v1081 = vld [vmem:[%s2] sm:$0x1]
  %v1082 = vlaneseq
  %v1083 = vshrl.u32 %v1082, 7
  %v1084 = vsub.s32 0, %v1083
  %v1085 = vrot.slane %v1081, %v1084
  %vm1086 = vcmask 72704
  %v1088 = vsel %vm1086, %v1055, 0
  %v1091 = vsel %vm1086, %v1056, 0
  %v1094 = vsel %vm1086, %v1057, 0
  %v1097 = vsel %vm1086, %v1058, 0
  %v1100 = vsel %vm1086, %v1059, 0
  %v1103 = vsel %vm1086, %v1060, 0
  %v1106 = vsel %vm1086, %v1061, 0
  %v1109 = vsel %vm1086, %v1062, 0
  %v1112 = vsel %vm1086, %v1063, 0
  %v1115 = vsel %vm1086, %v1064, 0
  %v1118 = vsel %vm1086, %v1065, 0
  %v1121 = vsel %vm1086, %v1066, 0
  %v1124 = vsel %vm1086, %v1067, 0
  %v1127 = vsel %vm1086, %v1068, 0
  %v1130 = vsel %vm1086, %v1069, 0
  %v1133 = vsel %vm1086, %v1070, 0
  %v1136 = vsel %vm1086, %v1071, 0
  %v1139 = vsel %vm1086, %v1072, 0
  %v1142 = vsel %vm1086, %v1073, 0
  %v1145 = vsel %vm1086, %v1074, 0
  %v1148 = vsel %vm1086, %v1075, 0
  %v1151 = vsel %vm1086, %v1076, 0
  %v1154 = vsel %vm1086, %v1077, 0
  %v1157 = vsel %vm1086, %v1078, 0
  %vm1159 = vcmask 1040384
  %v1161 = vsel %vm1159, %v1080, 0
  %1163 = vmatprep.subr.mxu0 0.0
  %1164 = vmatpush1.msra.mxu0 %v1079
  %1165 = vmatprep.subr.mxu0 0.0
  %1166 = vmatpush1.msra.mxu0 %v1161
  %1167 = vmatprep.subr.mxu0 0.0
  %1168 = vmatpush1.msra.mxu0 0.0
  %1169 = vmatprep.subr.mxu0 0.0
  %1170 = vmatpush1.msra.mxu0 0.0
  %1171 = vmatprep.subr.mxu0 0.0
  %1172 = vmatpush1.msra.mxu0 0.0
  %1173 = vmatprep.subr.mxu0 0.0
  %1174 = vmatpush1.msra.mxu0 0.0
  %1175 = vmatprep.subr.mxu0 0.0
  %1176 = vmatpush1.msra.mxu0 0.0
  %1177 = vmatprep.subr.mxu0 0.0
  %1178 = vmatpush1.msra.mxu0 0.0
  %1179 = vmatprep.subr.mxu0 0.0
  %1180 = vmatpush1.msra.mxu0 0.0
  %1181 = vmatprep.subr.mxu0 0.0
  %1182 = vmatpush1.msra.mxu0 0.0
  %1183 = vmatprep.subr.mxu0 0.0
  %1184 = vmatpush1.msra.mxu0 0.0
  %1185 = vmatprep.subr.mxu0 0.0
  %1186 = vmatpush1.msra.mxu0 0.0
  %1187 = vmatprep.subr.mxu0 0.0
  %1188 = vmatpush1.msra.mxu0 0.0
  %1189 = vmatprep.subr.mxu0 0.0
  %1190 = vmatpush1.msra.mxu0 0.0
  %1191 = vmatprep.subr.mxu0 0.0
  %1192 = vmatpush1.msra.mxu0 0.0
  %1193 = vmatprep.subr.mxu0 0.0
  %1194 = vmatpush1.msra.mxu0 0.0
  %1195 = vmatprep.subr.mxu0 0.0
  %1196 = vmatpush1.msra.mxu0 0.0
  %1197 = vmatprep.subr.mxu0 0.0
  %1198 = vmatpush1.msra.mxu0 0.0
  %1199 = vmatprep.subr.mxu0 0.0
  %1200 = vmatpush1.msra.mxu0 0.0
  %1201 = vmatprep.subr.mxu0 0.0
  %1202 = vmatpush1.msra.mxu0 0.0
  %1203 = vmatprep.subr.mxu0 0.0
  %1204 = vmatpush1.msra.mxu0 0.0
  %1205 = vmatprep.subr.mxu0 0.0
  %1206 = vmatpush1.msra.mxu0 0.0
  %1207 = vmatprep.subr.mxu0 0.0
  %1208 = vmatpush1.msra.mxu0 0.0
  %1209 = vmatprep.subr.mxu0 0.0
  %1210 = vmatpush1.msra.mxu0 0.0
  %1211 = vmatprep.subr.mxu0 0.0
  %1212 = vmatpush1.msra.mxu0 0.0
  %1213 = vmatprep.subr.mxu0 0.0
  %1214 = vmatpush1.msra.mxu0 0.0
  %1215 = vmatprep.subr.mxu0 0.0
  %1216 = vmatpush1.msra.mxu0 0.0
  %1217 = vmatprep.subr.mxu0 0.0
  %1218 = vmatpush1.msra.mxu0 0.0
  %1219 = vmatprep.subr.mxu0 0.0
  %1220 = vmatpush1.msra.mxu0 0.0
  %1221 = vmatprep.subr.mxu0 0.0
  %1222 = vmatpush1.msra.mxu0 0.0
  %1223 = vmatprep.subr.mxu0 0.0
  %1224 = vmatpush1.msra.mxu0 0.0
  %1225 = vmatprep.subr.mxu0 0.0
  %1226 = vmatpush1.msra.mxu0 0.0
  %1227 = vmatprep.mubr.f32.mxu0 0.0
  %1228 = vmatmul.mubr.f32.gmra.mrb[0].mxu0 %v1088
  %v1229 = vpop.f32.mrb[0].mxu0
  %v1230 = vadd.f32 %v1085, %v1229
  %v1231 = vpop.f32.mrb[0].mxu0
  %1232 = vmatprep.mubr.f32.mxu0 0.0
  %1233 = vmatmul.mubr.f32.gmra.mrb[0].mxu0 %v1091
  %v1234 = vpop.f32.mrb[0].mxu0
  %v1235 = vadd.f32 %v1085, %v1234
  %v1236 = vpop.f32.mrb[0].mxu0
  %1237 = vmatprep.mubr.f32.mxu0 0.0
  %1238 = vmatmul.mubr.f32.gmra.mrb[0].mxu0 %v1094
  %v1239 = vpop.f32.mrb[0].mxu0
  %v1240 = vadd.f32 %v1085, %v1239
  %v1241 = vpop.f32.mrb[0].mxu0
  %1242 = vmatprep.mubr.f32.mxu0 0.0
  %1243 = vmatmul.mubr.f32.gmra.mrb[0].mxu0 %v1097
  %v1244 = vpop.f32.mrb[0].mxu0
  %v1245 = vadd.f32 %v1085, %v1244
  %v1246 = vpop.f32.mrb[0].mxu0
  %1247 = vmatprep.mubr.f32.mxu0 0.0
  %1248 = vmatmul.mubr.f32.gmra.mrb[0].mxu0 %v1100
  %v1249 = vpop.f32.mrb[0].mxu0
  %v1250 = vadd.f32 %v1085, %v1249
  %v1251 = vpop.f32.mrb[0].mxu0
  %1252 = vmatprep.mubr.f32.mxu0 0.0
  %1253 = vmatmul.mubr.f32.gmra.mrb[0].mxu0 %v1103
  %v1254 = vpop.f32.mrb[0].mxu0
  %v1255 = vadd.f32 %v1085, %v1254
  %v1256 = vpop.f32.mrb[0].mxu0
  %1257 = vmatprep.mubr.f32.mxu0 0.0
  %1258 = vmatmul.mubr.f32.gmra.mrb[0].mxu0 %v1106
  %v1259 = vpop.f32.mrb[0].mxu0
  %v1260 = vadd.f32 %v1085, %v1259
  %v1261 = vpop.f32.mrb[0].mxu0
  %1262 = vmatprep.mubr.f32.mxu0 0.0
  %1263 = vmatmul.mubr.f32.gmra.mrb[0].mxu0 %v1109
  %v1264 = vpop.f32.mrb[0].mxu0
  %v1265 = vadd.f32 %v1085, %v1264
  %v1266 = vpop.f32.mrb[0].mxu0
  %1267 = vmatprep.mubr.f32.mxu0 0.0
  %1268 = vmatmul.mubr.f32.gmra.mrb[0].mxu0 %v1112
  %v1269 = vpop.f32.mrb[0].mxu0
  %v1270 = vadd.f32 %v1085, %v1269
  %v1271 = vpop.f32.mrb[0].mxu0
  %1272 = vmatprep.mubr.f32.mxu0 0.0
  %1273 = vmatmul.mubr.f32.gmra.mrb[0].mxu0 %v1115
  %v1274 = vpop.f32.mrb[0].mxu0
  %v1275 = vadd.f32 %v1085, %v1274
  %v1276 = vpop.f32.mrb[0].mxu0
  %1277 = vmatprep.mubr.f32.mxu0 0.0
  %1278 = vmatmul.mubr.f32.gmra.mrb[0].mxu0 %v1118
  %v1279 = vpop.f32.mrb[0].mxu0
  %v1280 = vadd.f32 %v1085, %v1279
  %v1281 = vpop.f32.mrb[0].mxu0
  %1282 = vmatprep.mubr.f32.mxu0 0.0
  %1283 = vmatmul.mubr.f32.gmra.mrb[0].mxu0 %v1121
  %v1284 = vpop.f32.mrb[0].mxu0
  %v1285 = vadd.f32 %v1085, %v1284
  %v1286 = vpop.f32.mrb[0].mxu0
  %1287 = vmatprep.mubr.f32.mxu0 0.0
  %1288 = vmatmul.mubr.f32.gmra.mrb[0].mxu0 %v1124
  %v1289 = vpop.f32.mrb[0].mxu0
  %v1290 = vadd.f32 %v1085, %v1289
  %v1291 = vpop.f32.mrb[0].mxu0
  %1292 = vmatprep.mubr.f32.mxu0 0.0
  %1293 = vmatmul.mubr.f32.gmra.mrb[0].mxu0 %v1127
  %v1294 = vpop.f32.mrb[0].mxu0
  %v1295 = vadd.f32 %v1085, %v1294
  %v1296 = vpop.f32.mrb[0].mxu0
  %1297 = vmatprep.mubr.f32.mxu0 0.0
  %1298 = vmatmul.mubr.f32.gmra.mrb[0].mxu0 %v1130
  %v1299 = vpop.f32.mrb[0].mxu0
  %v1300 = vadd.f32 %v1085, %v1299
  %v1301 = vpop.f32.mrb[0].mxu0
  %1302 = vmatprep.mubr.f32.mxu0 0.0
  %1303 = vmatmul.mubr.f32.gmra.mrb[0].mxu0 %v1133
  %v1304 = vpop.f32.mrb[0].mxu0
  %v1305 = vadd.f32 %v1085, %v1304
  %v1306 = vpop.f32.mrb[0].mxu0
  %1307 = vmatprep.mubr.f32.mxu0 0.0
  %1308 = vmatmul.mubr.f32.gmra.mrb[0].mxu0 %v1136
  %v1309 = vpop.f32.mrb[0].mxu0
  %v1310 = vadd.f32 %v1085, %v1309
  %v1311 = vpop.f32.mrb[0].mxu0
  %1312 = vmatprep.mubr.f32.mxu0 0.0
  %1313 = vmatmul.mubr.f32.gmra.mrb[0].mxu0 %v1139
  %v1314 = vpop.f32.mrb[0].mxu0
  %v1315 = vadd.f32 %v1085, %v1314
  %v1316 = vpop.f32.mrb[0].mxu0
  %1317 = vmatprep.mubr.f32.mxu0 0.0
  %1318 = vmatmul.mubr.f32.gmra.mrb[0].mxu0 %v1142
  %v1319 = vpop.f32.mrb[0].mxu0
  %v1320 = vadd.f32 %v1085, %v1319
  %v1321 = vpop.f32.mrb[0].mxu0
  %1322 = vmatprep.mubr.f32.mxu0 0.0
  %1323 = vmatmul.mubr.f32.gmra.mrb[0].mxu0 %v1145
  %v1324 = vpop.f32.mrb[0].mxu0
  %v1325 = vadd.f32 %v1085, %v1324
  %v1326 = vpop.f32.mrb[0].mxu0
  %1327 = vmatprep.mubr.f32.mxu0 0.0
  %1328 = vmatmul.mubr.f32.gmra.mrb[0].mxu0 %v1148
  %v1329 = vpop.f32.mrb[0].mxu0
  %v1330 = vadd.f32 %v1085, %v1329
  %v1331 = vpop.f32.mrb[0].mxu0
  %1332 = vmatprep.mubr.f32.mxu0 0.0
  %1333 = vmatmul.mubr.f32.gmra.mrb[0].mxu0 %v1151
  %v1334 = vpop.f32.mrb[0].mxu0
  %v1335 = vadd.f32 %v1085, %v1334
  %v1336 = vpop.f32.mrb[0].mxu0
  %1337 = vmatprep.mubr.f32.mxu0 0.0
  %1338 = vmatmul.mubr.f32.gmra.mrb[0].mxu0 %v1154
  %v1339 = vpop.f32.mrb[0].mxu0
  %v1340 = vadd.f32 %v1085, %v1339
  %v1341 = vpop.f32.mrb[0].mxu0
  %1342 = vmatprep.mubr.f32.mxu0 0.0
  %1343 = vmatmul.mubr.f32.gmra.mrb[0].mxu0 %v1157
  %v1344 = vpop.f32.mrb[0].mxu0
  %v1345 = vadd.f32 %v1085, %v1344
  %v1346 = vpop.f32.mrb[0].mxu0
  %1347 = vdwg.mxu0
  %v1348 = vmax.f32 %v1230, 0.0
  %v1349 = vmax.f32 %v1235, 0.0
  %v1350 = vmax.f32 %v1240, 0.0
  %v1351 = vmax.f32 %v1245, 0.0
  %v1352 = vmax.f32 %v1250, 0.0
  %v1353 = vmax.f32 %v1255, 0.0
  %v1354 = vmax.f32 %v1260, 0.0
  %v1355 = vmax.f32 %v1265, 0.0
  %v1356 = vmax.f32 %v1270, 0.0
  %v1357 = vmax.f32 %v1275, 0.0
  %v1358 = vmax.f32 %v1280, 0.0
  %v1359 = vmax.f32 %v1285, 0.0
  %v1360 = vmax.f32 %v1290, 0.0
  %v1361 = vmax.f32 %v1295, 0.0
  %v1362 = vmax.f32 %v1300, 0.0
  %v1363 = vmax.f32 %v1305, 0.0
  %v1364 = vmax.f32 %v1310, 0.0
  %v1365 = vmax.f32 %v1315, 0.0
  %v1366 = vmax.f32 %v1320, 0.0
  %v1367 = vmax.f32 %v1325, 0.0
  %v1368 = vmax.f32 %v1330, 0.0
  %v1369 = vmax.f32 %v1335, 0.0
  %v1370 = vmax.f32 %v1340, 0.0
  %v1371 = vmax.f32 %v1345, 0.0
  %v1372 = vld [vmem:[%s2 + $0x1] sm:$0x1]
  %v1373 = vlaneseq
  %v1374 = vshrl.u32 %v1373, 7
  %v1375 = vsub.s32 0, %v1374
  %v1376 = vrot.slane %v1372, %v1375
  %v1377 = vmul.f32 %v1348, %v1376
  %v1378 = vmul.f32 %v1349, %v1376
  %v1379 = vmul.f32 %v1350, %v1376
  %v1380 = vmul.f32 %v1351, %v1376
  %v1381 = vmul.f32 %v1352, %v1376
  %v1382 = vmul.f32 %v1353, %v1376
  %v1383 = vmul.f32 %v1354, %v1376
  %v1384 = vmul.f32 %v1355, %v1376
  %v1385 = vmul.f32 %v1356, %v1376
  %v1386 = vmul.f32 %v1357, %v1376
  %v1387 = vmul.f32 %v1358, %v1376
  %v1388 = vmul.f32 %v1359, %v1376
  %v1389 = vmul.f32 %v1360, %v1376
  %v1390 = vmul.f32 %v1361, %v1376
  %v1391 = vmul.f32 %v1362, %v1376
  %v1392 = vmul.f32 %v1363, %v1376
  %v1393 = vmul.f32 %v1364, %v1376
  %v1394 = vmul.f32 %v1365, %v1376
  %v1395 = vmul.f32 %v1366, %v1376
  %v1396 = vmul.f32 %v1367, %v1376
  %v1397 = vmul.f32 %v1368, %v1376
  %v1398 = vmul.f32 %v1369, %v1376
  %v1399 = vmul.f32 %v1370, %v1376
  %v1400 = vmul.f32 %v1371, %v1376
  %v1401 = vld [vmem:[%s2 + $0x2] sm:$0x1]
  %v1402 = vlaneseq
  %v1403 = vshrl.u32 %v1402, 7
  %v1404 = vsub.s32 0, %v1403
  %v1405 = vrot.slane %v1401, %v1404
  %v1406 = vadd.f32 %v1377, %v1405
  %v1407 = vadd.f32 %v1378, %v1405
  %v1408 = vadd.f32 %v1379, %v1405
  %v1409 = vadd.f32 %v1380, %v1405
  %v1410 = vadd.f32 %v1381, %v1405
  %v1411 = vadd.f32 %v1382, %v1405
  %v1412 = vadd.f32 %v1383, %v1405
  %v1413 = vadd.f32 %v1384, %v1405
  %v1414 = vadd.f32 %v1385, %v1405
  %v1415 = vadd.f32 %v1386, %v1405
  %v1416 = vadd.f32 %v1387, %v1405
  %v1417 = vadd.f32 %v1388, %v1405
  %v1418 = vadd.f32 %v1389, %v1405
  %v1419 = vadd.f32 %v1390, %v1405
  %v1420 = vadd.f32 %v1391, %v1405
  %v1421 = vadd.f32 %v1392, %v1405
  %v1422 = vadd.f32 %v1393, %v1405
  %v1423 = vadd.f32 %v1394, %v1405
  %v1424 = vadd.f32 %v1395, %v1405
  %v1425 = vadd.f32 %v1396, %v1405
  %v1426 = vadd.f32 %v1397, %v1405
  %v1427 = vadd.f32 %v1398, %v1405
  %v1428 = vadd.f32 %v1399, %v1405
  %v1429 = vadd.f32 %v1400, %v1405
  %v1430 = vrot.slane %v1406, 7
  %v1431 = vrot.slane %v1407, 7
  %v1432 = vrot.slane %v1408, 7
  %v1433 = vrot.slane %v1409, 7
  %v1434 = vrot.slane %v1410, 7
  %v1435 = vrot.slane %v1411, 7
  %v1436 = vrot.slane %v1412, 7
  %v1437 = vrot.slane %v1413, 7
  %v1438 = vrot.slane %v1414, 7
  %v1439 = vrot.slane %v1415, 7
  %v1440 = vrot.slane %v1416, 7
  %v1441 = vrot.slane %v1417, 7
  %v1442 = vrot.slane %v1418, 7
  %v1443 = vrot.slane %v1419, 7
  %v1444 = vrot.slane %v1420, 7
  %v1445 = vrot.slane %v1421, 7
  %v1446 = vrot.slane %v1422, 7
  %v1447 = vrot.slane %v1423, 7
  %v1448 = vrot.slane %v1424, 7
  %v1449 = vrot.slane %v1425, 7
  %v1450 = vrot.slane %v1426, 7
  %v1451 = vrot.slane %v1427, 7
  %v1452 = vrot.slane %v1428, 7
  %v1453 = vrot.slane %v1429, 7
  %v1454 = vsel %vm109, %v1452, %v1453
  %v1455 = vsel %vm109, %v1451, %v1452
  %v1456 = vsel %vm109, %v1450, %v1451
  %v1457 = vsel %vm109, %v1449, %v1450
  %v1458 = vsel %vm109, %v1448, %v1449
  %v1459 = vsel %vm109, %v1447, %v1448
  %v1460 = vsel %vm109, %v1446, %v1447
  %v1461 = vsel %vm109, %v1445, %v1446
  %v1462 = vsel %vm109, %v1444, %v1445
  %v1463 = vsel %vm109, %v1443, %v1444
  %v1464 = vsel %vm109, %v1442, %v1443
  %v1465 = vsel %vm109, %v1441, %v1442
  %v1466 = vsel %vm109, %v1440, %v1441
  %v1467 = vsel %vm109, %v1439, %v1440
  %v1468 = vsel %vm109, %v1438, %v1439
  %v1469 = vsel %vm109, %v1437, %v1438
  %v1470 = vsel %vm109, %v1436, %v1437
  %v1471 = vsel %vm109, %v1435, %v1436
  %v1472 = vsel %vm109, %v1434, %v1435
  %v1473 = vsel %vm109, %v1433, %v1434
  %v1474 = vsel %vm109, %v1432, %v1433
  %v1475 = vsel %vm109, %v1431, %v1432
  %v1476 = vsel %vm109, %v1430, %v1431
  %v1477 = vsel %vm109, %v1453, %v1430
  %v1478 = vrot.slane %v1406, 1
  %v1479 = vrot.slane %v1407, 1
  %v1480 = vrot.slane %v1408, 1
  %v1481 = vrot.slane %v1409, 1
  %v1482 = vrot.slane %v1410, 1
  %v1483 = vrot.slane %v1411, 1
  %v1484 = vrot.slane %v1412, 1
  %v1485 = vrot.slane %v1413, 1
  %v1486 = vrot.slane %v1414, 1
  %v1487 = vrot.slane %v1415, 1
  %v1488 = vrot.slane %v1416, 1
  %v1489 = vrot.slane %v1417, 1
  %v1490 = vrot.slane %v1418, 1
  %v1491 = vrot.slane %v1419, 1
  %v1492 = vrot.slane %v1420, 1
  %v1493 = vrot.slane %v1421, 1
  %v1494 = vrot.slane %v1422, 1
  %v1495 = vrot.slane %v1423, 1
  %v1496 = vrot.slane %v1424, 1
  %v1497 = vrot.slane %v1425, 1
  %v1498 = vrot.slane %v1426, 1
  %v1499 = vrot.slane %v1427, 1
  %v1500 = vrot.slane %v1428, 1
  %v1501 = vrot.slane %v1429, 1
  %v1502 = vsel %vm158, %v1500, %v1501
  %v1503 = vsel %vm158, %v1499, %v1500
  %v1504 = vsel %vm158, %v1498, %v1499
  %v1505 = vsel %vm158, %v1497, %v1498
  %v1506 = vsel %vm158, %v1496, %v1497
  %v1507 = vsel %vm158, %v1495, %v1496
  %v1508 = vsel %vm158, %v1494, %v1495
  %v1509 = vsel %vm158, %v1493, %v1494
  %v1510 = vsel %vm158, %v1492, %v1493
  %v1511 = vsel %vm158, %v1491, %v1492
  %v1512 = vsel %vm158, %v1490, %v1491
  %v1513 = vsel %vm158, %v1489, %v1490
  %v1514 = vsel %vm158, %v1488, %v1489
  %v1515 = vsel %vm158, %v1487, %v1488
  %v1516 = vsel %vm158, %v1486, %v1487
  %v1517 = vsel %vm158, %v1485, %v1486
  %v1518 = vsel %vm158, %v1484, %v1485
  %v1519 = vsel %vm158, %v1483, %v1484
  %v1520 = vsel %vm158, %v1482, %v1483
  %v1521 = vsel %vm158, %v1481, %v1482
  %v1522 = vsel %vm158, %v1480, %v1481
  %v1523 = vsel %vm158, %v1479, %v1480
  %v1524 = vsel %vm158, %v1478, %v1479
  %v1525 = vsel %vm158, %v1501, %v1478
  %1550 = vrot.lane.b32.xlu0 %v1428, 8
  %v1551 = vpop.permute.xlu0 %1550
  %1552 = vrot.lane.b32.xlu0 %v1429, 8
  %v1553 = vpop.permute.xlu0 %1552
  %1554 = vrot.lane.b32.xlu0 %v1406, 8
  %v1555 = vpop.permute.xlu0 %1554
  %1556 = vrot.lane.b32.xlu0 %v1407, 8
  %v1557 = vpop.permute.xlu0 %1556
  %1558 = vrot.lane.b32.xlu0 %v1408, 8
  %v1559 = vpop.permute.xlu0 %1558
  %1560 = vrot.lane.b32.xlu0 %v1409, 8
  %v1561 = vpop.permute.xlu0 %1560
  %1562 = vrot.lane.b32.xlu0 %v1410, 8
  %v1563 = vpop.permute.xlu0 %1562
  %1564 = vrot.lane.b32.xlu0 %v1411, 8
  %v1565 = vpop.permute.xlu0 %1564
  %1566 = vrot.lane.b32.xlu0 %v1412, 8
  %v1567 = vpop.permute.xlu0 %1566
  %1568 = vrot.lane.b32.xlu0 %v1413, 8
  %v1569 = vpop.permute.xlu0 %1568
  %1570 = vrot.lane.b32.xlu0 %v1414, 8
  %v1571 = vpop.permute.xlu0 %1570
  %1572 = vrot.lane.b32.xlu0 %v1415, 8
  %v1573 = vpop.permute.xlu0 %1572
  %1574 = vrot.lane.b32.xlu0 %v1416, 8
  %v1575 = vpop.permute.xlu0 %1574
  %1576 = vrot.lane.b32.xlu0 %v1417, 8
  %v1577 = vpop.permute.xlu0 %1576
  %1578 = vrot.lane.b32.xlu0 %v1418, 8
  %v1579 = vpop.permute.xlu0 %1578
  %1580 = vrot.lane.b32.xlu0 %v1419, 8
  %v1581 = vpop.permute.xlu0 %1580
  %1582 = vrot.lane.b32.xlu0 %v1420, 8
  %v1583 = vpop.permute.xlu0 %1582
  %1584 = vrot.lane.b32.xlu0 %v1421, 8
  %v1585 = vpop.permute.xlu0 %1584
  %1586 = vrot.lane.b32.xlu0 %v1422, 8
  %v1587 = vpop.permute.xlu0 %1586
  %1588 = vrot.lane.b32.xlu0 %v1423, 8
  %v1589 = vpop.permute.xlu0 %1588
  %1590 = vrot.lane.b32.xlu0 %v1424, 8
  %v1591 = vpop.permute.xlu0 %1590
  %1592 = vrot.lane.b32.xlu0 %v1425, 8
  %v1593 = vpop.permute.xlu0 %1592
  %1594 = vrot.lane.b32.xlu0 %v1426, 8
  %v1595 = vpop.permute.xlu0 %1594
  %1596 = vrot.lane.b32.xlu0 %v1427, 8
  %v1597 = vpop.permute.xlu0 %1596
  %1646 = vrot.lane.b32.xlu0 %v1502, 16
  %v1647 = vpop.permute.xlu0 %1646
  %1648 = vrot.lane.b32.xlu0 %v1525, 16
  %v1649 = vpop.permute.xlu0 %1648
  %1650 = vrot.lane.b32.xlu0 %v1524, 16
  %v1651 = vpop.permute.xlu0 %1650
  %1652 = vrot.lane.b32.xlu0 %v1523, 16
  %v1653 = vpop.permute.xlu0 %1652
  %1654 = vrot.lane.b32.xlu0 %v1522, 16
  %v1655 = vpop.permute.xlu0 %1654
  %1656 = vrot.lane.b32.xlu0 %v1521, 16
  %v1657 = vpop.permute.xlu0 %1656
  %1658 = vrot.lane.b32.xlu0 %v1520, 16
  %v1659 = vpop.permute.xlu0 %1658
  %1660 = vrot.lane.b32.xlu0 %v1519, 16
  %v1661 = vpop.permute.xlu0 %1660
  %1662 = vrot.lane.b32.xlu0 %v1518, 16
  %v1663 = vpop.permute.xlu0 %1662
  %1664 = vrot.lane.b32.xlu0 %v1517, 16
  %v1665 = vpop.permute.xlu0 %1664
  %1666 = vrot.lane.b32.xlu0 %v1516, 16
  %v1667 = vpop.permute.xlu0 %1666
  %1668 = vrot.lane.b32.xlu0 %v1515, 16
  %v1669 = vpop.permute.xlu0 %1668
  %1670 = vrot.lane.b32.xlu0 %v1514, 16
  %v1671 = vpop.permute.xlu0 %1670
  %1672 = vrot.lane.b32.xlu0 %v1513, 16
  %v1673 = vpop.permute.xlu0 %1672
  %1674 = vrot.lane.b32.xlu0 %v1512, 16
  %v1675 = vpop.permute.xlu0 %1674
  %1676 = vrot.lane.b32.xlu0 %v1511, 16
  %v1677 = vpop.permute.xlu0 %1676
  %1678 = vrot.lane.b32.xlu0 %v1510, 16
  %v1679 = vpop.permute.xlu0 %1678
  %1680 = vrot.lane.b32.xlu0 %v1509, 16
  %v1681 = vpop.permute.xlu0 %1680
  %1682 = vrot.lane.b32.xlu0 %v1508, 16
  %v1683 = vpop.permute.xlu0 %1682
  %1684 = vrot.lane.b32.xlu0 %v1507, 16
  %v1685 = vpop.permute.xlu0 %1684
  %1686 = vrot.lane.b32.xlu0 %v1506, 16
  %v1687 = vpop.permute.xlu0 %1686
  %1688 = vrot.lane.b32.xlu0 %v1505, 16
  %v1689 = vpop.permute.xlu0 %1688
  %1690 = vrot.lane.b32.xlu0 %v1504, 16
  %v1691 = vpop.permute.xlu0 %1690
  %1692 = vrot.lane.b32.xlu0 %v1503, 16
  %v1693 = vpop.permute.xlu0 %1692
  %1742 = vrot.lane.b32.xlu0 %v1477, 24
  %v1743 = vpop.permute.xlu0 %1742
  %1744 = vrot.lane.b32.xlu0 %v1476, 24
  %v1745 = vpop.permute.xlu0 %1744
  %1746 = vrot.lane.b32.xlu0 %v1475, 24
  %v1747 = vpop.permute.xlu0 %1746
  %1748 = vrot.lane.b32.xlu0 %v1474, 24
  %v1749 = vpop.permute.xlu0 %1748
  %1750 = vrot.lane.b32.xlu0 %v1473, 24
  %v1751 = vpop.permute.xlu0 %1750
  %1752 = vrot.lane.b32.xlu0 %v1472, 24
  %v1753 = vpop.permute.xlu0 %1752
  %1754 = vrot.lane.b32.xlu0 %v1471, 24
  %v1755 = vpop.permute.xlu0 %1754
  %1756 = vrot.lane.b32.xlu0 %v1470, 24
  %v1757 = vpop.permute.xlu0 %1756
  %1758 = vrot.lane.b32.xlu0 %v1469, 24
  %v1759 = vpop.permute.xlu0 %1758
  %1760 = vrot.lane.b32.xlu0 %v1468, 24
  %v1761 = vpop.permute.xlu0 %1760
  %1762 = vrot.lane.b32.xlu0 %v1467, 24
  %v1763 = vpop.permute.xlu0 %1762
  %1764 = vrot.lane.b32.xlu0 %v1466, 24
  %v1765 = vpop.permute.xlu0 %1764
  %1766 = vrot.lane.b32.xlu0 %v1465, 24
  %v1767 = vpop.permute.xlu0 %1766
  %1768 = vrot.lane.b32.xlu0 %v1464, 24
  %v1769 = vpop.permute.xlu0 %1768
  %1770 = vrot.lane.b32.xlu0 %v1463, 24
  %v1771 = vpop.permute.xlu0 %1770
  %1772 = vrot.lane.b32.xlu0 %v1462, 24
  %v1773 = vpop.permute.xlu0 %1772
  %1774 = vrot.lane.b32.xlu0 %v1461, 24
  %v1775 = vpop.permute.xlu0 %1774
  %1776 = vrot.lane.b32.xlu0 %v1460, 24
  %v1777 = vpop.permute.xlu0 %1776
  %1778 = vrot.lane.b32.xlu0 %v1459, 24
  %v1779 = vpop.permute.xlu0 %1778
  %1780 = vrot.lane.b32.xlu0 %v1458, 24
  %v1781 = vpop.permute.xlu0 %1780
  %1782 = vrot.lane.b32.xlu0 %v1457, 24
  %v1783 = vpop.permute.xlu0 %1782
  %1784 = vrot.lane.b32.xlu0 %v1456, 24
  %v1785 = vpop.permute.xlu0 %1784
  %1786 = vrot.lane.b32.xlu0 %v1455, 24
  %v1787 = vpop.permute.xlu0 %1786
  %1788 = vrot.lane.b32.xlu0 %v1454, 24
  %v1789 = vpop.permute.xlu0 %1788
  %1814 = vrot.lane.b32.xlu0 %v1406, 32
  %v1815 = vpop.permute.xlu0 %1814
  %1816 = vrot.lane.b32.xlu0 %v1407, 32
  %v1817 = vpop.permute.xlu0 %1816
  %1818 = vrot.lane.b32.xlu0 %v1408, 32
  %v1819 = vpop.permute.xlu0 %1818
  %1820 = vrot.lane.b32.xlu0 %v1409, 32
  %v1821 = vpop.permute.xlu0 %1820
  %1822 = vrot.lane.b32.xlu0 %v1410, 32
  %v1823 = vpop.permute.xlu0 %1822
  %1824 = vrot.lane.b32.xlu0 %v1411, 32
  %v1825 = vpop.permute.xlu0 %1824
  %1826 = vrot.lane.b32.xlu0 %v1412, 32
  %v1827 = vpop.permute.xlu0 %1826
  %1828 = vrot.lane.b32.xlu0 %v1413, 32
  %v1829 = vpop.permute.xlu0 %1828
  %1830 = vrot.lane.b32.xlu0 %v1414, 32
  %v1831 = vpop.permute.xlu0 %1830
  %1832 = vrot.lane.b32.xlu0 %v1415, 32
  %v1833 = vpop.permute.xlu0 %1832
  %1834 = vrot.lane.b32.xlu0 %v1416, 32
  %v1835 = vpop.permute.xlu0 %1834
  %1836 = vrot.lane.b32.xlu0 %v1417, 32
  %v1837 = vpop.permute.xlu0 %1836
  %1838 = vrot.lane.b32.xlu0 %v1418, 32
  %v1839 = vpop.permute.xlu0 %1838
  %1840 = vrot.lane.b32.xlu0 %v1419, 32
  %v1841 = vpop.permute.xlu0 %1840
  %1842 = vrot.lane.b32.xlu0 %v1420, 32
  %v1843 = vpop.permute.xlu0 %1842
  %1844 = vrot.lane.b32.xlu0 %v1421, 32
  %v1845 = vpop.permute.xlu0 %1844
  %1846 = vrot.lane.b32.xlu0 %v1422, 32
  %v1847 = vpop.permute.xlu0 %1846
  %1848 = vrot.lane.b32.xlu0 %v1423, 32
  %v1849 = vpop.permute.xlu0 %1848
  %1850 = vrot.lane.b32.xlu0 %v1424, 32
  %v1851 = vpop.permute.xlu0 %1850
  %1852 = vrot.lane.b32.xlu0 %v1425, 32
  %v1853 = vpop.permute.xlu0 %1852
  %1854 = vrot.lane.b32.xlu0 %v1426, 32
  %v1855 = vpop.permute.xlu0 %1854
  %1856 = vrot.lane.b32.xlu0 %v1427, 32
  %v1857 = vpop.permute.xlu0 %1856
  %1858 = vrot.lane.b32.xlu0 %v1428, 32
  %v1859 = vpop.permute.xlu0 %1858
  %1860 = vrot.lane.b32.xlu0 %v1429, 32
  %v1861 = vpop.permute.xlu0 %1860
  %1886 = vrot.lane.b32.xlu0 %v1524, 40
  %v1887 = vpop.permute.xlu0 %1886
  %1888 = vrot.lane.b32.xlu0 %v1523, 40
  %v1889 = vpop.permute.xlu0 %1888
  %1890 = vrot.lane.b32.xlu0 %v1522, 40
  %v1891 = vpop.permute.xlu0 %1890
  %1892 = vrot.lane.b32.xlu0 %v1521, 40
  %v1893 = vpop.permute.xlu0 %1892
  %1894 = vrot.lane.b32.xlu0 %v1520, 40
  %v1895 = vpop.permute.xlu0 %1894
  %1896 = vrot.lane.b32.xlu0 %v1519, 40
  %v1897 = vpop.permute.xlu0 %1896
  %1898 = vrot.lane.b32.xlu0 %v1518, 40
  %v1899 = vpop.permute.xlu0 %1898
  %1900 = vrot.lane.b32.xlu0 %v1517, 40
  %v1901 = vpop.permute.xlu0 %1900
  %1902 = vrot.lane.b32.xlu0 %v1516, 40
  %v1903 = vpop.permute.xlu0 %1902
  %1904 = vrot.lane.b32.xlu0 %v1515, 40
  %v1905 = vpop.permute.xlu0 %1904
  %1906 = vrot.lane.b32.xlu0 %v1514, 40
  %v1907 = vpop.permute.xlu0 %1906
  %1908 = vrot.lane.b32.xlu0 %v1513, 40
  %v1909 = vpop.permute.xlu0 %1908
  %1910 = vrot.lane.b32.xlu0 %v1512, 40
  %v1911 = vpop.permute.xlu0 %1910
  %1912 = vrot.lane.b32.xlu0 %v1511, 40
  %v1913 = vpop.permute.xlu0 %1912
  %1914 = vrot.lane.b32.xlu0 %v1510, 40
  %v1915 = vpop.permute.xlu0 %1914
  %1916 = vrot.lane.b32.xlu0 %v1509, 40
  %v1917 = vpop.permute.xlu0 %1916
  %1918 = vrot.lane.b32.xlu0 %v1508, 40
  %v1919 = vpop.permute.xlu0 %1918
  %1920 = vrot.lane.b32.xlu0 %v1507, 40
  %v1921 = vpop.permute.xlu0 %1920
  %1922 = vrot.lane.b32.xlu0 %v1506, 40
  %v1923 = vpop.permute.xlu0 %1922
  %1924 = vrot.lane.b32.xlu0 %v1505, 40
  %v1925 = vpop.permute.xlu0 %1924
  %1926 = vrot.lane.b32.xlu0 %v1504, 40
  %v1927 = vpop.permute.xlu0 %1926
  %1928 = vrot.lane.b32.xlu0 %v1503, 40
  %v1929 = vpop.permute.xlu0 %1928
  %1930 = vrot.lane.b32.xlu0 %v1502, 40
  %v1931 = vpop.permute.xlu0 %1930
  %1932 = vrot.lane.b32.xlu0 %v1525, 40
  %v1933 = vpop.permute.xlu0 %1932
  %1958 = vrot.lane.b32.xlu0 %v1475, 48
  %v1959 = vpop.permute.xlu0 %1958
  %1960 = vrot.lane.b32.xlu0 %v1474, 48
  %v1961 = vpop.permute.xlu0 %1960
  %1962 = vrot.lane.b32.xlu0 %v1473, 48
  %v1963 = vpop.permute.xlu0 %1962
  %1964 = vrot.lane.b32.xlu0 %v1472, 48
  %v1965 = vpop.permute.xlu0 %1964
  %1966 = vrot.lane.b32.xlu0 %v1471, 48
  %v1967 = vpop.permute.xlu0 %1966
  %1968 = vrot.lane.b32.xlu0 %v1470, 48
  %v1969 = vpop.permute.xlu0 %1968
  %1970 = vrot.lane.b32.xlu0 %v1469, 48
  %v1971 = vpop.permute.xlu0 %1970
  %1972 = vrot.lane.b32.xlu0 %v1468, 48
  %v1973 = vpop.permute.xlu0 %1972
  %1974 = vrot.lane.b32.xlu0 %v1467, 48
  %v1975 = vpop.permute.xlu0 %1974
  %1976 = vrot.lane.b32.xlu0 %v1466, 48
  %v1977 = vpop.permute.xlu0 %1976
  %1978 = vrot.lane.b32.xlu0 %v1465, 48
  %v1979 = vpop.permute.xlu0 %1978
  %1980 = vrot.lane.b32.xlu0 %v1464, 48
  %v1981 = vpop.permute.xlu0 %1980
  %1982 = vrot.lane.b32.xlu0 %v1463, 48
  %v1983 = vpop.permute.xlu0 %1982
  %1984 = vrot.lane.b32.xlu0 %v1462, 48
  %v1985 = vpop.permute.xlu0 %1984
  %1986 = vrot.lane.b32.xlu0 %v1461, 48
  %v1987 = vpop.permute.xlu0 %1986
  %1988 = vrot.lane.b32.xlu0 %v1460, 48
  %v1989 = vpop.permute.xlu0 %1988
  %1990 = vrot.lane.b32.xlu0 %v1459, 48
  %v1991 = vpop.permute.xlu0 %1990
  %1992 = vrot.lane.b32.xlu0 %v1458, 48
  %v1993 = vpop.permute.xlu0 %1992
  %1994 = vrot.lane.b32.xlu0 %v1457, 48
  %v1995 = vpop.permute.xlu0 %1994
  %1996 = vrot.lane.b32.xlu0 %v1456, 48
  %v1997 = vpop.permute.xlu0 %1996
  %1998 = vrot.lane.b32.xlu0 %v1455, 48
  %v1999 = vpop.permute.xlu0 %1998
  %2000 = vrot.lane.b32.xlu0 %v1454, 48
  %v2001 = vpop.permute.xlu0 %2000
  %2002 = vrot.lane.b32.xlu0 %v1477, 48
  %v2003 = vpop.permute.xlu0 %2002
  %2004 = vrot.lane.b32.xlu0 %v1476, 48
  %v2005 = vpop.permute.xlu0 %2004
  %2030 = vrot.lane.b32.xlu0 %v1408, 56
  %v2031 = vpop.permute.xlu0 %2030
  %2032 = vrot.lane.b32.xlu0 %v1409, 56
  %v2033 = vpop.permute.xlu0 %2032
  %2034 = vrot.lane.b32.xlu0 %v1410, 56
  %v2035 = vpop.permute.xlu0 %2034
  %2036 = vrot.lane.b32.xlu0 %v1411, 56
  %v2037 = vpop.permute.xlu0 %2036
  %2038 = vrot.lane.b32.xlu0 %v1412, 56
  %v2039 = vpop.permute.xlu0 %2038
  %2040 = vrot.lane.b32.xlu0 %v1413, 56
  %v2041 = vpop.permute.xlu0 %2040
  %2042 = vrot.lane.b32.xlu0 %v1414, 56
  %v2043 = vpop.permute.xlu0 %2042
  %2044 = vrot.lane.b32.xlu0 %v1415, 56
  %v2045 = vpop.permute.xlu0 %2044
  %2046 = vrot.lane.b32.xlu0 %v1416, 56
  %v2047 = vpop.permute.xlu0 %2046
  %2048 = vrot.lane.b32.xlu0 %v1417, 56
  %v2049 = vpop.permute.xlu0 %2048
  %2050 = vrot.lane.b32.xlu0 %v1418, 56
  %v2051 = vpop.permute.xlu0 %2050
  %2052 = vrot.lane.b32.xlu0 %v1419, 56
  %v2053 = vpop.permute.xlu0 %2052
  %2054 = vrot.lane.b32.xlu0 %v1420, 56
  %v2055 = vpop.permute.xlu0 %2054
  %2056 = vrot.lane.b32.xlu0 %v1421, 56
  %v2057 = vpop.permute.xlu0 %2056
  %2058 = vrot.lane.b32.xlu0 %v1422, 56
  %v2059 = vpop.permute.xlu0 %2058
  %2060 = vrot.lane.b32.xlu0 %v1423, 56
  %v2061 = vpop.permute.xlu0 %2060
  %2062 = vrot.lane.b32.xlu0 %v1424, 56
  %v2063 = vpop.permute.xlu0 %2062
  %2064 = vrot.lane.b32.xlu0 %v1425, 56
  %v2065 = vpop.permute.xlu0 %2064
  %2066 = vrot.lane.b32.xlu0 %v1426, 56
  %v2067 = vpop.permute.xlu0 %2066
  %2068 = vrot.lane.b32.xlu0 %v1427, 56
  %v2069 = vpop.permute.xlu0 %2068
  %2070 = vrot.lane.b32.xlu0 %v1428, 56
  %v2071 = vpop.permute.xlu0 %2070
  %2072 = vrot.lane.b32.xlu0 %v1429, 56
  %v2073 = vpop.permute.xlu0 %2072
  %2074 = vrot.lane.b32.xlu0 %v1406, 56
  %v2075 = vpop.permute.xlu0 %2074
  %2076 = vrot.lane.b32.xlu0 %v1407, 56
  %v2077 = vpop.permute.xlu0 %2076
  %2102 = vrot.lane.b32.xlu0 %v1522, 64
  %v2103 = vpop.permute.xlu0 %2102
  %2104 = vrot.lane.b32.xlu0 %v1521, 64
  %v2105 = vpop.permute.xlu0 %2104
  %2106 = vrot.lane.b32.xlu0 %v1520, 64
  %v2107 = vpop.permute.xlu0 %2106
  %2108 = vrot.lane.b32.xlu0 %v1519, 64
  %v2109 = vpop.permute.xlu0 %2108
  %2110 = vrot.lane.b32.xlu0 %v1518, 64
  %v2111 = vpop.permute.xlu0 %2110
  %2112 = vrot.lane.b32.xlu0 %v1517, 64
  %v2113 = vpop.permute.xlu0 %2112
  %2114 = vrot.lane.b32.xlu0 %v1516, 64
  %v2115 = vpop.permute.xlu0 %2114
  %2116 = vrot.lane.b32.xlu0 %v1515, 64
  %v2117 = vpop.permute.xlu0 %2116
  %2118 = vrot.lane.b32.xlu0 %v1514, 64
  %v2119 = vpop.permute.xlu0 %2118
  %2120 = vrot.lane.b32.xlu0 %v1513, 64
  %v2121 = vpop.permute.xlu0 %2120
  %2122 = vrot.lane.b32.xlu0 %v1512, 64
  %v2123 = vpop.permute.xlu0 %2122
  %2124 = vrot.lane.b32.xlu0 %v1511, 64
  %v2125 = vpop.permute.xlu0 %2124
  %2126 = vrot.lane.b32.xlu0 %v1510, 64
  %v2127 = vpop.permute.xlu0 %2126
  %2128 = vrot.lane.b32.xlu0 %v1509, 64
  %v2129 = vpop.permute.xlu0 %2128
  %2130 = vrot.lane.b32.xlu0 %v1508, 64
  %v2131 = vpop.permute.xlu0 %2130
  %2132 = vrot.lane.b32.xlu0 %v1507, 64
  %v2133 = vpop.permute.xlu0 %2132
  %2134 = vrot.lane.b32.xlu0 %v1506, 64
  %v2135 = vpop.permute.xlu0 %2134
  %2136 = vrot.lane.b32.xlu0 %v1505, 64
  %v2137 = vpop.permute.xlu0 %2136
  %2138 = vrot.lane.b32.xlu0 %v1504, 64
  %v2139 = vpop.permute.xlu0 %2138
  %2140 = vrot.lane.b32.xlu0 %v1503, 64
  %v2141 = vpop.permute.xlu0 %2140
  %2142 = vrot.lane.b32.xlu0 %v1502, 64
  %v2143 = vpop.permute.xlu0 %2142
  %2144 = vrot.lane.b32.xlu0 %v1525, 64
  %v2145 = vpop.permute.xlu0 %2144
  %2146 = vrot.lane.b32.xlu0 %v1524, 64
  %v2147 = vpop.permute.xlu0 %2146
  %2148 = vrot.lane.b32.xlu0 %v1523, 64
  %v2149 = vpop.permute.xlu0 %2148
  %v2174 = vsel %vm1006, %v1455, %v1551
  %v2175 = vsel %vm1006, %v1454, %v1553
  %v2176 = vsel %vm1006, %v1477, %v1555
  %v2177 = vsel %vm1006, %v1476, %v1557
  %v2178 = vsel %vm1006, %v1475, %v1559
  %v2179 = vsel %vm1006, %v1474, %v1561
  %v2180 = vsel %vm1006, %v1473, %v1563
  %v2181 = vsel %vm1006, %v1472, %v1565
  %v2182 = vsel %vm1006, %v1471, %v1567
  %v2183 = vsel %vm1006, %v1470, %v1569
  %v2184 = vsel %vm1006, %v1469, %v1571
  %v2185 = vsel %vm1006, %v1468, %v1573
  %v2186 = vsel %vm1006, %v1467, %v1575
  %v2187 = vsel %vm1006, %v1466, %v1577
  %v2188 = vsel %vm1006, %v1465, %v1579
  %v2189 = vsel %vm1006, %v1464, %v1581
  %v2190 = vsel %vm1006, %v1463, %v1583
  %v2191 = vsel %vm1006, %v1462, %v1585
  %v2192 = vsel %vm1006, %v1461, %v1587
  %v2193 = vsel %vm1006, %v1460, %v1589
  %v2194 = vsel %vm1006, %v1459, %v1591
  %v2195 = vsel %vm1006, %v1458, %v1593
  %v2196 = vsel %vm1006, %v1457, %v1595
  %v2197 = vsel %vm1006, %v1456, %v1597
  %vm2198 = vcmask 130048
  %v2199 = vsel %vm2198, %v2174, %v1647
  %v2200 = vsel %vm2198, %v2175, %v1649
  %v2201 = vsel %vm2198, %v2176, %v1651
  %v2202 = vsel %vm2198, %v2177, %v1653
  %v2203 = vsel %vm2198, %v2178, %v1655
  %v2204 = vsel %vm2198, %v2179, %v1657
  %v2205 = vsel %vm2198, %v2180, %v1659
  %v2206 = vsel %vm2198, %v2181, %v1661
  %v2207 = vsel %vm2198, %v2182, %v1663
  %v2208 = vsel %vm2198, %v2183, %v1665
  %v2209 = vsel %vm2198, %v2184, %v1667
  %v2210 = vsel %vm2198, %v2185, %v1669
  %v2211 = vsel %vm2198, %v2186, %v1671
  %v2212 = vsel %vm2198, %v2187, %v1673
  %v2213 = vsel %vm2198, %v2188, %v1675
  %v2214 = vsel %vm2198, %v2189, %v1677
  %v2215 = vsel %vm2198, %v2190, %v1679
  %v2216 = vsel %vm2198, %v2191, %v1681
  %v2217 = vsel %vm2198, %v2192, %v1683
  %v2218 = vsel %vm2198, %v2193, %v1685
  %v2219 = vsel %vm2198, %v2194, %v1687
  %v2220 = vsel %vm2198, %v2195, %v1689
  %v2221 = vsel %vm2198, %v2196, %v1691
  %v2222 = vsel %vm2198, %v2197, %v1693
  %vm2223 = vcmask 195584
  %v2224 = vsel %vm2223, %v2199, %v1743
  %v2225 = vsel %vm2223, %v2200, %v1745
  %v2226 = vsel %vm2223, %v2201, %v1747
  %v2227 = vsel %vm2223, %v2202, %v1749
  %v2228 = vsel %vm2223, %v2203, %v1751
  %v2229 = vsel %vm2223, %v2204, %v1753
  %v2230 = vsel %vm2223, %v2205, %v1755
  %v2231 = vsel %vm2223, %v2206, %v1757
  %v2232 = vsel %vm2223, %v2207, %v1759
  %v2233 = vsel %vm2223, %v2208, %v1761
  %v2234 = vsel %vm2223, %v2209, %v1763
  %v2235 = vsel %vm2223, %v2210, %v1765
  %v2236 = vsel %vm2223, %v2211, %v1767
  %v2237 = vsel %vm2223, %v2212, %v1769
  %v2238 = vsel %vm2223, %v2213, %v1771
  %v2239 = vsel %vm2223, %v2214, %v1773
  %v2240 = vsel %vm2223, %v2215, %v1775
  %v2241 = vsel %vm2223, %v2216, %v1777
  %v2242 = vsel %vm2223, %v2217, %v1779
  %v2243 = vsel %vm2223, %v2218, %v1781
  %v2244 = vsel %vm2223, %v2219, %v1783
  %v2245 = vsel %vm2223, %v2220, %v1785
  %v2246 = vsel %vm2223, %v2221, %v1787
  %v2247 = vsel %vm2223, %v2222, %v1789
  %vm2248 = vcmask 261120
  %v2249 = vsel %vm2248, %v2224, %v1815
  %v2250 = vsel %vm2248, %v2225, %v1817
  %v2251 = vsel %vm2248, %v2226, %v1819
  %v2252 = vsel %vm2248, %v2227, %v1821
  %v2253 = vsel %vm2248, %v2228, %v1823
  %v2254 = vsel %vm2248, %v2229, %v1825
  %v2255 = vsel %vm2248, %v2230, %v1827
  %v2256 = vsel %vm2248, %v2231, %v1829
  %v2257 = vsel %vm2248, %v2232, %v1831
  %v2258 = vsel %vm2248, %v2233, %v1833
  %v2259 = vsel %vm2248, %v2234, %v1835
  %v2260 = vsel %vm2248, %v2235, %v1837
  %v2261 = vsel %vm2248, %v2236, %v1839
  %v2262 = vsel %vm2248, %v2237, %v1841
  %v2263 = vsel %vm2248, %v2238, %v1843
  %v2264 = vsel %vm2248, %v2239, %v1845
  %v2265 = vsel %vm2248, %v2240, %v1847
  %v2266 = vsel %vm2248, %v2241, %v1849
  %v2267 = vsel %vm2248, %v2242, %v1851
  %v2268 = vsel %vm2248, %v2243, %v1853
  %v2269 = vsel %vm2248, %v2244, %v1855
  %v2270 = vsel %vm2248, %v2245, %v1857
  %v2271 = vsel %vm2248, %v2246, %v1859
  %v2272 = vsel %vm2248, %v2247, %v1861
  %vm2273 = vcmask 326656
  %v2274 = vsel %vm2273, %v2249, %v1887
  %v2275 = vsel %vm2273, %v2250, %v1889
  %v2276 = vsel %vm2273, %v2251, %v1891
  %v2277 = vsel %vm2273, %v2252, %v1893
  %v2278 = vsel %vm2273, %v2253, %v1895
  %v2279 = vsel %vm2273, %v2254, %v1897
  %v2280 = vsel %vm2273, %v2255, %v1899
  %v2281 = vsel %vm2273, %v2256, %v1901
  %v2282 = vsel %vm2273, %v2257, %v1903
  %v2283 = vsel %vm2273, %v2258, %v1905
  %v2284 = vsel %vm2273, %v2259, %v1907
  %v2285 = vsel %vm2273, %v2260, %v1909
  %v2286 = vsel %vm2273, %v2261, %v1911
  %v2287 = vsel %vm2273, %v2262, %v1913
  %v2288 = vsel %vm2273, %v2263, %v1915
  %v2289 = vsel %vm2273, %v2264, %v1917
  %v2290 = vsel %vm2273, %v2265, %v1919
  %v2291 = vsel %vm2273, %v2266, %v1921
  %v2292 = vsel %vm2273, %v2267, %v1923
  %v2293 = vsel %vm2273, %v2268, %v1925
  %v2294 = vsel %vm2273, %v2269, %v1927
  %v2295 = vsel %vm2273, %v2270, %v1929
  %v2296 = vsel %vm2273, %v2271, %v1931
  %v2297 = vsel %vm2273, %v2272, %v1933
  %vm2298 = vcmask 392192
  %v2299 = vsel %vm2298, %v2274, %v1959
  %v2300 = vsel %vm2298, %v2275, %v1961
  %v2301 = vsel %vm2298, %v2276, %v1963
  %v2302 = vsel %vm2298, %v2277, %v1965
  %v2303 = vsel %vm2298, %v2278, %v1967
  %v2304 = vsel %vm2298, %v2279, %v1969
  %v2305 = vsel %vm2298, %v2280, %v1971
  %v2306 = vsel %vm2298, %v2281, %v1973
  %v2307 = vsel %vm2298, %v2282, %v1975
  %v2308 = vsel %vm2298, %v2283, %v1977
  %v2309 = vsel %vm2298, %v2284, %v1979
  %v2310 = vsel %vm2298, %v2285, %v1981
  %v2311 = vsel %vm2298, %v2286, %v1983
  %v2312 = vsel %vm2298, %v2287, %v1985
  %v2313 = vsel %vm2298, %v2288, %v1987
  %v2314 = vsel %vm2298, %v2289, %v1989
  %v2315 = vsel %vm2298, %v2290, %v1991
  %v2316 = vsel %vm2298, %v2291, %v1993
  %v2317 = vsel %vm2298, %v2292, %v1995
  %v2318 = vsel %vm2298, %v2293, %v1997
  %v2319 = vsel %vm2298, %v2294, %v1999
  %v2320 = vsel %vm2298, %v2295, %v2001
  %v2321 = vsel %vm2298, %v2296, %v2003
  %v2322 = vsel %vm2298, %v2297, %v2005
  %vm2323 = vcmask 457728
  %v2324 = vsel %vm2323, %v2299, %v2031
  %v2325 = vsel %vm2323, %v2300, %v2033
  %v2326 = vsel %vm2323, %v2301, %v2035
  %v2327 = vsel %vm2323, %v2302, %v2037
  %v2328 = vsel %vm2323, %v2303, %v2039
  %v2329 = vsel %vm2323, %v2304, %v2041
  %v2330 = vsel %vm2323, %v2305, %v2043
  %v2331 = vsel %vm2323, %v2306, %v2045
  %v2332 = vsel %vm2323, %v2307, %v2047
  %v2333 = vsel %vm2323, %v2308, %v2049
  %v2334 = vsel %vm2323, %v2309, %v2051
  %v2335 = vsel %vm2323, %v2310, %v2053
  %v2336 = vsel %vm2323, %v2311, %v2055
  %v2337 = vsel %vm2323, %v2312, %v2057
  %v2338 = vsel %vm2323, %v2313, %v2059
  %v2339 = vsel %vm2323, %v2314, %v2061
  %v2340 = vsel %vm2323, %v2315, %v2063
  %v2341 = vsel %vm2323, %v2316, %v2065
  %v2342 = vsel %vm2323, %v2317, %v2067
  %v2343 = vsel %vm2323, %v2318, %v2069
  %v2344 = vsel %vm2323, %v2319, %v2071
  %v2345 = vsel %vm2323, %v2320, %v2073
  %v2346 = vsel %vm2323, %v2321, %v2075
  %v2347 = vsel %vm2323, %v2322, %v2077
  %vm2348 = vcmask 523264
  %v2349 = vsel %vm2348, %v2324, %v2103
  %v2350 = vsel %vm2348, %v2325, %v2105
  %v2351 = vsel %vm2348, %v2326, %v2107
  %v2352 = vsel %vm2348, %v2327, %v2109
  %v2353 = vsel %vm2348, %v2328, %v2111
  %v2354 = vsel %vm2348, %v2329, %v2113
  %v2355 = vsel %vm2348, %v2330, %v2115
  %v2356 = vsel %vm2348, %v2331, %v2117
  %v2357 = vsel %vm2348, %v2332, %v2119
  %v2358 = vsel %vm2348, %v2333, %v2121
  %v2359 = vsel %vm2348, %v2334, %v2123
  %v2360 = vsel %vm2348, %v2335, %v2125
  %v2361 = vsel %vm2348, %v2336, %v2127
  %v2362 = vsel %vm2348, %v2337, %v2129
  %v2363 = vsel %vm2348, %v2338, %v2131
  %v2364 = vsel %vm2348, %v2339, %v2133
  %v2365 = vsel %vm2348, %v2340, %v2135
  %v2366 = vsel %vm2348, %v2341, %v2137
  %v2367 = vsel %vm2348, %v2342, %v2139
  %v2368 = vsel %vm2348, %v2343, %v2141
  %v2369 = vsel %vm2348, %v2344, %v2143
  %v2370 = vsel %vm2348, %v2345, %v2145
  %v2371 = vsel %vm2348, %v2346, %v2147
  %v2372 = vsel %vm2348, %v2347, %v2149
  %v2373 = vld [vmem:[%s6] sm:$0xff]
  %v2374 = vld [vmem:[%s6 + $0x8] sm:$0xff]
  %v2375 = vld [vmem:[%s6 + $0x10] sm:$0xff]
  %v2376 = vld [vmem:[%s6 + $0x18] sm:$0xff]
  %v2377 = vld [vmem:[%s6 + $0x20] sm:$0xff]
  %v2378 = vld [vmem:[%s6 + $0x28] sm:$0xff]
  %v2379 = vld [vmem:[%s6 + $0x30] sm:$0xff]
  %v2380 = vld [vmem:[%s6 + $0x38] sm:$0xff]
  %v2381 = vld [vmem:[%s6 + $0x40] sm:$0xff]
  %v2382 = vld [vmem:[%s6 + $0x48] sm:$0xff]
  %v2383 = vld [vmem:[%s6 + $0x50] sm:$0xff]
  %v2384 = vld [vmem:[%s6 + $0x58] sm:$0xff]
  %v2385 = vld [vmem:[%s6 + $0x60] sm:$0xff]
  %v2386 = vld [vmem:[%s6 + $0x68] sm:$0xff]
  %v2387 = vld [vmem:[%s6 + $0x70] sm:$0xff]
  %v2388 = vld [vmem:[%s6 + $0x78] sm:$0xff]
  %v2389 = vld [vmem:[%s6 + $0x80] sm:$0xff]
  %v2390 = vld [vmem:[%s6 + $0x88] sm:$0xff]
  %v2391 = vld [vmem:[%s6 + $0x90] sm:$0xff]
  %v2392 = vld [vmem:[%s6 + $0x98] sm:$0xff]
  %v2393 = vld [vmem:[%s6 + $0xa0] sm:$0xff]
  %v2394 = vld [vmem:[%s6 + $0xa8] sm:$0xff]
  %v2395 = vld [vmem:[%s6 + $0xb0] sm:$0xff]
  %v2396 = vld [vmem:[%s6 + $0xb8] sm:$0xff]
  %v2397 = vmul.f32 %v2349, %v2373
  %v2398 = vmul.f32 %v2350, %v2374
  %v2399 = vmul.f32 %v2351, %v2375
  %v2400 = vmul.f32 %v2352, %v2376
  %v2401 = vmul.f32 %v2353, %v2377
  %v2402 = vmul.f32 %v2354, %v2378
  %v2403 = vmul.f32 %v2355, %v2379
  %v2404 = vmul.f32 %v2356, %v2380
  %v2405 = vmul.f32 %v2357, %v2381
  %v2406 = vmul.f32 %v2358, %v2382
  %v2407 = vmul.f32 %v2359, %v2383
  %v2408 = vmul.f32 %v2360, %v2384
  %v2409 = vmul.f32 %v2361, %v2385
  %v2410 = vmul.f32 %v2362, %v2386
  %v2411 = vmul.f32 %v2363, %v2387
  %v2412 = vmul.f32 %v2364, %v2388
  %v2413 = vmul.f32 %v2365, %v2389
  %v2414 = vmul.f32 %v2366, %v2390
  %v2415 = vmul.f32 %v2367, %v2391
  %v2416 = vmul.f32 %v2368, %v2392
  %v2417 = vmul.f32 %v2369, %v2393
  %v2418 = vmul.f32 %v2370, %v2394
  %v2419 = vmul.f32 %v2371, %v2395
  %v2420 = vmul.f32 %v2372, %v2396
  %v2421 = vld [vmem:[%s4] sm:$0xff]
  %v2422 = vld [vmem:[%s4 + $0x8] sm:$0xff]
  %v2423 = vld [vmem:[%s4 + $0x10] sm:$0xff]
  %v2424 = vld [vmem:[%s4 + $0x18] sm:$0xff]
  %v2425 = vld [vmem:[%s4 + $0x20] sm:$0xff]
  %v2426 = vld [vmem:[%s4 + $0x28] sm:$0xff]
  %v2427 = vld [vmem:[%s4 + $0x30] sm:$0xff]
  %v2428 = vld [vmem:[%s4 + $0x38] sm:$0xff]
  %v2429 = vld [vmem:[%s4 + $0x40] sm:$0xff]
  %v2430 = vld [vmem:[%s5] sm:$0x1]
  %v2431 = vlaneseq
  %v2432 = vshrl.u32 %v2431, 7
  %v2433 = vsub.s32 0, %v2432
  %v2434 = vrot.slane %v2430, %v2433
  %vm2435 = vcmask 588800
  %v2437 = vsel %vm2435, %v2397, 0
  %v2440 = vsel %vm2435, %v2398, 0
  %v2443 = vsel %vm2435, %v2399, 0
  %v2446 = vsel %vm2435, %v2400, 0
  %v2449 = vsel %vm2435, %v2401, 0
  %v2452 = vsel %vm2435, %v2402, 0
  %v2455 = vsel %vm2435, %v2403, 0
  %v2458 = vsel %vm2435, %v2404, 0
  %v2461 = vsel %vm2435, %v2405, 0
  %v2464 = vsel %vm2435, %v2406, 0
  %v2467 = vsel %vm2435, %v2407, 0
  %v2470 = vsel %vm2435, %v2408, 0
  %v2473 = vsel %vm2435, %v2409, 0
  %v2476 = vsel %vm2435, %v2410, 0
  %v2479 = vsel %vm2435, %v2411, 0
  %v2482 = vsel %vm2435, %v2412, 0
  %v2485 = vsel %vm2435, %v2413, 0
  %v2488 = vsel %vm2435, %v2414, 0
  %v2491 = vsel %vm2435, %v2415, 0
  %v2494 = vsel %vm2435, %v2416, 0
  %v2497 = vsel %vm2435, %v2417, 0
  %v2500 = vsel %vm2435, %v2418, 0
  %v2503 = vsel %vm2435, %v2419, 0
  %v2506 = vsel %vm2435, %v2420, 0
  %2508 = vmatprep.subr.mxu0 0.0
  %2509 = vmatpush1.msra.mxu0 %v2421
  %2510 = vmatprep.subr.mxu0 0.0
  %2511 = vmatpush1.msra.mxu0 %v2422
  %2512 = vmatprep.subr.mxu0 0.0
  %2513 = vmatpush1.msra.mxu0 %v2423
  %2514 = vmatprep.subr.mxu0 0.0
  %2515 = vmatpush1.msra.mxu0 %v2424
  %2516 = vmatprep.subr.mxu0 0.0
  %2517 = vmatpush1.msra.mxu0 %v2425
  %2518 = vmatprep.subr.mxu0 0.0
  %2519 = vmatpush1.msra.mxu0 %v2426
  %2520 = vmatprep.subr.mxu0 0.0
  %2521 = vmatpush1.msra.mxu0 %v2427
  %2522 = vmatprep.subr.mxu0 0.0
  %2523 = vmatpush1.msra.mxu0 %v2428
  %2524 = vmatprep.subr.mxu0 0.0
  %2525 = vmatpush1.msra.mxu0 %v2429
  %2526 = vmatprep.subr.mxu0 0.0
  %2527 = vmatpush1.msra.mxu0 0.0
  %2528 = vmatprep.subr.mxu0 0.0
  %2529 = vmatpush1.msra.mxu0 0.0
  %2530 = vmatprep.subr.mxu0 0.0
  %2531 = vmatpush1.msra.mxu0 0.0
  %2532 = vmatprep.subr.mxu0 0.0
  %2533 = vmatpush1.msra.mxu0 0.0
  %2534 = vmatprep.subr.mxu0 0.0
  %2535 = vmatpush1.msra.mxu0 0.0
  %2536 = vmatprep.subr.mxu0 0.0
  %2537 = vmatpush1.msra.mxu0 0.0
  %2538 = vmatprep.subr.mxu0 0.0
  %2539 = vmatpush1.msra.mxu0 0.0
  %2540 = vmatprep.subr.mxu0 0.0
  %2541 = vmatpush1.msra.mxu0 0.0
  %2542 = vmatprep.subr.mxu0 0.0
  %2543 = vmatpush1.msra.mxu0 0.0
  %2544 = vmatprep.subr.mxu0 0.0
  %2545 = vmatpush1.msra.mxu0 0.0
  %2546 = vmatprep.subr.mxu0 0.0
  %2547 = vmatpush1.msra.mxu0 0.0
  %2548 = vmatprep.subr.mxu0 0.0
  %2549 = vmatpush1.msra.mxu0 0.0
  %2550 = vmatprep.subr.mxu0 0.0
  %2551 = vmatpush1.msra.mxu0 0.0
  %2552 = vmatprep.subr.mxu0 0.0
  %2553 = vmatpush1.msra.mxu0 0.0
  %2554 = vmatprep.subr.mxu0 0.0
  %2555 = vmatpush1.msra.mxu0 0.0
  %2556 = vmatprep.subr.mxu0 0.0
  %2557 = vmatpush1.msra.mxu0 0.0
  %2558 = vmatprep.subr.mxu0 0.0
  %2559 = vmatpush1.msra.mxu0 0.0
  %2560 = vmatprep.subr.mxu0 0.0
  %2561 = vmatpush1.msra.mxu0 0.0
  %2562 = vmatprep.subr.mxu0 0.0
  %2563 = vmatpush1.msra.mxu0 0.0
  %2564 = vmatprep.subr.mxu0 0.0
  %2565 = vmatpush1.msra.mxu0 0.0
  %2566 = vmatprep.subr.mxu0 0.0
  %2567 = vmatpush1.msra.mxu0 0.0
  %2568 = vmatprep.subr.mxu0 0.0
  %2569 = vmatpush1.msra.mxu0 0.0
  %2570 = vmatprep.subr.mxu0 0.0
  %2571 = vmatpush1.msra.mxu0 0.0
  %2572 = vmatprep.mubr.f32.mxu0 0.0
  %2573 = vmatmul.mubr.f32.gmra.mrb[0].mxu0 %v2437
  %v2574 = vpop.f32.mrb[0].mxu0
  %v2575 = vadd.f32 %v2434, %v2574
  %v2576 = vpop.f32.mrb[0].mxu0
  %2577 = vmatprep.mubr.f32.mxu0 0.0
  %2578 = vmatmul.mubr.f32.gmra.mrb[0].mxu0 %v2440
  %v2579 = vpop.f32.mrb[0].mxu0
  %v2580 = vadd.f32 %v2434, %v2579
  %v2581 = vpop.f32.mrb[0].mxu0
  %2582 = vmatprep.mubr.f32.mxu0 0.0
  %2583 = vmatmul.mubr.f32.gmra.mrb[0].mxu0 %v2443
  %v2584 = vpop.f32.mrb[0].mxu0
  %v2585 = vadd.f32 %v2434, %v2584
  %v2586 = vpop.f32.mrb[0].mxu0
  %2587 = vmatprep.mubr.f32.mxu0 0.0
  %2588 = vmatmul.mubr.f32.gmra.mrb[0].mxu0 %v2446
  %v2589 = vpop.f32.mrb[0].mxu0
  %v2590 = vadd.f32 %v2434, %v2589
  %v2591 = vpop.f32.mrb[0].mxu0
  %2592 = vmatprep.mubr.f32.mxu0 0.0
  %2593 = vmatmul.mubr.f32.gmra.mrb[0].mxu0 %v2449
  %v2594 = vpop.f32.mrb[0].mxu0
  %v2595 = vadd.f32 %v2434, %v2594
  %v2596 = vpop.f32.mrb[0].mxu0
  %2597 = vmatprep.mubr.f32.mxu0 0.0
  %2598 = vmatmul.mubr.f32.gmra.mrb[0].mxu0 %v2452
  %v2599 = vpop.f32.mrb[0].mxu0
  %v2600 = vadd.f32 %v2434, %v2599
  %v2601 = vpop.f32.mrb[0].mxu0
  %2602 = vmatprep.mubr.f32.mxu0 0.0
  %2603 = vmatmul.mubr.f32.gmra.mrb[0].mxu0 %v2455
  %v2604 = vpop.f32.mrb[0].mxu0
  %v2605 = vadd.f32 %v2434, %v2604
  %v2606 = vpop.f32.mrb[0].mxu0
  %2607 = vmatprep.mubr.f32.mxu0 0.0
  %2608 = vmatmul.mubr.f32.gmra.mrb[0].mxu0 %v2458
  %v2609 = vpop.f32.mrb[0].mxu0
  %v2610 = vadd.f32 %v2434, %v2609
  %v2611 = vpop.f32.mrb[0].mxu0
  %2612 = vmatprep.mubr.f32.mxu0 0.0
  %2613 = vmatmul.mubr.f32.gmra.mrb[0].mxu0 %v2461
  %v2614 = vpop.f32.mrb[0].mxu0
  %v2615 = vadd.f32 %v2434, %v2614
  %v2616 = vpop.f32.mrb[0].mxu0
  %2617 = vmatprep.mubr.f32.mxu0 0.0
  %2618 = vmatmul.mubr.f32.gmra.mrb[0].mxu0 %v2464
  %v2619 = vpop.f32.mrb[0].mxu0
  %v2620 = vadd.f32 %v2434, %v2619
  %v2621 = vpop.f32.mrb[0].mxu0
  %2622 = vmatprep.mubr.f32.mxu0 0.0
  %2623 = vmatmul.mubr.f32.gmra.mrb[0].mxu0 %v2467
  %v2624 = vpop.f32.mrb[0].mxu0
  %v2625 = vadd.f32 %v2434, %v2624
  %v2626 = vpop.f32.mrb[0].mxu0
  %2627 = vmatprep.mubr.f32.mxu0 0.0
  %2628 = vmatmul.mubr.f32.gmra.mrb[0].mxu0 %v2470
  %v2629 = vpop.f32.mrb[0].mxu0
  %v2630 = vadd.f32 %v2434, %v2629
  %v2631 = vpop.f32.mrb[0].mxu0
  %2632 = vmatprep.mubr.f32.mxu0 0.0
  %2633 = vmatmul.mubr.f32.gmra.mrb[0].mxu0 %v2473
  %v2634 = vpop.f32.mrb[0].mxu0
  %v2635 = vadd.f32 %v2434, %v2634
  %v2636 = vpop.f32.mrb[0].mxu0
  %2637 = vmatprep.mubr.f32.mxu0 0.0
  %2638 = vmatmul.mubr.f32.gmra.mrb[0].mxu0 %v2476
  %v2639 = vpop.f32.mrb[0].mxu0
  %v2640 = vadd.f32 %v2434, %v2639
  %v2641 = vpop.f32.mrb[0].mxu0
  %2642 = vmatprep.mubr.f32.mxu0 0.0
  %2643 = vmatmul.mubr.f32.gmra.mrb[0].mxu0 %v2479
  %v2644 = vpop.f32.mrb[0].mxu0
  %v2645 = vadd.f32 %v2434, %v2644
  %v2646 = vpop.f32.mrb[0].mxu0
  %2647 = vmatprep.mubr.f32.mxu0 0.0
  %2648 = vmatmul.mubr.f32.gmra.mrb[0].mxu0 %v2482
  %v2649 = vpop.f32.mrb[0].mxu0
  %v2650 = vadd.f32 %v2434, %v2649
  %v2651 = vpop.f32.mrb[0].mxu0
  %2652 = vmatprep.mubr.f32.mxu0 0.0
  %2653 = vmatmul.mubr.f32.gmra.mrb[0].mxu0 %v2485
  %v2654 = vpop.f32.mrb[0].mxu0
  %v2655 = vadd.f32 %v2434, %v2654
  %v2656 = vpop.f32.mrb[0].mxu0
  %2657 = vmatprep.mubr.f32.mxu0 0.0
  %2658 = vmatmul.mubr.f32.gmra.mrb[0].mxu0 %v2488
  %v2659 = vpop.f32.mrb[0].mxu0
  %v2660 = vadd.f32 %v2434, %v2659
  %v2661 = vpop.f32.mrb[0].mxu0
  %2662 = vmatprep.mubr.f32.mxu0 0.0
  %2663 = vmatmul.mubr.f32.gmra.mrb[0].mxu0 %v2491
  %v2664 = vpop.f32.mrb[0].mxu0
  %v2665 = vadd.f32 %v2434, %v2664
  %v2666 = vpop.f32.mrb[0].mxu0
  %2667 = vmatprep.mubr.f32.mxu0 0.0
  %2668 = vmatmul.mubr.f32.gmra.mrb[0].mxu0 %v2494
  %v2669 = vpop.f32.mrb[0].mxu0
  %v2670 = vadd.f32 %v2434, %v2669
  %v2671 = vpop.f32.mrb[0].mxu0
  %2672 = vmatprep.mubr.f32.mxu0 0.0
  %2673 = vmatmul.mubr.f32.gmra.mrb[0].mxu0 %v2497
  %v2674 = vpop.f32.mrb[0].mxu0
  %v2675 = vadd.f32 %v2434, %v2674
  %v2676 = vpop.f32.mrb[0].mxu0
  %2677 = vmatprep.mubr.f32.mxu0 0.0
  %2678 = vmatmul.mubr.f32.gmra.mrb[0].mxu0 %v2500
  %v2679 = vpop.f32.mrb[0].mxu0
  %v2680 = vadd.f32 %v2434, %v2679
  %v2681 = vpop.f32.mrb[0].mxu0
  %2682 = vmatprep.mubr.f32.mxu0 0.0
  %2683 = vmatmul.mubr.f32.gmra.mrb[0].mxu0 %v2503
  %v2684 = vpop.f32.mrb[0].mxu0
  %v2685 = vadd.f32 %v2434, %v2684
  %v2686 = vpop.f32.mrb[0].mxu0
  %2687 = vmatprep.mubr.f32.mxu0 0.0
  %2688 = vmatmul.mubr.f32.gmra.mrb[0].mxu0 %v2506
  %v2689 = vpop.f32.mrb[0].mxu0
  %v2690 = vadd.f32 %v2434, %v2689
  %v2691 = vpop.f32.mrb[0].mxu0
  %2692 = vdwg.mxu0
  %v2693 = vmax.f32 %v2575, 0.0
  %v2694 = vmax.f32 %v2580, 0.0
  %v2695 = vmax.f32 %v2585, 0.0
  %v2696 = vmax.f32 %v2590, 0.0
  %v2697 = vmax.f32 %v2595, 0.0
  %v2698 = vmax.f32 %v2600, 0.0
  %v2699 = vmax.f32 %v2605, 0.0
  %v2700 = vmax.f32 %v2610, 0.0
  %v2701 = vmax.f32 %v2615, 0.0
  %v2702 = vmax.f32 %v2620, 0.0
  %v2703 = vmax.f32 %v2625, 0.0
  %v2704 = vmax.f32 %v2630, 0.0
  %v2705 = vmax.f32 %v2635, 0.0
  %v2706 = vmax.f32 %v2640, 0.0
  %v2707 = vmax.f32 %v2645, 0.0
  %v2708 = vmax.f32 %v2650, 0.0
  %v2709 = vmax.f32 %v2655, 0.0
  %v2710 = vmax.f32 %v2660, 0.0
  %v2711 = vmax.f32 %v2665, 0.0
  %v2712 = vmax.f32 %v2670, 0.0
  %v2713 = vmax.f32 %v2675, 0.0
  %v2714 = vmax.f32 %v2680, 0.0
  %v2715 = vmax.f32 %v2685, 0.0
  %v2716 = vmax.f32 %v2690, 0.0
  %v2717 = vld [vmem:[%s5 + $0x1] sm:$0x1]
  %v2718 = vlaneseq
  %v2719 = vshrl.u32 %v2718, 7
  %v2720 = vsub.s32 0, %v2719
  %v2721 = vrot.slane %v2717, %v2720
  %v2722 = vmul.f32 %v2693, %v2721
  %v2723 = vmul.f32 %v2694, %v2721
  %v2724 = vmul.f32 %v2695, %v2721
  %v2725 = vmul.f32 %v2696, %v2721
  %v2726 = vmul.f32 %v2697, %v2721
  %v2727 = vmul.f32 %v2698, %v2721
  %v2728 = vmul.f32 %v2699, %v2721
  %v2729 = vmul.f32 %v2700, %v2721
  %v2730 = vmul.f32 %v2701, %v2721
  %v2731 = vmul.f32 %v2702, %v2721
  %v2732 = vmul.f32 %v2703, %v2721
  %v2733 = vmul.f32 %v2704, %v2721
  %v2734 = vmul.f32 %v2705, %v2721
  %v2735 = vmul.f32 %v2706, %v2721
  %v2736 = vmul.f32 %v2707, %v2721
  %v2737 = vmul.f32 %v2708, %v2721
  %v2738 = vmul.f32 %v2709, %v2721
  %v2739 = vmul.f32 %v2710, %v2721
  %v2740 = vmul.f32 %v2711, %v2721
  %v2741 = vmul.f32 %v2712, %v2721
  %v2742 = vmul.f32 %v2713, %v2721
  %v2743 = vmul.f32 %v2714, %v2721
  %v2744 = vmul.f32 %v2715, %v2721
  %v2745 = vmul.f32 %v2716, %v2721
  %v2746 = vld [vmem:[%s5 + $0x2] sm:$0x1]
  %v2747 = vlaneseq
  %v2748 = vshrl.u32 %v2747, 7
  %v2749 = vsub.s32 0, %v2748
  %v2750 = vrot.slane %v2746, %v2749
  %v2751 = vadd.f32 %v2722, %v2750
  %v2752 = vadd.f32 %v2723, %v2750
  %v2753 = vadd.f32 %v2724, %v2750
  %v2754 = vadd.f32 %v2725, %v2750
  %v2755 = vadd.f32 %v2726, %v2750
  %v2756 = vadd.f32 %v2727, %v2750
  %v2757 = vadd.f32 %v2728, %v2750
  %v2758 = vadd.f32 %v2729, %v2750
  %v2759 = vadd.f32 %v2730, %v2750
  %v2760 = vadd.f32 %v2731, %v2750
  %v2761 = vadd.f32 %v2732, %v2750
  %v2762 = vadd.f32 %v2733, %v2750
  %v2763 = vadd.f32 %v2734, %v2750
  %v2764 = vadd.f32 %v2735, %v2750
  %v2765 = vadd.f32 %v2736, %v2750
  %v2766 = vadd.f32 %v2737, %v2750
  %v2767 = vadd.f32 %v2738, %v2750
  %v2768 = vadd.f32 %v2739, %v2750
  %v2769 = vadd.f32 %v2740, %v2750
  %v2770 = vadd.f32 %v2741, %v2750
  %v2771 = vadd.f32 %v2742, %v2750
  %v2772 = vadd.f32 %v2743, %v2750
  %v2773 = vadd.f32 %v2744, %v2750
  %v2774 = vadd.f32 %v2745, %v2750
  %2775 = vst.msk [vmem:[#allocation2] sm:$0xff] %vm2198, %v2751
  %2776 = vst.msk [vmem:[#allocation2 + $0x8] sm:$0xff] %vm2198, %v2752
  %2777 = vst.msk [vmem:[#allocation2 + $0x10] sm:$0xff] %vm2198, %v2753
  %2778 = vst.msk [vmem:[#allocation2 + $0x18] sm:$0xff] %vm2198, %v2754
  %2779 = vst.msk [vmem:[#allocation2 + $0x20] sm:$0xff] %vm2198, %v2755
  %2780 = vst.msk [vmem:[#allocation2 + $0x28] sm:$0xff] %vm2198, %v2756
  %2781 = vst.msk [vmem:[#allocation2 + $0x30] sm:$0xff] %vm2198, %v2757
  %2782 = vst.msk [vmem:[#allocation2 + $0x38] sm:$0xff] %vm2198, %v2758
  %2783 = vst.msk [vmem:[#allocation2 + $0x40] sm:$0xff] %vm2198, %v2759
  %2784 = vst.msk [vmem:[#allocation2 + $0x48] sm:$0xff] %vm2198, %v2760
  %2785 = vst.msk [vmem:[#allocation2 + $0x50] sm:$0xff] %vm2198, %v2761
  %2786 = vst.msk [vmem:[#allocation2 + $0x58] sm:$0xff] %vm2198, %v2762
  %2787 = vst.msk [vmem:[#allocation2 + $0x60] sm:$0xff] %vm2198, %v2763
  %2788 = vst.msk [vmem:[#allocation2 + $0x68] sm:$0xff] %vm2198, %v2764
  %2789 = vst.msk [vmem:[#allocation2 + $0x70] sm:$0xff] %vm2198, %v2765
  %2790 = vst.msk [vmem:[#allocation2 + $0x78] sm:$0xff] %vm2198, %v2766
  %2791 = vst.msk [vmem:[#allocation2 + $0x80] sm:$0xff] %vm2198, %v2767
  %2792 = vst.msk [vmem:[#allocation2 + $0x88] sm:$0xff] %vm2198, %v2768
  %2793 = vst.msk [vmem:[#allocation2 + $0x90] sm:$0xff] %vm2198, %v2769
  %2794 = vst.msk [vmem:[#allocation2 + $0x98] sm:$0xff] %vm2198, %v2770
  %2795 = vst.msk [vmem:[#allocation2 + $0xa0] sm:$0xff] %vm2198, %v2771
  %2796 = vst.msk [vmem:[#allocation2 + $0xa8] sm:$0xff] %vm2198, %v2772
  %2797 = vst.msk [vmem:[#allocation2 + $0xb0] sm:$0xff] %vm2198, %v2773
  %2798 = vst.msk [vmem:[#allocation2 + $0xb8] sm:$0xff] %vm2198, %v2774
  %v2799 = vld [vmem:[#allocation2] ss:$2 sm:$0xff]
  %s2800 = scalar_lea.vmem [#allocation2], 16
  %v2801 = vld [vmem:[%s2800] ss:$2 sm:$0xff]
  %s2802 = scalar_lea.vmem [#allocation2], 32
  %v2803 = vld [vmem:[%s2802] ss:$2 sm:$0xff]
  %s2804 = scalar_lea.vmem [#allocation2], 48
  %v2805 = vld [vmem:[%s2804] ss:$2 sm:$0xff]
  %s2806 = scalar_lea.vmem [#allocation2], 64
  %v2807 = vld [vmem:[%s2806] ss:$2 sm:$0xff]
  %s2808 = scalar_lea.vmem [#allocation2], 80
  %v2809 = vld [vmem:[%s2808] ss:$2 sm:$0xff]
  %s2810 = scalar_lea.vmem [#allocation2], 96
  %v2811 = vld [vmem:[%s2810] ss:$2 sm:$0xff]
  %s2812 = scalar_lea.vmem [#allocation2], 112
  %v2813 = vld [vmem:[%s2812] ss:$2 sm:$0xff]
  %s2814 = scalar_lea.vmem [#allocation2], 128
  %v2815 = vld [vmem:[%s2814] ss:$2 sm:$0xff]
  %s2816 = scalar_lea.vmem [#allocation2], 144
  %v2817 = vld [vmem:[%s2816] ss:$2 sm:$0xff]
  %s2818 = scalar_lea.vmem [#allocation2], 160
  %v2819 = vld [vmem:[%s2818] ss:$2 sm:$0xff]
  %s2820 = scalar_lea.vmem [#allocation2], 176
  %v2821 = vld [vmem:[%s2820] ss:$2 sm:$0xff]
  %s2822 = scalar_lea.vmem [#allocation2], 1
  %v2823 = vld [vmem:[%s2822] ss:$2 sm:$0xff]
  %s2824 = scalar_lea.vmem [#allocation2], 17
  %v2825 = vld [vmem:[%s2824] ss:$2 sm:$0xff]
  %s2826 = scalar_lea.vmem [#allocation2], 33
  %v2827 = vld [vmem:[%s2826] ss:$2 sm:$0xff]
  %s2828 = scalar_lea.vmem [#allocation2], 49
  %v2829 = vld [vmem:[%s2828] ss:$2 sm:$0xff]
  %s2830 = scalar_lea.vmem [#allocation2], 65
  %v2831 = vld [vmem:[%s2830] ss:$2 sm:$0xff]
  %s2832 = scalar_lea.vmem [#allocation2], 81
  %v2833 = vld [vmem:[%s2832] ss:$2 sm:$0xff]
  %s2834 = scalar_lea.vmem [#allocation2], 97
  %v2835 = vld [vmem:[%s2834] ss:$2 sm:$0xff]
  %s2836 = scalar_lea.vmem [#allocation2], 113
  %v2837 = vld [vmem:[%s2836] ss:$2 sm:$0xff]
  %s2838 = scalar_lea.vmem [#allocation2], 129
  %v2839 = vld [vmem:[%s2838] ss:$2 sm:$0xff]
  %s2840 = scalar_lea.vmem [#allocation2], 145
  %v2841 = vld [vmem:[%s2840] ss:$2 sm:$0xff]
  %s2842 = scalar_lea.vmem [#allocation2], 161
  %v2843 = vld [vmem:[%s2842] ss:$2 sm:$0xff]
  %s2844 = scalar_lea.vmem [#allocation2], 177
  %v2845 = vld [vmem:[%s2844] ss:$2 sm:$0xff]
  %v2846 = vmax.f32 %v2799, %v2823
  %v2847 = vmax.f32 %v2801, %v2825
  %v2848 = vmax.f32 %v2803, %v2827
  %v2849 = vmax.f32 %v2805, %v2829
  %v2850 = vmax.f32 %v2807, %v2831
  %v2851 = vmax.f32 %v2809, %v2833
  %v2852 = vmax.f32 %v2811, %v2835
  %v2853 = vmax.f32 %v2813, %v2837
  %v2854 = vmax.f32 %v2815, %v2839
  %v2855 = vmax.f32 %v2817, %v2841
  %v2856 = vmax.f32 %v2819, %v2843
  %v2857 = vmax.f32 %v2821, %v2845
  %v2858 = vrot.slane %v2846, 7
  %v2859 = vrot.slane %v2847, 7
  %v2860 = vrot.slane %v2848, 7
  %v2861 = vrot.slane %v2849, 7
  %v2862 = vrot.slane %v2850, 7
  %v2863 = vrot.slane %v2851, 7
  %v2864 = vrot.slane %v2852, 7
  %v2865 = vrot.slane %v2853, 7
  %v2866 = vrot.slane %v2854, 7
  %v2867 = vrot.slane %v2855, 7
  %v2868 = vrot.slane %v2856, 7
  %v2869 = vrot.slane %v2857, 7
  %v2870 = vsel %vm109, %v2868, %v2869
  %v2871 = vsel %vm109, %v2867, %v2868
  %v2872 = vsel %vm109, %v2866, %v2867
  %v2873 = vsel %vm109, %v2865, %v2866
  %v2874 = vsel %vm109, %v2864, %v2865
  %v2875 = vsel %vm109, %v2863, %v2864
  %v2876 = vsel %vm109, %v2862, %v2863
  %v2877 = vsel %vm109, %v2861, %v2862
  %v2878 = vsel %vm109, %v2860, %v2861
  %v2879 = vsel %vm109, %v2859, %v2860
  %v2880 = vsel %vm109, %v2858, %v2859
  %v2881 = vsel %vm109, %v2869, %v2858
  %v2882 = vrot.slane %v2846, 1
  %v2883 = vrot.slane %v2847, 1
  %v2884 = vrot.slane %v2848, 1
  %v2885 = vrot.slane %v2849, 1
  %v2886 = vrot.slane %v2850, 1
  %v2887 = vrot.slane %v2851, 1
  %v2888 = vrot.slane %v2852, 1
  %v2889 = vrot.slane %v2853, 1
  %v2890 = vrot.slane %v2854, 1
  %v2891 = vrot.slane %v2855, 1
  %v2892 = vrot.slane %v2856, 1
  %v2893 = vrot.slane %v2857, 1
  %v2894 = vsel %vm158, %v2892, %v2893
  %v2895 = vsel %vm158, %v2891, %v2892
  %v2896 = vsel %vm158, %v2890, %v2891
  %v2897 = vsel %vm158, %v2889, %v2890
  %v2898 = vsel %vm158, %v2888, %v2889
  %v2899 = vsel %vm158, %v2887, %v2888
  %v2900 = vsel %vm158, %v2886, %v2887
  %v2901 = vsel %vm158, %v2885, %v2886
  %v2902 = vsel %vm158, %v2884, %v2885
  %v2903 = vsel %vm158, %v2883, %v2884
  %v2904 = vsel %vm158, %v2882, %v2883
  %v2905 = vsel %vm158, %v2893, %v2882
  %2918 = vrot.lane.b32.xlu0 %v2857, 16
  %v2919 = vpop.permute.xlu0 %2918
  %2920 = vrot.lane.b32.xlu0 %v2846, 16
  %v2921 = vpop.permute.xlu0 %2920
  %2922 = vrot.lane.b32.xlu0 %v2847, 16
  %v2923 = vpop.permute.xlu0 %2922
  %2924 = vrot.lane.b32.xlu0 %v2848, 16
  %v2925 = vpop.permute.xlu0 %2924
  %2926 = vrot.lane.b32.xlu0 %v2849, 16
  %v2927 = vpop.permute.xlu0 %2926
  %2928 = vrot.lane.b32.xlu0 %v2850, 16
  %v2929 = vpop.permute.xlu0 %2928
  %2930 = vrot.lane.b32.xlu0 %v2851, 16
  %v2931 = vpop.permute.xlu0 %2930
  %2932 = vrot.lane.b32.xlu0 %v2852, 16
  %v2933 = vpop.permute.xlu0 %2932
  %2934 = vrot.lane.b32.xlu0 %v2853, 16
  %v2935 = vpop.permute.xlu0 %2934
  %2936 = vrot.lane.b32.xlu0 %v2854, 16
  %v2937 = vpop.permute.xlu0 %2936
  %2938 = vrot.lane.b32.xlu0 %v2855, 16
  %v2939 = vpop.permute.xlu0 %2938
  %2940 = vrot.lane.b32.xlu0 %v2856, 16
  %v2941 = vpop.permute.xlu0 %2940
  %2966 = vrot.lane.b32.xlu0 %v2905, 32
  %v2967 = vpop.permute.xlu0 %2966
  %2968 = vrot.lane.b32.xlu0 %v2904, 32
  %v2969 = vpop.permute.xlu0 %2968
  %2970 = vrot.lane.b32.xlu0 %v2903, 32
  %v2971 = vpop.permute.xlu0 %2970
  %2972 = vrot.lane.b32.xlu0 %v2902, 32
  %v2973 = vpop.permute.xlu0 %2972
  %2974 = vrot.lane.b32.xlu0 %v2901, 32
  %v2975 = vpop.permute.xlu0 %2974
  %2976 = vrot.lane.b32.xlu0 %v2900, 32
  %v2977 = vpop.permute.xlu0 %2976
  %2978 = vrot.lane.b32.xlu0 %v2899, 32
  %v2979 = vpop.permute.xlu0 %2978
  %2980 = vrot.lane.b32.xlu0 %v2898, 32
  %v2981 = vpop.permute.xlu0 %2980
  %2982 = vrot.lane.b32.xlu0 %v2897, 32
  %v2983 = vpop.permute.xlu0 %2982
  %2984 = vrot.lane.b32.xlu0 %v2896, 32
  %v2985 = vpop.permute.xlu0 %2984
  %2986 = vrot.lane.b32.xlu0 %v2895, 32
  %v2987 = vpop.permute.xlu0 %2986
  %2988 = vrot.lane.b32.xlu0 %v2894, 32
  %v2989 = vpop.permute.xlu0 %2988
  %3014 = vrot.lane.b32.xlu0 %v2881, 48
  %v3015 = vpop.permute.xlu0 %3014
  %3016 = vrot.lane.b32.xlu0 %v2880, 48
  %v3017 = vpop.permute.xlu0 %3016
  %3018 = vrot.lane.b32.xlu0 %v2879, 48
  %v3019 = vpop.permute.xlu0 %3018
  %3020 = vrot.lane.b32.xlu0 %v2878, 48
  %v3021 = vpop.permute.xlu0 %3020
  %3022 = vrot.lane.b32.xlu0 %v2877, 48
  %v3023 = vpop.permute.xlu0 %3022
  %3024 = vrot.lane.b32.xlu0 %v2876, 48
  %v3025 = vpop.permute.xlu0 %3024
  %3026 = vrot.lane.b32.xlu0 %v2875, 48
  %v3027 = vpop.permute.xlu0 %3026
  %3028 = vrot.lane.b32.xlu0 %v2874, 48
  %v3029 = vpop.permute.xlu0 %3028
  %3030 = vrot.lane.b32.xlu0 %v2873, 48
  %v3031 = vpop.permute.xlu0 %3030
  %3032 = vrot.lane.b32.xlu0 %v2872, 48
  %v3033 = vpop.permute.xlu0 %3032
  %3034 = vrot.lane.b32.xlu0 %v2871, 48
  %v3035 = vpop.permute.xlu0 %3034
  %3036 = vrot.lane.b32.xlu0 %v2870, 48
  %v3037 = vpop.permute.xlu0 %3036
  %3050 = vrot.lane.b32.xlu0 %v2846, 64
  %v3051 = vpop.permute.xlu0 %3050
  %3052 = vrot.lane.b32.xlu0 %v2847, 64
  %v3053 = vpop.permute.xlu0 %3052
  %3054 = vrot.lane.b32.xlu0 %v2848, 64
  %v3055 = vpop.permute.xlu0 %3054
  %3056 = vrot.lane.b32.xlu0 %v2849, 64
  %v3057 = vpop.permute.xlu0 %3056
  %3058 = vrot.lane.b32.xlu0 %v2850, 64
  %v3059 = vpop.permute.xlu0 %3058
  %3060 = vrot.lane.b32.xlu0 %v2851, 64
  %v3061 = vpop.permute.xlu0 %3060
  %3062 = vrot.lane.b32.xlu0 %v2852, 64
  %v3063 = vpop.permute.xlu0 %3062
  %3064 = vrot.lane.b32.xlu0 %v2853, 64
  %v3065 = vpop.permute.xlu0 %3064
  %3066 = vrot.lane.b32.xlu0 %v2854, 64
  %v3067 = vpop.permute.xlu0 %3066
  %3068 = vrot.lane.b32.xlu0 %v2855, 64
  %v3069 = vpop.permute.xlu0 %3068
  %3070 = vrot.lane.b32.xlu0 %v2856, 64
  %v3071 = vpop.permute.xlu0 %3070
  %3072 = vrot.lane.b32.xlu0 %v2857, 64
  %v3073 = vpop.permute.xlu0 %3072
  %3086 = vrot.lane.b32.xlu0 %v2904, 80
  %v3087 = vpop.permute.xlu0 %3086
  %3088 = vrot.lane.b32.xlu0 %v2903, 80
  %v3089 = vpop.permute.xlu0 %3088
  %3090 = vrot.lane.b32.xlu0 %v2902, 80
  %v3091 = vpop.permute.xlu0 %3090
  %3092 = vrot.lane.b32.xlu0 %v2901, 80
  %v3093 = vpop.permute.xlu0 %3092
  %3094 = vrot.lane.b32.xlu0 %v2900, 80
  %v3095 = vpop.permute.xlu0 %3094
  %3096 = vrot.lane.b32.xlu0 %v2899, 80
  %v3097 = vpop.permute.xlu0 %3096
  %3098 = vrot.lane.b32.xlu0 %v2898, 80
  %v3099 = vpop.permute.xlu0 %3098
  %3100 = vrot.lane.b32.xlu0 %v2897, 80
  %v3101 = vpop.permute.xlu0 %3100
  %3102 = vrot.lane.b32.xlu0 %v2896, 80
  %v3103 = vpop.permute.xlu0 %3102
  %3104 = vrot.lane.b32.xlu0 %v2895, 80
  %v3105 = vpop.permute.xlu0 %3104
  %3106 = vrot.lane.b32.xlu0 %v2894, 80
  %v3107 = vpop.permute.xlu0 %3106
  %3108 = vrot.lane.b32.xlu0 %v2905, 80
  %v3109 = vpop.permute.xlu0 %3108
  %3122 = vrot.lane.b32.xlu0 %v2880, 96
  %v3123 = vpop.permute.xlu0 %3122
  %3124 = vrot.lane.b32.xlu0 %v2879, 96
  %v3125 = vpop.permute.xlu0 %3124
  %3126 = vrot.lane.b32.xlu0 %v2878, 96
  %v3127 = vpop.permute.xlu0 %3126
  %3128 = vrot.lane.b32.xlu0 %v2877, 96
  %v3129 = vpop.permute.xlu0 %3128
  %3130 = vrot.lane.b32.xlu0 %v2876, 96
  %v3131 = vpop.permute.xlu0 %3130
  %3132 = vrot.lane.b32.xlu0 %v2875, 96
  %v3133 = vpop.permute.xlu0 %3132
  %3134 = vrot.lane.b32.xlu0 %v2874, 96
  %v3135 = vpop.permute.xlu0 %3134
  %3136 = vrot.lane.b32.xlu0 %v2873, 96
  %v3137 = vpop.permute.xlu0 %3136
  %3138 = vrot.lane.b32.xlu0 %v2872, 96
  %v3139 = vpop.permute.xlu0 %3138
  %3140 = vrot.lane.b32.xlu0 %v2871, 96
  %v3141 = vpop.permute.xlu0 %3140
  %3142 = vrot.lane.b32.xlu0 %v2870, 96
  %v3143 = vpop.permute.xlu0 %3142
  %3144 = vrot.lane.b32.xlu0 %v2881, 96
  %v3145 = vpop.permute.xlu0 %3144
  %3158 = vrot.lane.b32.xlu0 %v2847, 112
  %v3159 = vpop.permute.xlu0 %3158
  %3160 = vrot.lane.b32.xlu0 %v2848, 112
  %v3161 = vpop.permute.xlu0 %3160
  %3162 = vrot.lane.b32.xlu0 %v2849, 112
  %v3163 = vpop.permute.xlu0 %3162
  %3164 = vrot.lane.b32.xlu0 %v2850, 112
  %v3165 = vpop.permute.xlu0 %3164
  %3166 = vrot.lane.b32.xlu0 %v2851, 112
  %v3167 = vpop.permute.xlu0 %3166
  %3168 = vrot.lane.b32.xlu0 %v2852, 112
  %v3169 = vpop.permute.xlu0 %3168
  %3170 = vrot.lane.b32.xlu0 %v2853, 112
  %v3171 = vpop.permute.xlu0 %3170
  %3172 = vrot.lane.b32.xlu0 %v2854, 112
  %v3173 = vpop.permute.xlu0 %3172
  %3174 = vrot.lane.b32.xlu0 %v2855, 112
  %v3175 = vpop.permute.xlu0 %3174
  %3176 = vrot.lane.b32.xlu0 %v2856, 112
  %v3177 = vpop.permute.xlu0 %3176
  %3178 = vrot.lane.b32.xlu0 %v2857, 112
  %v3179 = vpop.permute.xlu0 %3178
  %3180 = vrot.lane.b32.xlu0 %v2846, 112
  %v3181 = vpop.permute.xlu0 %3180
  %v3194 = vsel %vm2198, %v2870, %v2919
  %v3195 = vsel %vm2198, %v2881, %v2921
  %v3196 = vsel %vm2198, %v2880, %v2923
  %v3197 = vsel %vm2198, %v2879, %v2925
  %v3198 = vsel %vm2198, %v2878, %v2927
  %v3199 = vsel %vm2198, %v2877, %v2929
  %v3200 = vsel %vm2198, %v2876, %v2931
  %v3201 = vsel %vm2198, %v2875, %v2933
  %v3202 = vsel %vm2198, %v2874, %v2935
  %v3203 = vsel %vm2198, %v2873, %v2937
  %v3204 = vsel %vm2198, %v2872, %v2939
  %v3205 = vsel %vm2198, %v2871, %v2941
  %v3206 = vsel %vm2248, %v3194, %v2967
  %v3207 = vsel %vm2248, %v3195, %v2969
  %v3208 = vsel %vm2248, %v3196, %v2971
  %v3209 = vsel %vm2248, %v3197, %v2973
  %v3210 = vsel %vm2248, %v3198, %v2975
  %v3211 = vsel %vm2248, %v3199, %v2977
  %v3212 = vsel %vm2248, %v3200, %v2979
  %v3213 = vsel %vm2248, %v3201, %v2981
  %v3214 = vsel %vm2248, %v3202, %v2983
  %v3215 = vsel %vm2248, %v3203, %v2985
  %v3216 = vsel %vm2248, %v3204, %v2987
  %v3217 = vsel %vm2248, %v3205, %v2989
  %v3218 = vsel %vm2298, %v3206, %v3015
  %v3219 = vsel %vm2298, %v3207, %v3017
  %v3220 = vsel %vm2298, %v3208, %v3019
  %v3221 = vsel %vm2298, %v3209, %v3021
  %v3222 = vsel %vm2298, %v3210, %v3023
  %v3223 = vsel %vm2298, %v3211, %v3025
  %v3224 = vsel %vm2298, %v3212, %v3027
  %v3225 = vsel %vm2298, %v3213, %v3029
  %v3226 = vsel %vm2298, %v3214, %v3031
  %v3227 = vsel %vm2298, %v3215, %v3033
  %v3228 = vsel %vm2298, %v3216, %v3035
  %v3229 = vsel %vm2298, %v3217, %v3037
  %v3230 = vsel %vm2348, %v3218, %v3051
  %v3231 = vsel %vm2348, %v3219, %v3053
  %v3232 = vsel %vm2348, %v3220, %v3055
  %v3233 = vsel %vm2348, %v3221, %v3057
  %v3234 = vsel %vm2348, %v3222, %v3059
  %v3235 = vsel %vm2348, %v3223, %v3061
  %v3236 = vsel %vm2348, %v3224, %v3063
  %v3237 = vsel %vm2348, %v3225, %v3065
  %v3238 = vsel %vm2348, %v3226, %v3067
  %v3239 = vsel %vm2348, %v3227, %v3069
  %v3240 = vsel %vm2348, %v3228, %v3071
  %v3241 = vsel %vm2348, %v3229, %v3073
  %vm3242 = vcmask 654336
  %v3243 = vsel %vm3242, %v3230, %v3087
  %v3244 = vsel %vm3242, %v3231, %v3089
  %v3245 = vsel %vm3242, %v3232, %v3091
  %v3246 = vsel %vm3242, %v3233, %v3093
  %v3247 = vsel %vm3242, %v3234, %v3095
  %v3248 = vsel %vm3242, %v3235, %v3097
  %v3249 = vsel %vm3242, %v3236, %v3099
  %v3250 = vsel %vm3242, %v3237, %v3101
  %v3251 = vsel %vm3242, %v3238, %v3103
  %v3252 = vsel %vm3242, %v3239, %v3105
  %v3253 = vsel %vm3242, %v3240, %v3107
  %v3254 = vsel %vm3242, %v3241, %v3109
  %vm3255 = vcmask 785408
  %v3256 = vsel %vm3255, %v3243, %v3123
  %v3257 = vsel %vm3255, %v3244, %v3125
  %v3258 = vsel %vm3255, %v3245, %v3127
  %v3259 = vsel %vm3255, %v3246, %v3129
  %v3260 = vsel %vm3255, %v3247, %v3131
  %v3261 = vsel %vm3255, %v3248, %v3133
  %v3262 = vsel %vm3255, %v3249, %v3135
  %v3263 = vsel %vm3255, %v3250, %v3137
  %v3264 = vsel %vm3255, %v3251, %v3139
  %v3265 = vsel %vm3255, %v3252, %v3141
  %v3266 = vsel %vm3255, %v3253, %v3143
  %v3267 = vsel %vm3255, %v3254, %v3145
  %vm3268 = vcmask 916480
  %v3269 = vsel %vm3268, %v3256, %v3159
  %v3270 = vsel %vm3268, %v3257, %v3161
  %v3271 = vsel %vm3268, %v3258, %v3163
  %v3272 = vsel %vm3268, %v3259, %v3165
  %v3273 = vsel %vm3268, %v3260, %v3167
  %v3274 = vsel %vm3268, %v3261, %v3169
  %v3275 = vsel %vm3268, %v3262, %v3171
  %v3276 = vsel %vm3268, %v3263, %v3173
  %v3277 = vsel %vm3268, %v3264, %v3175
  %v3278 = vsel %vm3268, %v3265, %v3177
  %v3279 = vsel %vm3268, %v3266, %v3179
  %v3280 = vsel %vm3268, %v3267, %v3181
  %v3281 = vld [vmem:[%s9] sm:$0xff]
  %v3282 = vld [vmem:[%s9 + $0x8] sm:$0xff]
  %v3283 = vld [vmem:[%s9 + $0x10] sm:$0xff]
  %v3284 = vld [vmem:[%s9 + $0x18] sm:$0xff]
  %v3285 = vld [vmem:[%s9 + $0x20] sm:$0xff]
  %v3286 = vld [vmem:[%s9 + $0x28] sm:$0xff]
  %v3287 = vld [vmem:[%s9 + $0x30] sm:$0xff]
  %v3288 = vld [vmem:[%s9 + $0x38] sm:$0xff]
  %v3289 = vld [vmem:[%s9 + $0x40] sm:$0xff]
  %v3290 = vld [vmem:[%s9 + $0x48] sm:$0xff]
  %v3291 = vld [vmem:[%s9 + $0x50] sm:$0xff]
  %v3292 = vld [vmem:[%s9 + $0x58] sm:$0xff]
  %v3293 = vld [vmem:[%s9 + $0x60] sm:$0xff]
  %v3294 = vld [vmem:[%s9 + $0x68] sm:$0xff]
  %v3295 = vld [vmem:[%s9 + $0x70] sm:$0xff]
  %v3296 = vld [vmem:[%s9 + $0x78] sm:$0xff]
  %v3297 = vld [vmem:[%s9 + $0x80] sm:$0xff]
  %v3298 = vld [vmem:[%s9 + $0x88] sm:$0xff]
  %v3299 = vld [vmem:[%s9 + $0x90] sm:$0xff]
  %v3300 = vld [vmem:[%s9 + $0x98] sm:$0xff]
  %v3301 = vld [vmem:[%s9 + $0xa0] sm:$0xff]
  %v3302 = vld [vmem:[%s9 + $0xa8] sm:$0xff]
  %v3303 = vld [vmem:[%s9 + $0xb0] sm:$0xff]
  %v3304 = vld [vmem:[%s9 + $0xb8] sm:$0xff]
  %v3305 = vmul.f32 %v3269, %v3281
  %v3306 = vmul.f32 %v2903, %v3282
  %v3307 = vmul.f32 %v3270, %v3283
  %v3308 = vmul.f32 %v2902, %v3284
  %v3309 = vmul.f32 %v3271, %v3285
  %v3310 = vmul.f32 %v2901, %v3286
  %v3311 = vmul.f32 %v3272, %v3287
  %v3312 = vmul.f32 %v2900, %v3288
  %v3313 = vmul.f32 %v3273, %v3289
  %v3314 = vmul.f32 %v2899, %v3290
  %v3315 = vmul.f32 %v3274, %v3291
  %v3316 = vmul.f32 %v2898, %v3292
  %v3317 = vmul.f32 %v3275, %v3293
  %v3318 = vmul.f32 %v2897, %v3294
  %v3319 = vmul.f32 %v3276, %v3295
  %v3320 = vmul.f32 %v2896, %v3296
  %v3321 = vmul.f32 %v3277, %v3297
  %v3322 = vmul.f32 %v2895, %v3298
  %v3323 = vmul.f32 %v3278, %v3299
  %v3324 = vmul.f32 %v2894, %v3300
  %v3325 = vmul.f32 %v3279, %v3301
  %v3326 = vmul.f32 %v2905, %v3302
  %v3327 = vmul.f32 %v3280, %v3303
  %v3328 = vmul.f32 %v2904, %v3304
  %v3329 = vld [vmem:[%s7] sm:$0xff]
  %v3330 = vld [vmem:[%s7 + $0x8] sm:$0xff]
  %v3331 = vld [vmem:[%s7 + $0x10] sm:$0xff]
  %v3332 = vld [vmem:[%s7 + $0x18] sm:$0xff]
  %v3333 = vld [vmem:[%s7 + $0x20] sm:$0xff]
  %v3334 = vld [vmem:[%s7 + $0x28] sm:$0xff]
  %v3335 = vld [vmem:[%s7 + $0x30] sm:$0xff]
  %v3336 = vld [vmem:[%s7 + $0x38] sm:$0xff]
  %v3337 = vld [vmem:[%s7 + $0x40] sm:$0xff]
  %v3338 = vld [vmem:[%s7 + $0x48] sm:$0xff]
  %v3339 = vld [vmem:[%s7 + $0x50] sm:$0xff]
  %v3340 = vld [vmem:[%s7 + $0x58] sm:$0xff]
  %v3341 = vld [vmem:[%s7 + $0x60] sm:$0xff]
  %v3342 = vld [vmem:[%s7 + $0x68] sm:$0xff]
  %v3343 = vld [vmem:[%s7 + $0x70] sm:$0xff]
  %v3344 = vld [vmem:[%s7 + $0x78] sm:$0xff]
  %v3345 = vld [vmem:[%s7 + $0x80] sm:$0xff]
  %v3346 = vld [vmem:[%s7 + $0x88] sm:$0xff]
  %v3347 = vld [vmem:[%s8] sm:$0x1]
  %v3348 = vlaneseq
  %v3349 = vshrl.u32 %v3348, 7
  %v3350 = vsub.s32 0, %v3349
  %v3351 = vrot.slane %v3347, %v3350
  %v3353 = vsel %vm2198, %v3306, 0
  %v3356 = vsel %vm2198, %v3308, 0
  %v3359 = vsel %vm2198, %v3310, 0
  %v3362 = vsel %vm2198, %v3312, 0
  %v3365 = vsel %vm2198, %v3314, 0
  %v3368 = vsel %vm2198, %v3316, 0
  %v3371 = vsel %vm2198, %v3318, 0
  %v3374 = vsel %vm2198, %v3320, 0
  %v3377 = vsel %vm2198, %v3322, 0
  %v3380 = vsel %vm2198, %v3324, 0
  %v3383 = vsel %vm2198, %v3326, 0
  %v3386 = vsel %vm2198, %v3328, 0
  %3388 = vmatprep.subr.mxu0 0.0
  %3389 = vmatpush1.msra.mxu0 %v3329
  %3390 = vmatprep.subr.mxu0 0.0
  %3391 = vmatpush1.msra.mxu0 %v3330
  %3392 = vmatprep.subr.mxu0 0.0
  %3393 = vmatpush1.msra.mxu0 %v3331
  %3394 = vmatprep.subr.mxu0 0.0
  %3395 = vmatpush1.msra.mxu0 %v3332
  %3396 = vmatprep.subr.mxu0 0.0
  %3397 = vmatpush1.msra.mxu0 %v3333
  %3398 = vmatprep.subr.mxu0 0.0
  %3399 = vmatpush1.msra.mxu0 %v3334
  %3400 = vmatprep.subr.mxu0 0.0
  %3401 = vmatpush1.msra.mxu0 %v3335
  %3402 = vmatprep.subr.mxu0 0.0
  %3403 = vmatpush1.msra.mxu0 %v3336
  %3404 = vmatprep.subr.mxu0 0.0
  %3405 = vmatpush1.msra.mxu0 %v3337
  %3406 = vmatprep.subr.mxu0 0.0
  %3407 = vmatpush1.msra.mxu0 %v3338
  %3408 = vmatprep.subr.mxu0 0.0
  %3409 = vmatpush1.msra.mxu0 %v3339
  %3410 = vmatprep.subr.mxu0 0.0
  %3411 = vmatpush1.msra.mxu0 %v3340
  %3412 = vmatprep.subr.mxu0 0.0
  %3413 = vmatpush1.msra.mxu0 %v3341
  %3414 = vmatprep.subr.mxu0 0.0
  %3415 = vmatpush1.msra.mxu0 %v3342
  %3416 = vmatprep.subr.mxu0 0.0
  %3417 = vmatpush1.msra.mxu0 %v3343
  %3418 = vmatprep.subr.mxu0 0.0
  %3419 = vmatpush1.msra.mxu0 %v3344
  %3420 = vmatprep.subr.mxu0 0.0
  %3421 = vmatpush1.msra.mxu0 %v3345
  %3422 = vmatprep.subr.mxu0 0.0
  %3423 = vmatpush1.msra.mxu0 %v3346
  %3424 = vmatprep.subr.mxu0 0.0
  %3425 = vmatpush1.msra.mxu0 0.0
  %3426 = vmatprep.subr.mxu0 0.0
  %3427 = vmatpush1.msra.mxu0 0.0
  %3428 = vmatprep.subr.mxu0 0.0
  %3429 = vmatpush1.msra.mxu0 0.0
  %3430 = vmatprep.subr.mxu0 0.0
  %3431 = vmatpush1.msra.mxu0 0.0
  %3432 = vmatprep.subr.mxu0 0.0
  %3433 = vmatpush1.msra.mxu0 0.0
  %3434 = vmatprep.subr.mxu0 0.0
  %3435 = vmatpush1.msra.mxu0 0.0
  %3436 = vmatprep.subr.mxu0 0.0
  %3437 = vmatpush1.msra.mxu0 0.0
  %3438 = vmatprep.subr.mxu0 0.0
  %3439 = vmatpush1.msra.mxu0 0.0
  %3440 = vmatprep.subr.mxu0 0.0
  %3441 = vmatpush1.msra.mxu0 0.0
  %3442 = vmatprep.subr.mxu0 0.0
  %3443 = vmatpush1.msra.mxu0 0.0
  %3444 = vmatprep.subr.mxu0 0.0
  %3445 = vmatpush1.msra.mxu0 0.0
  %3446 = vmatprep.subr.mxu0 0.0
  %3447 = vmatpush1.msra.mxu0 0.0
  %3448 = vmatprep.subr.mxu0 0.0
  %3449 = vmatpush1.msra.mxu0 0.0
  %3450 = vmatprep.subr.mxu0 0.0
  %3451 = vmatpush1.msra.mxu0 0.0
  %3452 = vmatprep.mubr.f32.mxu0 %v3353
  %3453 = vmatmul.mubr.f32.gmra.mrb[0].mxu0 %v3305
  %v3454 = vpop.f32.mrb[0].mxu0
  %v3455 = vadd.f32 %v3351, %v3454
  %v3456 = vpop.f32.mrb[0].mxu0
  %3457 = vmatprep.mubr.f32.mxu0 %v3356
  %3458 = vmatmul.mubr.f32.gmra.mrb[0].mxu0 %v3307
  %v3459 = vpop.f32.mrb[0].mxu0
  %v3460 = vadd.f32 %v3351, %v3459
  %v3461 = vpop.f32.mrb[0].mxu0
  %3462 = vmatprep.mubr.f32.mxu0 %v3359
  %3463 = vmatmul.mubr.f32.gmra.mrb[0].mxu0 %v3309
  %v3464 = vpop.f32.mrb[0].mxu0
  %v3465 = vadd.f32 %v3351, %v3464
  %v3466 = vpop.f32.mrb[0].mxu0
  %3467 = vmatprep.mubr.f32.mxu0 %v3362
  %3468 = vmatmul.mubr.f32.gmra.mrb[0].mxu0 %v3311
  %v3469 = vpop.f32.mrb[0].mxu0
  %v3470 = vadd.f32 %v3351, %v3469
  %v3471 = vpop.f32.mrb[0].mxu0
  %3472 = vmatprep.mubr.f32.mxu0 %v3365
  %3473 = vmatmul.mubr.f32.gmra.mrb[0].mxu0 %v3313
  %v3474 = vpop.f32.mrb[0].mxu0
  %v3475 = vadd.f32 %v3351, %v3474
  %v3476 = vpop.f32.mrb[0].mxu0
  %3477 = vmatprep.mubr.f32.mxu0 %v3368
  %3478 = vmatmul.mubr.f32.gmra.mrb[0].mxu0 %v3315
  %v3479 = vpop.f32.mrb[0].mxu0
  %v3480 = vadd.f32 %v3351, %v3479
  %v3481 = vpop.f32.mrb[0].mxu0
  %3482 = vmatprep.mubr.f32.mxu0 %v3371
  %3483 = vmatmul.mubr.f32.gmra.mrb[0].mxu0 %v3317
  %v3484 = vpop.f32.mrb[0].mxu0
  %v3485 = vadd.f32 %v3351, %v3484
  %v3486 = vpop.f32.mrb[0].mxu0
  %3487 = vmatprep.mubr.f32.mxu0 %v3374
  %3488 = vmatmul.mubr.f32.gmra.mrb[0].mxu0 %v3319
  %v3489 = vpop.f32.mrb[0].mxu0
  %v3490 = vadd.f32 %v3351, %v3489
  %v3491 = vpop.f32.mrb[0].mxu0
  %3492 = vmatprep.mubr.f32.mxu0 %v3377
  %3493 = vmatmul.mubr.f32.gmra.mrb[0].mxu0 %v3321
  %v3494 = vpop.f32.mrb[0].mxu0
  %v3495 = vadd.f32 %v3351, %v3494
  %v3496 = vpop.f32.mrb[0].mxu0
  %3497 = vmatprep.mubr.f32.mxu0 %v3380
  %3498 = vmatmul.mubr.f32.gmra.mrb[0].mxu0 %v3323
  %v3499 = vpop.f32.mrb[0].mxu0
  %v3500 = vadd.f32 %v3351, %v3499
  %v3501 = vpop.f32.mrb[0].mxu0
  %3502 = vmatprep.mubr.f32.mxu0 %v3383
  %3503 = vmatmul.mubr.f32.gmra.mrb[0].mxu0 %v3325
  %v3504 = vpop.f32.mrb[0].mxu0
  %v3505 = vadd.f32 %v3351, %v3504
  %v3506 = vpop.f32.mrb[0].mxu0
  %3507 = vmatprep.mubr.f32.mxu0 %v3386
  %3508 = vmatmul.mubr.f32.gmra.mrb[0].mxu0 %v3327
  %v3509 = vpop.f32.mrb[0].mxu0
  %v3510 = vadd.f32 %v3351, %v3509
  %v3511 = vpop.f32.mrb[0].mxu0
  %3512 = vdwg.mxu0
  %v3513 = vmax.f32 %v3455, 0.0
  %v3514 = vmax.f32 %v3460, 0.0
  %v3515 = vmax.f32 %v3465, 0.0
  %v3516 = vmax.f32 %v3470, 0.0
  %v3517 = vmax.f32 %v3475, 0.0
  %v3518 = vmax.f32 %v3480, 0.0
  %v3519 = vmax.f32 %v3485, 0.0
  %v3520 = vmax.f32 %v3490, 0.0
  %v3521 = vmax.f32 %v3495, 0.0
  %v3522 = vmax.f32 %v3500, 0.0
  %v3523 = vmax.f32 %v3505, 0.0
  %v3524 = vmax.f32 %v3510, 0.0
  %v3525 = vld [vmem:[%s8 + $0x1] sm:$0x1]
  %v3526 = vlaneseq
  %v3527 = vshrl.u32 %v3526, 7
  %v3528 = vsub.s32 0, %v3527
  %v3529 = vrot.slane %v3525, %v3528
  %v3530 = vmul.f32 %v3513, %v3529
  %v3531 = vmul.f32 %v3514, %v3529
  %v3532 = vmul.f32 %v3515, %v3529
  %v3533 = vmul.f32 %v3516, %v3529
  %v3534 = vmul.f32 %v3517, %v3529
  %v3535 = vmul.f32 %v3518, %v3529
  %v3536 = vmul.f32 %v3519, %v3529
  %v3537 = vmul.f32 %v3520, %v3529
  %v3538 = vmul.f32 %v3521, %v3529
  %v3539 = vmul.f32 %v3522, %v3529
  %v3540 = vmul.f32 %v3523, %v3529
  %v3541 = vmul.f32 %v3524, %v3529
  %v3542 = vld [vmem:[%s8 + $0x2] sm:$0x1]
  %v3543 = vlaneseq
  %v3544 = vshrl.u32 %v3543, 7
  %v3545 = vsub.s32 0, %v3544
  %v3546 = vrot.slane %v3542, %v3545
  %v3547 = vadd.f32 %v3530, %v3546
  %v3548 = vadd.f32 %v3531, %v3546
  %v3549 = vadd.f32 %v3532, %v3546
  %v3550 = vadd.f32 %v3533, %v3546
  %v3551 = vadd.f32 %v3534, %v3546
  %v3552 = vadd.f32 %v3535, %v3546
  %v3553 = vadd.f32 %v3536, %v3546
  %v3554 = vadd.f32 %v3537, %v3546
  %v3555 = vadd.f32 %v3538, %v3546
  %v3556 = vadd.f32 %v3539, %v3546
  %v3557 = vadd.f32 %v3540, %v3546
  %v3558 = vadd.f32 %v3541, %v3546
  %3559 = vst.msk [vmem:[#allocation2] sm:$0xff] %vm2248, %v3547
  %3560 = vst.msk [vmem:[#allocation2 + $0x8] sm:$0xff] %vm2248, %v3548
  %3561 = vst.msk [vmem:[#allocation2 + $0x10] sm:$0xff] %vm2248, %v3549
  %3562 = vst.msk [vmem:[#allocation2 + $0x18] sm:$0xff] %vm2248, %v3550
  %3563 = vst.msk [vmem:[#allocation2 + $0x20] sm:$0xff] %vm2248, %v3551
  %3564 = vst.msk [vmem:[#allocation2 + $0x28] sm:$0xff] %vm2248, %v3552
  %3565 = vst.msk [vmem:[#allocation2 + $0x30] sm:$0xff] %vm2248, %v3553
  %3566 = vst.msk [vmem:[#allocation2 + $0x38] sm:$0xff] %vm2248, %v3554
  %3567 = vst.msk [vmem:[#allocation2 + $0x40] sm:$0xff] %vm2248, %v3555
  %3568 = vst.msk [vmem:[#allocation2 + $0x48] sm:$0xff] %vm2248, %v3556
  %3569 = vst.msk [vmem:[#allocation2 + $0x50] sm:$0xff] %vm2248, %v3557
  %3570 = vst.msk [vmem:[#allocation2 + $0x58] sm:$0xff] %vm2248, %v3558
  %v3571 = vld [vmem:[#allocation2] ss:$2 sm:$0xff]
  %v3572 = vld [vmem:[%s2800] ss:$2 sm:$0xff]
  %v3573 = vld [vmem:[%s2802] ss:$2 sm:$0xff]
  %v3574 = vld [vmem:[%s2804] ss:$2 sm:$0xff]
  %v3575 = vld [vmem:[%s2806] ss:$2 sm:$0xff]
  %v3576 = vld [vmem:[%s2808] ss:$2 sm:$0xff]
  %v3577 = vld [vmem:[%s2822] ss:$2 sm:$0xff]
  %v3578 = vld [vmem:[%s2824] ss:$2 sm:$0xff]
  %v3579 = vld [vmem:[%s2826] ss:$2 sm:$0xff]
  %v3580 = vld [vmem:[%s2828] ss:$2 sm:$0xff]
  %v3581 = vld [vmem:[%s2830] ss:$2 sm:$0xff]
  %v3582 = vld [vmem:[%s2832] ss:$2 sm:$0xff]
  %v3583 = vmax.f32 %v3571, %v3577
  %v3584 = vmax.f32 %v3572, %v3578
  %v3585 = vmax.f32 %v3573, %v3579
  %v3586 = vmax.f32 %v3574, %v3580
  %v3587 = vmax.f32 %v3575, %v3581
  %v3588 = vmax.f32 %v3576, %v3582
  %v3589 = vrot.slane %v3583, 3
  %v3590 = vrot.slane %v3584, 3
  %v3591 = vrot.slane %v3585, 3
  %v3592 = vrot.slane %v3586, 3
  %v3593 = vrot.slane %v3587, 3
  %v3594 = vrot.slane %v3588, 3
  %vm3595 = vcmp.lt.s32.totalorder %v108, 5
  %v3596 = vsel %vm3595, %v3593, %v3594
  %v3597 = vsel %vm3595, %v3592, %v3593
  %v3598 = vsel %vm3595, %v3591, %v3592
  %v3599 = vsel %vm3595, %v3590, %v3591
  %v3600 = vsel %vm3595, %v3589, %v3590
  %v3601 = vsel %vm3595, %v3594, %v3589
  %v3602 = vrot.slane %v3583, 4
  %v3603 = vrot.slane %v3584, 4
  %v3604 = vrot.slane %v3585, 4
  %v3605 = vrot.slane %v3586, 4
  %v3606 = vrot.slane %v3587, 4
  %v3607 = vrot.slane %v3588, 4
  %vm3608 = vcmp.lt.s32.totalorder %v108, 4
  %v3609 = vsel %vm3608, %v3606, %v3607
  %v3610 = vsel %vm3608, %v3605, %v3606
  %v3611 = vsel %vm3608, %v3604, %v3605
  %v3612 = vsel %vm3608, %v3603, %v3604
  %v3613 = vsel %vm3608, %v3602, %v3603
  %v3614 = vsel %vm3608, %v3607, %v3602
  %v3615 = vrot.slane %v3583, 5
  %v3616 = vrot.slane %v3584, 5
  %v3617 = vrot.slane %v3585, 5
  %v3618 = vrot.slane %v3586, 5
  %v3619 = vrot.slane %v3587, 5
  %v3620 = vrot.slane %v3588, 5
  %vm3621 = vcmp.lt.s32.totalorder %v108, 3
  %v3622 = vsel %vm3621, %v3619, %v3620
  %v3623 = vsel %vm3621, %v3618, %v3619
  %v3624 = vsel %vm3621, %v3617, %v3618
  %v3625 = vsel %vm3621, %v3616, %v3617
  %v3626 = vsel %vm3621, %v3615, %v3616
  %v3627 = vsel %vm3621, %v3620, %v3615
  %v3628 = vrot.slane %v3583, 7
  %v3629 = vrot.slane %v3584, 7
  %v3630 = vrot.slane %v3585, 7
  %v3631 = vrot.slane %v3586, 7
  %v3632 = vrot.slane %v3587, 7
  %v3633 = vrot.slane %v3588, 7
  %v3634 = vsel %vm109, %v3632, %v3633
  %v3635 = vsel %vm109, %v3631, %v3632
  %v3636 = vsel %vm109, %v3630, %v3631
  %v3637 = vsel %vm109, %v3629, %v3630
  %v3638 = vsel %vm109, %v3628, %v3629
  %v3639 = vsel %vm109, %v3633, %v3628
  %v3640 = vrot.slane %v3583, 1
  %v3641 = vrot.slane %v3584, 1
  %v3642 = vrot.slane %v3585, 1
  %v3643 = vrot.slane %v3586, 1
  %v3644 = vrot.slane %v3587, 1
  %v3645 = vrot.slane %v3588, 1
  %v3646 = vsel %vm158, %v3644, %v3645
  %v3647 = vsel %vm158, %v3643, %v3644
  %v3648 = vsel %vm158, %v3642, %v3643
  %v3649 = vsel %vm158, %v3641, %v3642
  %v3650 = vsel %vm158, %v3640, %v3641
  %v3651 = vsel %vm158, %v3645, %v3640
  %3658 = vrot.lane.b32.xlu0 %v3614, 32
  %v3659 = vpop.permute.xlu0 %3658
  %3660 = vrot.lane.b32.xlu0 %v3613, 32
  %v3661 = vpop.permute.xlu0 %3660
  %3662 = vrot.lane.b32.xlu0 %v3612, 32
  %v3663 = vpop.permute.xlu0 %3662
  %3664 = vrot.lane.b32.xlu0 %v3611, 32
  %v3665 = vpop.permute.xlu0 %3664
  %3666 = vrot.lane.b32.xlu0 %v3610, 32
  %v3667 = vpop.permute.xlu0 %3666
  %3668 = vrot.lane.b32.xlu0 %v3609, 32
  %v3669 = vpop.permute.xlu0 %3668
  %3682 = vrot.lane.b32.xlu0 %v3627, 64
  %v3683 = vpop.permute.xlu0 %3682
  %3684 = vrot.lane.b32.xlu0 %v3626, 64
  %v3685 = vpop.permute.xlu0 %3684
  %3686 = vrot.lane.b32.xlu0 %v3625, 64
  %v3687 = vpop.permute.xlu0 %3686
  %3688 = vrot.lane.b32.xlu0 %v3624, 64
  %v3689 = vpop.permute.xlu0 %3688
  %3690 = vrot.lane.b32.xlu0 %v3623, 64
  %v3691 = vpop.permute.xlu0 %3690
  %3692 = vrot.lane.b32.xlu0 %v3622, 64
  %v3693 = vpop.permute.xlu0 %3692
  %3706 = vrot.lane.b32.xlu0 %v3639, 96
  %v3707 = vpop.permute.xlu0 %3706
  %3708 = vrot.lane.b32.xlu0 %v3638, 96
  %v3709 = vpop.permute.xlu0 %3708
  %3710 = vrot.lane.b32.xlu0 %v3637, 96
  %v3711 = vpop.permute.xlu0 %3710
  %3712 = vrot.lane.b32.xlu0 %v3636, 96
  %v3713 = vpop.permute.xlu0 %3712
  %3714 = vrot.lane.b32.xlu0 %v3635, 96
  %v3715 = vpop.permute.xlu0 %3714
  %3716 = vrot.lane.b32.xlu0 %v3634, 96
  %v3717 = vpop.permute.xlu0 %3716
  %3730 = vrot.lane.b32.xlu0 %v3650, 32
  %v3731 = vpop.permute.xlu0 %3730
  %3732 = vrot.lane.b32.xlu0 %v3649, 32
  %v3733 = vpop.permute.xlu0 %3732
  %3734 = vrot.lane.b32.xlu0 %v3648, 32
  %v3735 = vpop.permute.xlu0 %3734
  %3736 = vrot.lane.b32.xlu0 %v3647, 32
  %v3737 = vpop.permute.xlu0 %3736
  %3738 = vrot.lane.b32.xlu0 %v3646, 32
  %v3739 = vpop.permute.xlu0 %3738
  %3740 = vrot.lane.b32.xlu0 %v3651, 32
  %v3741 = vpop.permute.xlu0 %3740
  %3754 = vrot.lane.b32.xlu0 %v3600, 64
  %v3755 = vpop.permute.xlu0 %3754
  %3756 = vrot.lane.b32.xlu0 %v3599, 64
  %v3757 = vpop.permute.xlu0 %3756
  %3758 = vrot.lane.b32.xlu0 %v3598, 64
  %v3759 = vpop.permute.xlu0 %3758
  %3760 = vrot.lane.b32.xlu0 %v3597, 64
  %v3761 = vpop.permute.xlu0 %3760
  %3762 = vrot.lane.b32.xlu0 %v3596, 64
  %v3763 = vpop.permute.xlu0 %3762
  %3764 = vrot.lane.b32.xlu0 %v3601, 64
  %v3765 = vpop.permute.xlu0 %3764
  %3772 = vrot.lane.b32.xlu0 %v3613, 96
  %v3773 = vpop.permute.xlu0 %3772
  %3774 = vrot.lane.b32.xlu0 %v3612, 96
  %v3775 = vpop.permute.xlu0 %3774
  %3776 = vrot.lane.b32.xlu0 %v3611, 96
  %v3777 = vpop.permute.xlu0 %3776
  %3778 = vrot.lane.b32.xlu0 %v3610, 96
  %v3779 = vpop.permute.xlu0 %3778
  %3780 = vrot.lane.b32.xlu0 %v3609, 96
  %v3781 = vpop.permute.xlu0 %3780
  %3782 = vrot.lane.b32.xlu0 %v3614, 96
  %v3783 = vpop.permute.xlu0 %3782
  %v3790 = vsel %vm2248, %v3601, %v3659
  %v3791 = vsel %vm2248, %v3600, %v3661
  %v3792 = vsel %vm2248, %v3599, %v3663
  %v3793 = vsel %vm2248, %v3598, %v3665
  %v3794 = vsel %vm2248, %v3597, %v3667
  %v3795 = vsel %vm2248, %v3596, %v3669
  %v3796 = vsel %vm2348, %v3790, %v3683
  %v3797 = vsel %vm2348, %v3791, %v3685
  %v3798 = vsel %vm2348, %v3792, %v3687
  %v3799 = vsel %vm2348, %v3793, %v3689
  %v3800 = vsel %vm2348, %v3794, %v3691
  %v3801 = vsel %vm2348, %v3795, %v3693
  %v3802 = vsel %vm3255, %v3796, %v3707
  %v3803 = vsel %vm3255, %v3797, %v3709
  %v3804 = vsel %vm3255, %v3798, %v3711
  %v3805 = vsel %vm3255, %v3799, %v3713
  %v3806 = vsel %vm3255, %v3800, %v3715
  %v3807 = vsel %vm3255, %v3801, %v3717
  %v3808 = vsel %vm2248, %v3583, %v3731
  %v3809 = vsel %vm2248, %v3584, %v3733
  %v3810 = vsel %vm2248, %v3585, %v3735
  %v3811 = vsel %vm2248, %v3586, %v3737
  %v3812 = vsel %vm2248, %v3587, %v3739
  %v3813 = vsel %vm2248, %v3588, %v3741
  %v3814 = vsel %vm2348, %v3808, %v3755
  %v3815 = vsel %vm2348, %v3809, %v3757
  %v3816 = vsel %vm2348, %v3810, %v3759
  %v3817 = vsel %vm2348, %v3811, %v3761
  %v3818 = vsel %vm2348, %v3812, %v3763
  %v3819 = vsel %vm2348, %v3813, %v3765
  %v3820 = vsel %vm3255, %v3814, %v3773
  %v3821 = vsel %vm3255, %v3815, %v3775
  %v3822 = vsel %vm3255, %v3816, %v3777
  %v3823 = vsel %vm3255, %v3817, %v3779
  %v3824 = vsel %vm3255, %v3818, %v3781
  %v3825 = vsel %vm3255, %v3819, %v3783
  %v3826 = vld [vmem:[%s12] sm:$0xff]
  %v3827 = vld [vmem:[%s12 + $0x8] sm:$0xff]
  %v3828 = vld [vmem:[%s12 + $0x10] sm:$0xff]
  %v3829 = vld [vmem:[%s12 + $0x18] sm:$0xff]
  %v3830 = vld [vmem:[%s12 + $0x20] sm:$0xff]
  %v3831 = vld [vmem:[%s12 + $0x28] sm:$0xff]
  %v3832 = vld [vmem:[%s12 + $0x30] sm:$0xff]
  %v3833 = vld [vmem:[%s12 + $0x38] sm:$0xff]
  %v3834 = vld [vmem:[%s12 + $0x40] sm:$0xff]
  %v3835 = vld [vmem:[%s12 + $0x48] sm:$0xff]
  %v3836 = vld [vmem:[%s12 + $0x50] sm:$0xff]
  %v3837 = vld [vmem:[%s12 + $0x58] sm:$0xff]
  %v3838 = vld [vmem:[%s12 + $0x60] sm:$0xff]
  %v3839 = vld [vmem:[%s12 + $0x68] sm:$0xff]
  %v3840 = vld [vmem:[%s12 + $0x70] sm:$0xff]
  %v3841 = vld [vmem:[%s12 + $0x78] sm:$0xff]
  %v3842 = vld [vmem:[%s12 + $0x80] sm:$0xff]
  %v3843 = vld [vmem:[%s12 + $0x88] sm:$0xff]
  %v3844 = vmul.f32 %v3802, %v3826
  %v3845 = vmul.f32 %v3820, %v3827
  %v3846 = vmul.f32 %v3626, %v3828
  %v3847 = vmul.f32 %v3803, %v3829
  %v3848 = vmul.f32 %v3821, %v3830
  %v3849 = vmul.f32 %v3625, %v3831
  %v3850 = vmul.f32 %v3804, %v3832
  %v3851 = vmul.f32 %v3822, %v3833
  %v3852 = vmul.f32 %v3624, %v3834
  %v3853 = vmul.f32 %v3805, %v3835
  %v3854 = vmul.f32 %v3823, %v3836
  %v3855 = vmul.f32 %v3623, %v3837
  %v3856 = vmul.f32 %v3806, %v3838
  %v3857 = vmul.f32 %v3824, %v3839
  %v3858 = vmul.f32 %v3622, %v3840
  %v3859 = vmul.f32 %v3807, %v3841
  %v3860 = vmul.f32 %v3825, %v3842
  %v3861 = vmul.f32 %v3627, %v3843
  %v3862 = vld [vmem:[%s10] sm:$0xff]
  %v3863 = vld [vmem:[%s10 + $0x8] sm:$0xff]
  %v3864 = vld [vmem:[%s10 + $0x10] sm:$0xff]
  %v3865 = vld [vmem:[%s10 + $0x18] sm:$0xff]
  %v3866 = vld [vmem:[%s10 + $0x20] sm:$0xff]
  %v3867 = vld [vmem:[%s10 + $0x28] sm:$0xff]
  %v3868 = vld [vmem:[%s10 + $0x30] sm:$0xff]
  %v3869 = vld [vmem:[%s10 + $0x38] sm:$0xff]
  %v3870 = vld [vmem:[%s10 + $0x40] sm:$0xff]
  %v3871 = vld [vmem:[%s10 + $0x48] sm:$0xff]
  %v3872 = vld [vmem:[%s10 + $0x50] sm:$0xff]
  %v3873 = vld [vmem:[%s10 + $0x58] sm:$0xff]
  %v3874 = vld [vmem:[%s10 + $0x60] sm:$0xff]
  %v3875 = vld [vmem:[%s10 + $0x68] sm:$0xff]
  %v3876 = vld [vmem:[%s10 + $0x70] sm:$0xff]
  %v3877 = vld [vmem:[%s10 + $0x78] sm:$0xff]
  %v3878 = vld [vmem:[%s10 + $0x80] sm:$0xff]
  %v3879 = vld [vmem:[%s10 + $0x88] sm:$0xff]
  %v3880 = vld [vmem:[%s10 + $0x90] sm:$0xff]
  %v3881 = vld [vmem:[%s10 + $0x98] sm:$0xff]
  %v3882 = vld [vmem:[%s10 + $0xa0] sm:$0xff]
  %v3883 = vld [vmem:[%s10 + $0xa8] sm:$0xff]
  %v3884 = vld [vmem:[%s10 + $0xb0] sm:$0xff]
  %v3885 = vld [vmem:[%s10 + $0xb8] sm:$0xff]
  %v3886 = vld [vmem:[%s10 + $0xc0] sm:$0xff]
  %v3887 = vld [vmem:[%s10 + $0xc8] sm:$0xff]
  %v3888 = vld [vmem:[%s10 + $0xd0] sm:$0xff]
  %v3889 = vld [vmem:[%s10 + $0xd8] sm:$0xff]
  %v3890 = vld [vmem:[%s10 + $0xe0] sm:$0xff]
  %v3891 = vld [vmem:[%s10 + $0xe8] sm:$0xff]
  %v3892 = vld [vmem:[%s10 + $0xf0] sm:$0xff]
  %v3893 = vld [vmem:[%s10 + $0xf8] sm:$0xff]
  %v3894 = vld [vmem:[%s10 + $0x100] sm:$0xff]
  %v3895 = vld [vmem:[%s10 + $0x108] sm:$0xff]
  %v3896 = vld [vmem:[%s10 + $0x110] sm:$0xff]
  %v3897 = vld [vmem:[%s10 + $0x118] sm:$0xff]
  %v3898 = vld [vmem:[%s11] sm:$0x1]
  %v3899 = vlaneseq
  %v3900 = vshrl.u32 %v3899, 7
  %v3901 = vsub.s32 0, %v3900
  %v3902 = vrot.slane %v3898, %v3901
  %v3904 = vsel %vm2248, %v3846, 0
  %v3907 = vsel %vm2248, %v3849, 0
  %v3910 = vsel %vm2248, %v3852, 0
  %v3913 = vsel %vm2248, %v3855, 0
  %v3916 = vsel %vm2248, %v3858, 0
  %v3919 = vsel %vm2248, %v3861, 0
  %3921 = vmatprep.subr.mxu0 0.0
  %3922 = vmatpush1.msra.mxu0 %v3862
  %3923 = vmatprep.subr.mxu0 0.0
  %3924 = vmatpush1.msra.mxu0 %v3863
  %3925 = vmatprep.subr.mxu0 0.0
  %3926 = vmatpush1.msra.mxu0 %v3864
  %3927 = vmatprep.subr.mxu0 0.0
  %3928 = vmatpush1.msra.mxu0 %v3865
  %3929 = vmatprep.subr.mxu0 0.0
  %3930 = vmatpush1.msra.mxu0 %v3866
  %3931 = vmatprep.subr.mxu0 0.0
  %3932 = vmatpush1.msra.mxu0 %v3867
  %3933 = vmatprep.subr.mxu0 0.0
  %3934 = vmatpush1.msra.mxu0 %v3868
  %3935 = vmatprep.subr.mxu0 0.0
  %3936 = vmatpush1.msra.mxu0 %v3869
  %3937 = vmatprep.subr.mxu0 0.0
  %3938 = vmatpush1.msra.mxu0 %v3870
  %3939 = vmatprep.subr.mxu0 0.0
  %3940 = vmatpush1.msra.mxu0 %v3871
  %3941 = vmatprep.subr.mxu0 0.0
  %3942 = vmatpush1.msra.mxu0 %v3872
  %3943 = vmatprep.subr.mxu0 0.0
  %3944 = vmatpush1.msra.mxu0 %v3873
  %3945 = vmatprep.subr.mxu0 0.0
  %3946 = vmatpush1.msra.mxu0 %v3874
  %3947 = vmatprep.subr.mxu0 0.0
  %3948 = vmatpush1.msra.mxu0 %v3875
  %3949 = vmatprep.subr.mxu0 0.0
  %3950 = vmatpush1.msra.mxu0 %v3876
  %3951 = vmatprep.subr.mxu0 0.0
  %3952 = vmatpush1.msra.mxu0 %v3877
  %3953 = vmatprep.subr.mxu0 0.0
  %3954 = vmatpush1.msra.mxu0 %v3878
  %3955 = vmatprep.subr.mxu0 0.0
  %3956 = vmatpush1.msra.mxu0 %v3879
  %3957 = vmatprep.subr.mxu0 0.0
  %3958 = vmatpush1.msra.mxu0 %v3880
  %3959 = vmatprep.subr.mxu0 0.0
  %3960 = vmatpush1.msra.mxu0 %v3881
  %3961 = vmatprep.subr.mxu0 0.0
  %3962 = vmatpush1.msra.mxu0 %v3882
  %3963 = vmatprep.subr.mxu0 0.0
  %3964 = vmatpush1.msra.mxu0 %v3883
  %3965 = vmatprep.subr.mxu0 0.0
  %3966 = vmatpush1.msra.mxu0 %v3884
  %3967 = vmatprep.subr.mxu0 0.0
  %3968 = vmatpush1.msra.mxu0 %v3885
  %3969 = vmatprep.subr.mxu0 0.0
  %3970 = vmatpush1.msra.mxu0 %v3886
  %3971 = vmatprep.subr.mxu0 0.0
  %3972 = vmatpush1.msra.mxu0 %v3887
  %3973 = vmatprep.subr.mxu0 0.0
  %3974 = vmatpush1.msra.mxu0 %v3888
  %3975 = vmatprep.subr.mxu0 0.0
  %3976 = vmatpush1.msra.mxu0 %v3889
  %3977 = vmatprep.subr.mxu0 0.0
  %3978 = vmatpush1.msra.mxu0 %v3890
  %3979 = vmatprep.subr.mxu0 0.0
  %3980 = vmatpush1.msra.mxu0 %v3891
  %3981 = vmatprep.subr.mxu0 0.0
  %3982 = vmatpush1.msra.mxu0 %v3892
  %3983 = vmatprep.subr.mxu0 0.0
  %3984 = vmatpush1.msra.mxu0 %v3893
  %3985 = vmatprep.mubr.f32.mxu0 %v3845
  %3986 = vmatmul.mubr.f32.gmra.mrb[0].mxu0 %v3844
  %v3987 = vpop.f32.mrb[0].mxu0
  %v3988 = vadd.f32 %v3902, %v3987
  %v3989 = vpop.f32.mrb[0].mxu0
  %3990 = vmatprep.mubr.f32.mxu0 %v3848
  %3991 = vmatmul.mubr.f32.gmra.mrb[0].mxu0 %v3847
  %v3992 = vpop.f32.mrb[0].mxu0
  %v3993 = vadd.f32 %v3902, %v3992
  %v3994 = vpop.f32.mrb[0].mxu0
  %3995 = vmatprep.mubr.f32.mxu0 %v3851
  %3996 = vmatmul.mubr.f32.gmra.mrb[0].mxu0 %v3850
  %v3997 = vpop.f32.mrb[0].mxu0
  %v3998 = vadd.f32 %v3902, %v3997
  %v3999 = vpop.f32.mrb[0].mxu0
  %4000 = vmatprep.mubr.f32.mxu0 %v3854
  %4001 = vmatmul.mubr.f32.gmra.mrb[0].mxu0 %v3853
  %v4002 = vpop.f32.mrb[0].mxu0
  %v4003 = vadd.f32 %v3902, %v4002
  %v4004 = vpop.f32.mrb[0].mxu0
  %4005 = vmatprep.mubr.f32.mxu0 %v3857
  %4006 = vmatmul.mubr.f32.gmra.mrb[0].mxu0 %v3856
  %v4007 = vpop.f32.mrb[0].mxu0
  %v4008 = vadd.f32 %v3902, %v4007
  %v4009 = vpop.f32.mrb[0].mxu0
  %4010 = vmatprep.mubr.f32.mxu0 %v3860
  %4011 = vmatmul.mubr.f32.gmra.mrb[0].mxu0 %v3859
  %v4012 = vpop.f32.mrb[0].mxu0
  %v4013 = vadd.f32 %v3902, %v4012
  %v4014 = vpop.f32.mrb[0].mxu0
  %4015 = vdwg.mxu0
  %4016 = vmatprep.subr.mxu0 0.0
  %4017 = vmatpush1.msra.mxu0 %v3894
  %4018 = vmatprep.subr.mxu0 0.0
  %4019 = vmatpush1.msra.mxu0 %v3895
  %4020 = vmatprep.subr.mxu0 0.0
  %4021 = vmatpush1.msra.mxu0 %v3896
  %4022 = vmatprep.subr.mxu0 0.0
  %4023 = vmatpush1.msra.mxu0 %v3897
  %4024 = vmatprep.subr.mxu0 0.0
  %4025 = vmatpush1.msra.mxu0 0.0
  %4026 = vmatprep.subr.mxu0 0.0
  %4027 = vmatpush1.msra.mxu0 0.0
  %4028 = vmatprep.subr.mxu0 0.0
  %4029 = vmatpush1.msra.mxu0 0.0
  %4030 = vmatprep.subr.mxu0 0.0
  %4031 = vmatpush1.msra.mxu0 0.0
  %4032 = vmatprep.subr.mxu0 0.0
  %4033 = vmatpush1.msra.mxu0 0.0
  %4034 = vmatprep.subr.mxu0 0.0
  %4035 = vmatpush1.msra.mxu0 0.0
  %4036 = vmatprep.subr.mxu0 0.0
  %4037 = vmatpush1.msra.mxu0 0.0
  %4038 = vmatprep.subr.mxu0 0.0
  %4039 = vmatpush1.msra.mxu0 0.0
  %4040 = vmatprep.subr.mxu0 0.0
  %4041 = vmatpush1.msra.mxu0 0.0
  %4042 = vmatprep.subr.mxu0 0.0
  %4043 = vmatpush1.msra.mxu0 0.0
  %4044 = vmatprep.subr.mxu0 0.0
  %4045 = vmatpush1.msra.mxu0 0.0
  %4046 = vmatprep.subr.mxu0 0.0
  %4047 = vmatpush1.msra.mxu0 0.0
  %4048 = vmatprep.subr.mxu0 0.0
  %4049 = vmatpush1.msra.mxu0 0.0
  %4050 = vmatprep.subr.mxu0 0.0
  %4051 = vmatpush1.msra.mxu0 0.0
  %4052 = vmatprep.subr.mxu0 0.0
  %4053 = vmatpush1.msra.mxu0 0.0
  %4054 = vmatprep.subr.mxu0 0.0
  %4055 = vmatpush1.msra.mxu0 0.0
  %4056 = vmatprep.subr.mxu0 0.0
  %4057 = vmatpush1.msra.mxu0 0.0
  %4058 = vmatprep.subr.mxu0 0.0
  %4059 = vmatpush1.msra.mxu0 0.0
  %4060 = vmatprep.subr.mxu0 0.0
  %4061 = vmatpush1.msra.mxu0 0.0
  %4062 = vmatprep.subr.mxu0 0.0
  %4063 = vmatpush1.msra.mxu0 0.0
  %4064 = vmatprep.subr.mxu0 0.0
  %4065 = vmatpush1.msra.mxu0 0.0
  %4066 = vmatprep.subr.mxu0 0.0
  %4067 = vmatpush1.msra.mxu0 0.0
  %4068 = vmatprep.subr.mxu0 0.0
  %4069 = vmatpush1.msra.mxu0 0.0
  %4070 = vmatprep.subr.mxu0 0.0
  %4071 = vmatpush1.msra.mxu0 0.0
  %4072 = vmatprep.subr.mxu0 0.0
  %4073 = vmatpush1.msra.mxu0 0.0
  %4074 = vmatprep.subr.mxu0 0.0
  %4075 = vmatpush1.msra.mxu0 0.0
  %4076 = vmatprep.subr.mxu0 0.0
  %4077 = vmatpush1.msra.mxu0 0.0
  %4078 = vmatprep.subr.mxu0 0.0
  %4079 = vmatpush1.msra.mxu0 0.0
  %4080 = vmatprep.mubr.f32.mxu0 0.0
  %4081 = vmatmul.mubr.f32.gmra.mrb[0].mxu0 %v3904
  %v4082 = vpop.f32.mrb[0].mxu0
  %v4083 = vadd.f32 %v3988, %v4082
  %v4084 = vpop.f32.mrb[0].mxu0
  %4085 = vmatprep.mubr.f32.mxu0 0.0
  %4086 = vmatmul.mubr.f32.gmra.mrb[0].mxu0 %v3907
  %v4087 = vpop.f32.mrb[0].mxu0
  %v4088 = vadd.f32 %v3993, %v4087
  %v4089 = vpop.f32.mrb[0].mxu0
  %4090 = vmatprep.mubr.f32.mxu0 0.0
  %4091 = vmatmul.mubr.f32.gmra.mrb[0].mxu0 %v3910
  %v4092 = vpop.f32.mrb[0].mxu0
  %v4093 = vadd.f32 %v3998, %v4092
  %v4094 = vpop.f32.mrb[0].mxu0
  %4095 = vmatprep.mubr.f32.mxu0 0.0
  %4096 = vmatmul.mubr.f32.gmra.mrb[0].mxu0 %v3913
  %v4097 = vpop.f32.mrb[0].mxu0
  %v4098 = vadd.f32 %v4003, %v4097
  %v4099 = vpop.f32.mrb[0].mxu0
  %4100 = vmatprep.mubr.f32.mxu0 0.0
  %4101 = vmatmul.mubr.f32.gmra.mrb[0].mxu0 %v3916
  %v4102 = vpop.f32.mrb[0].mxu0
  %v4103 = vadd.f32 %v4008, %v4102
  %v4104 = vpop.f32.mrb[0].mxu0
  %4105 = vmatprep.mubr.f32.mxu0 0.0
  %4106 = vmatmul.mubr.f32.gmra.mrb[0].mxu0 %v3919
  %v4107 = vpop.f32.mrb[0].mxu0
  %v4108 = vadd.f32 %v4013, %v4107
  %v4109 = vpop.f32.mrb[0].mxu0
  %4110 = vdwg.mxu0
  %v4111 = vmax.f32 %v4083, 0.0
  %v4112 = vmax.f32 %v4088, 0.0
  %v4113 = vmax.f32 %v4093, 0.0
  %v4114 = vmax.f32 %v4098, 0.0
  %v4115 = vmax.f32 %v4103, 0.0
  %v4116 = vmax.f32 %v4108, 0.0
  %v4117 = vld [vmem:[%s11 + $0x1] sm:$0x1]
  %v4118 = vlaneseq
  %v4119 = vshrl.u32 %v4118, 7
  %v4120 = vsub.s32 0, %v4119
  %v4121 = vrot.slane %v4117, %v4120
  %v4122 = vmul.f32 %v4111, %v4121
  %v4123 = vmul.f32 %v4112, %v4121
  %v4124 = vmul.f32 %v4113, %v4121
  %v4125 = vmul.f32 %v4114, %v4121
  %v4126 = vmul.f32 %v4115, %v4121
  %v4127 = vmul.f32 %v4116, %v4121
  %v4128 = vld [vmem:[%s11 + $0x2] sm:$0x1]
  %v4129 = vlaneseq
  %v4130 = vshrl.u32 %v4129, 7
  %v4131 = vsub.s32 0, %v4130
  %v4132 = vrot.slane %v4128, %v4131
  %v4133 = vadd.f32 %v4122, %v4132
  %v4134 = vadd.f32 %v4123, %v4132
  %v4135 = vadd.f32 %v4124, %v4132
  %v4136 = vadd.f32 %v4125, %v4132
  %v4137 = vadd.f32 %v4126, %v4132
  %v4138 = vadd.f32 %v4127, %v4132
  %4139 = vst.msk [vmem:[#allocation2] sm:$0xff] %vm2248, %v4133
  %4140 = vst.msk [vmem:[#allocation2 + $0x8] sm:$0xff] %vm2248, %v4134
  %4141 = vst.msk [vmem:[#allocation2 + $0x10] sm:$0xff] %vm2248, %v4135
  %4142 = vst.msk [vmem:[#allocation2 + $0x18] sm:$0xff] %vm2248, %v4136
  %4143 = vst.msk [vmem:[#allocation2 + $0x20] sm:$0xff] %vm2248, %v4137
  %4144 = vst.msk [vmem:[#allocation2 + $0x28] sm:$0xff] %vm2248, %v4138
  %v4145 = vld [vmem:[#allocation2] ss:$2 sm:$0xff]
  %v4146 = vld [vmem:[%s2800] ss:$2 sm:$0xff]
  %v4147 = vld [vmem:[%s2802] ss:$2 sm:$0xff]
  %v4148 = vld [vmem:[%s2822] ss:$2 sm:$0xff]
  %v4149 = vld [vmem:[%s2824] ss:$2 sm:$0xff]
  %v4150 = vld [vmem:[%s2826] ss:$2 sm:$0xff]
  %v4151 = vmax.f32 %v4145, %v4148
  %v4152 = vmax.f32 %v4146, %v4149
  %v4153 = vmax.f32 %v4147, %v4150
  %v4154 = vrot.slane %v4151, 5
  %v4155 = vrot.slane %v4152, 5
  %v4156 = vrot.slane %v4153, 5
  %v4157 = vsel %vm3621, %v4155, %v4156
  %v4158 = vsel %vm3621, %v4154, %v4155
  %v4159 = vsel %vm3621, %v4156, %v4154
  %v4160 = vrot.slane %v4151, 6
  %v4161 = vrot.slane %v4152, 6
  %v4162 = vrot.slane %v4153, 6
  %vm4163 = vcmp.lt.s32.totalorder %v108, 2
  %v4164 = vsel %vm4163, %v4161, %v4162
  %v4165 = vsel %vm4163, %v4160, %v4161
  %v4166 = vsel %vm4163, %v4162, %v4160
  %v4167 = vrot.slane %v4151, 7
  %v4168 = vrot.slane %v4152, 7
  %v4169 = vrot.slane %v4153, 7
  %v4170 = vsel %vm109, %v4168, %v4169
  %v4171 = vsel %vm109, %v4167, %v4168
  %v4172 = vsel %vm109, %v4169, %v4167
  %v4173 = vrot.slane %v4151, 1
  %v4174 = vrot.slane %v4152, 1
  %v4175 = vrot.slane %v4153, 1
  %v4176 = vsel %vm158, %v4174, %v4175
  %v4177 = vsel %vm158, %v4173, %v4174
  %v4178 = vsel %vm158, %v4175, %v4173
  %v4179 = vrot.slane %v4151, 2
  %v4180 = vrot.slane %v4152, 2
  %v4181 = vrot.slane %v4153, 2
  %vm4182 = vcmp.lt.s32.totalorder %v108, 6
  %v4183 = vsel %vm4182, %v4180, %v4181
  %v4184 = vsel %vm4182, %v4179, %v4180
  %v4185 = vsel %vm4182, %v4181, %v4179
  %v4186 = vrot.slane %v4151, 3
  %v4187 = vrot.slane %v4152, 3
  %v4188 = vrot.slane %v4153, 3
  %v4189 = vsel %vm3595, %v4187, %v4188
  %v4190 = vsel %vm3595, %v4186, %v4187
  %v4191 = vsel %vm3595, %v4188, %v4186
  %4195 = vrot.lane.b32.xlu0 %v4166, 32
  %v4196 = vpop.permute.xlu0 %4195
  %4197 = vrot.lane.b32.xlu0 %v4165, 32
  %v4198 = vpop.permute.xlu0 %4197
  %4199 = vrot.lane.b32.xlu0 %v4164, 32
  %v4200 = vpop.permute.xlu0 %4199
  %4207 = vrot.lane.b32.xlu0 %v4172, 64
  %v4208 = vpop.permute.xlu0 %4207
  %4209 = vrot.lane.b32.xlu0 %v4171, 64
  %v4210 = vpop.permute.xlu0 %4209
  %4211 = vrot.lane.b32.xlu0 %v4170, 64
  %v4212 = vpop.permute.xlu0 %4211
  %4216 = vrot.lane.b32.xlu0 %v4172, 96
  %v4217 = vpop.permute.xlu0 %4216
  %4218 = vrot.lane.b32.xlu0 %v4171, 96
  %v4219 = vpop.permute.xlu0 %4218
  %4220 = vrot.lane.b32.xlu0 %v4170, 96
  %v4221 = vpop.permute.xlu0 %4220
  %4228 = vrot.lane.b32.xlu0 %v4177, 32
  %v4229 = vpop.permute.xlu0 %4228
  %4230 = vrot.lane.b32.xlu0 %v4176, 32
  %v4231 = vpop.permute.xlu0 %4230
  %4232 = vrot.lane.b32.xlu0 %v4178, 32
  %v4233 = vpop.permute.xlu0 %4232
  %4237 = vrot.lane.b32.xlu0 %v4177, 64
  %v4238 = vpop.permute.xlu0 %4237
  %4239 = vrot.lane.b32.xlu0 %v4176, 64
  %v4240 = vpop.permute.xlu0 %4239
  %4241 = vrot.lane.b32.xlu0 %v4178, 64
  %v4242 = vpop.permute.xlu0 %4241
  %4249 = vrot.lane.b32.xlu0 %v4184, 96
  %v4250 = vpop.permute.xlu0 %4249
  %4251 = vrot.lane.b32.xlu0 %v4183, 96
  %v4252 = vpop.permute.xlu0 %4251
  %4253 = vrot.lane.b32.xlu0 %v4185, 96
  %v4254 = vpop.permute.xlu0 %4253
  %v4258 = vsel %vm2248, %v4159, %v4196
  %v4259 = vsel %vm2248, %v4158, %v4198
  %v4260 = vsel %vm2248, %v4157, %v4200
  %v4261 = vsel %vm2348, %v4258, %v4208
  %v4262 = vsel %vm2348, %v4259, %v4210
  %v4263 = vsel %vm2348, %v4260, %v4212
  %v4264 = vsel %vm3255, %v4261, %v4217
  %v4265 = vsel %vm3255, %v4262, %v4219
  %v4266 = vsel %vm3255, %v4263, %v4221
  %v4267 = vsel %vm2248, %v4151, %v4229
  %v4268 = vsel %vm2248, %v4152, %v4231
  %v4269 = vsel %vm2248, %v4153, %v4233
  %v4270 = vsel %vm2348, %v4267, %v4238
  %v4271 = vsel %vm2348, %v4268, %v4240
  %v4272 = vsel %vm2348, %v4269, %v4242
  %v4273 = vsel %vm3255, %v4270, %v4250
  %v4274 = vsel %vm3255, %v4271, %v4252
  %v4275 = vsel %vm3255, %v4272, %v4254
  %v4276 = vld [vmem:[%s15] sm:$0xff]
  %v4277 = vld [vmem:[%s15 + $0x8] sm:$0xff]
  %v4278 = vld [vmem:[%s15 + $0x10] sm:$0xff]
  %v4279 = vld [vmem:[%s15 + $0x18] sm:$0xff]
  %v4280 = vld [vmem:[%s15 + $0x20] sm:$0xff]
  %v4281 = vld [vmem:[%s15 + $0x28] sm:$0xff]
  %v4282 = vld [vmem:[%s15 + $0x30] sm:$0xff]
  %v4283 = vld [vmem:[%s15 + $0x38] sm:$0xff]
  %v4284 = vld [vmem:[%s15 + $0x40] sm:$0xff]
  %v4285 = vmul.f32 %v4264, %v4276
  %v4286 = vmul.f32 %v4273, %v4277
  %v4287 = vmul.f32 %v4190, %v4278
  %v4288 = vmul.f32 %v4265, %v4279
  %v4289 = vmul.f32 %v4274, %v4280
  %v4290 = vmul.f32 %v4189, %v4281
  %v4291 = vmul.f32 %v4266, %v4282
  %v4292 = vmul.f32 %v4275, %v4283
  %v4293 = vmul.f32 %v4191, %v4284
  %v4294 = vld [vmem:[%s13] sm:$0xff]
  %v4295 = vld [vmem:[%s13 + $0x8] sm:$0xff]
  %v4296 = vld [vmem:[%s13 + $0x10] sm:$0xff]
  %v4297 = vld [vmem:[%s13 + $0x18] sm:$0xff]
  %v4298 = vld [vmem:[%s13 + $0x20] sm:$0xff]
  %v4299 = vld [vmem:[%s13 + $0x28] sm:$0xff]
  %v4300 = vld [vmem:[%s13 + $0x30] sm:$0xff]
  %v4301 = vld [vmem:[%s13 + $0x38] sm:$0xff]
  %v4302 = vld [vmem:[%s13 + $0x40] sm:$0xff]
  %v4303 = vld [vmem:[%s13 + $0x48] sm:$0xff]
  %v4304 = vld [vmem:[%s13 + $0x50] sm:$0xff]
  %v4305 = vld [vmem:[%s13 + $0x58] sm:$0xff]
  %v4306 = vld [vmem:[%s13 + $0x60] sm:$0xff]
  %v4307 = vld [vmem:[%s13 + $0x68] sm:$0xff]
  %v4308 = vld [vmem:[%s13 + $0x70] sm:$0xff]
  %v4309 = vld [vmem:[%s13 + $0x78] sm:$0xff]
  %v4310 = vld [vmem:[%s13 + $0x80] sm:$0xff]
  %v4311 = vld [vmem:[%s13 + $0x88] sm:$0xff]
  %v4312 = vld [vmem:[%s13 + $0x90] sm:$0xff]
  %v4313 = vld [vmem:[%s13 + $0x98] sm:$0xff]
  %v4314 = vld [vmem:[%s13 + $0xa0] sm:$0xff]
  %v4315 = vld [vmem:[%s13 + $0xa8] sm:$0xff]
  %v4316 = vld [vmem:[%s13 + $0xb0] sm:$0xff]
  %v4317 = vld [vmem:[%s13 + $0xb8] sm:$0xff]
  %v4318 = vld [vmem:[%s13 + $0xc0] sm:$0xff]
  %v4319 = vld [vmem:[%s13 + $0xc8] sm:$0xff]
  %v4320 = vld [vmem:[%s13 + $0xd0] sm:$0xff]
  %v4321 = vld [vmem:[%s13 + $0xd8] sm:$0xff]
  %v4322 = vld [vmem:[%s13 + $0xe0] sm:$0xff]
  %v4323 = vld [vmem:[%s13 + $0xe8] sm:$0xff]
  %v4324 = vld [vmem:[%s13 + $0xf0] sm:$0xff]
  %v4325 = vld [vmem:[%s13 + $0xf8] sm:$0xff]
  %v4326 = vld [vmem:[%s13 + $0x100] sm:$0xff]
  %v4327 = vld [vmem:[%s13 + $0x108] sm:$0xff]
  %v4328 = vld [vmem:[%s13 + $0x110] sm:$0xff]
  %v4329 = vld [vmem:[%s13 + $0x118] sm:$0xff]
  %v4330 = vld [vmem:[%s14] sm:$0x1]
  %v4331 = vlaneseq
  %v4332 = vshrl.u32 %v4331, 7
  %v4333 = vsub.s32 0, %v4332
  %v4334 = vrot.slane %v4330, %v4333
  %v4336 = vsel %vm2248, %v4287, 0
  %v4339 = vsel %vm2248, %v4290, 0
  %v4342 = vsel %vm2248, %v4293, 0
  %4344 = vmatprep.subr.mxu0 0.0
  %4345 = vmatpush1.msra.mxu0 %v4294
  %4346 = vmatprep.subr.mxu0 0.0
  %4347 = vmatpush1.msra.mxu0 %v4295
  %4348 = vmatprep.subr.mxu0 0.0
  %4349 = vmatpush1.msra.mxu0 %v4296
  %4350 = vmatprep.subr.mxu0 0.0
  %4351 = vmatpush1.msra.mxu0 %v4297
  %4352 = vmatprep.subr.mxu0 0.0
  %4353 = vmatpush1.msra.mxu0 %v4298
  %4354 = vmatprep.subr.mxu0 0.0
  %4355 = vmatpush1.msra.mxu0 %v4299
  %4356 = vmatprep.subr.mxu0 0.0
  %4357 = vmatpush1.msra.mxu0 %v4300
  %4358 = vmatprep.subr.mxu0 0.0
  %4359 = vmatpush1.msra.mxu0 %v4301
  %4360 = vmatprep.subr.mxu0 0.0
  %4361 = vmatpush1.msra.mxu0 %v4302
  %4362 = vmatprep.subr.mxu0 0.0
  %4363 = vmatpush1.msra.mxu0 %v4303
  %4364 = vmatprep.subr.mxu0 0.0
  %4365 = vmatpush1.msra.mxu0 %v4304
  %4366 = vmatprep.subr.mxu0 0.0
  %4367 = vmatpush1.msra.mxu0 %v4305
  %4368 = vmatprep.subr.mxu0 0.0
  %4369 = vmatpush1.msra.mxu0 %v4306
  %4370 = vmatprep.subr.mxu0 0.0
  %4371 = vmatpush1.msra.mxu0 %v4307
  %4372 = vmatprep.subr.mxu0 0.0
  %4373 = vmatpush1.msra.mxu0 %v4308
  %4374 = vmatprep.subr.mxu0 0.0
  %4375 = vmatpush1.msra.mxu0 %v4309
  %4376 = vmatprep.subr.mxu0 0.0
  %4377 = vmatpush1.msra.mxu0 %v4310
  %4378 = vmatprep.subr.mxu0 0.0
  %4379 = vmatpush1.msra.mxu0 %v4311
  %4380 = vmatprep.subr.mxu0 0.0
  %4381 = vmatpush1.msra.mxu0 %v4312
  %4382 = vmatprep.subr.mxu0 0.0
  %4383 = vmatpush1.msra.mxu0 %v4313
  %4384 = vmatprep.subr.mxu0 0.0
  %4385 = vmatpush1.msra.mxu0 %v4314
  %4386 = vmatprep.subr.mxu0 0.0
  %4387 = vmatpush1.msra.mxu0 %v4315
  %4388 = vmatprep.subr.mxu0 0.0
  %4389 = vmatpush1.msra.mxu0 %v4316
  %4390 = vmatprep.subr.mxu0 0.0
  %4391 = vmatpush1.msra.mxu0 %v4317
  %4392 = vmatprep.subr.mxu0 0.0
  %4393 = vmatpush1.msra.mxu0 %v4318
  %4394 = vmatprep.subr.mxu0 0.0
  %4395 = vmatpush1.msra.mxu0 %v4319
  %4396 = vmatprep.subr.mxu0 0.0
  %4397 = vmatpush1.msra.mxu0 %v4320
  %4398 = vmatprep.subr.mxu0 0.0
  %4399 = vmatpush1.msra.mxu0 %v4321
  %4400 = vmatprep.subr.mxu0 0.0
  %4401 = vmatpush1.msra.mxu0 %v4322
  %4402 = vmatprep.subr.mxu0 0.0
  %4403 = vmatpush1.msra.mxu0 %v4323
  %4404 = vmatprep.subr.mxu0 0.0
  %4405 = vmatpush1.msra.mxu0 %v4324
  %4406 = vmatprep.subr.mxu0 0.0
  %4407 = vmatpush1.msra.mxu0 %v4325
  %4408 = vmatprep.mubr.f32.mxu0 %v4286
  %4409 = vmatmul.mubr.f32.gmra.mrb[0].mxu0 %v4285
  %v4410 = vpop.f32.mrb[0].mxu0
  %v4411 = vadd.f32 %v4334, %v4410
  %v4412 = vpop.f32.mrb[0].mxu0
  %4413 = vmatprep.mubr.f32.mxu0 %v4289
  %4414 = vmatmul.mubr.f32.gmra.mrb[0].mxu0 %v4288
  %v4415 = vpop.f32.mrb[0].mxu0
  %v4416 = vadd.f32 %v4334, %v4415
  %v4417 = vpop.f32.mrb[0].mxu0
  %4418 = vmatprep.mubr.f32.mxu0 %v4292
  %4419 = vmatmul.mubr.f32.gmra.mrb[0].mxu0 %v4291
  %v4420 = vpop.f32.mrb[0].mxu0
  %v4421 = vadd.f32 %v4334, %v4420
  %v4422 = vpop.f32.mrb[0].mxu0
  %4423 = vdwg.mxu0
  %4424 = vmatprep.subr.mxu0 0.0
  %4425 = vmatpush1.msra.mxu0 %v4326
  %4426 = vmatprep.subr.mxu0 0.0
  %4427 = vmatpush1.msra.mxu0 %v4327
  %4428 = vmatprep.subr.mxu0 0.0
  %4429 = vmatpush1.msra.mxu0 %v4328
  %4430 = vmatprep.subr.mxu0 0.0
  %4431 = vmatpush1.msra.mxu0 %v4329
  %4432 = vmatprep.subr.mxu0 0.0
  %4433 = vmatpush1.msra.mxu0 0.0
  %4434 = vmatprep.subr.mxu0 0.0
  %4435 = vmatpush1.msra.mxu0 0.0
  %4436 = vmatprep.subr.mxu0 0.0
  %4437 = vmatpush1.msra.mxu0 0.0
  %4438 = vmatprep.subr.mxu0 0.0
  %4439 = vmatpush1.msra.mxu0 0.0
  %4440 = vmatprep.subr.mxu0 0.0
  %4441 = vmatpush1.msra.mxu0 0.0
  %4442 = vmatprep.subr.mxu0 0.0
  %4443 = vmatpush1.msra.mxu0 0.0
  %4444 = vmatprep.subr.mxu0 0.0
  %4445 = vmatpush1.msra.mxu0 0.0
  %4446 = vmatprep.subr.mxu0 0.0
  %4447 = vmatpush1.msra.mxu0 0.0
  %4448 = vmatprep.subr.mxu0 0.0
  %4449 = vmatpush1.msra.mxu0 0.0
  %4450 = vmatprep.subr.mxu0 0.0
  %4451 = vmatpush1.msra.mxu0 0.0
  %4452 = vmatprep.subr.mxu0 0.0
  %4453 = vmatpush1.msra.mxu0 0.0
  %4454 = vmatprep.subr.mxu0 0.0
  %4455 = vmatpush1.msra.mxu0 0.0
  %4456 = vmatprep.subr.mxu0 0.0
  %4457 = vmatpush1.msra.mxu0 0.0
  %4458 = vmatprep.subr.mxu0 0.0
  %4459 = vmatpush1.msra.mxu0 0.0
  %4460 = vmatprep.subr.mxu0 0.0
  %4461 = vmatpush1.msra.mxu0 0.0
  %4462 = vmatprep.subr.mxu0 0.0
  %4463 = vmatpush1.msra.mxu0 0.0
  %4464 = vmatprep.subr.mxu0 0.0
  %4465 = vmatpush1.msra.mxu0 0.0
  %4466 = vmatprep.subr.mxu0 0.0
  %4467 = vmatpush1.msra.mxu0 0.0
  %4468 = vmatprep.subr.mxu0 0.0
  %4469 = vmatpush1.msra.mxu0 0.0
  %4470 = vmatprep.subr.mxu0 0.0
  %4471 = vmatpush1.msra.mxu0 0.0
  %4472 = vmatprep.subr.mxu0 0.0
  %4473 = vmatpush1.msra.mxu0 0.0
  %4474 = vmatprep.subr.mxu0 0.0
  %4475 = vmatpush1.msra.mxu0 0.0
  %4476 = vmatprep.subr.mxu0 0.0
  %4477 = vmatpush1.msra.mxu0 0.0
  %4478 = vmatprep.subr.mxu0 0.0
  %4479 = vmatpush1.msra.mxu0 0.0
  %4480 = vmatprep.subr.mxu0 0.0
  %4481 = vmatpush1.msra.mxu0 0.0
  %4482 = vmatprep.subr.mxu0 0.0
  %4483 = vmatpush1.msra.mxu0 0.0
  %4484 = vmatprep.subr.mxu0 0.0
  %4485 = vmatpush1.msra.mxu0 0.0
  %4486 = vmatprep.subr.mxu0 0.0
  %4487 = vmatpush1.msra.mxu0 0.0
  %4488 = vmatprep.mubr.f32.mxu0 0.0
  %4489 = vmatmul.mubr.f32.gmra.mrb[0].mxu0 %v4336
  %v4490 = vpop.f32.mrb[0].mxu0
  %v4491 = vadd.f32 %v4411, %v4490
  %v4492 = vpop.f32.mrb[0].mxu0
  %4493 = vmatprep.mubr.f32.mxu0 0.0
  %4494 = vmatmul.mubr.f32.gmra.mrb[0].mxu0 %v4339
  %v4495 = vpop.f32.mrb[0].mxu0
  %v4496 = vadd.f32 %v4416, %v4495
  %v4497 = vpop.f32.mrb[0].mxu0
  %4498 = vmatprep.mubr.f32.mxu0 0.0
  %4499 = vmatmul.mubr.f32.gmra.mrb[0].mxu0 %v4342
  %v4500 = vpop.f32.mrb[0].mxu0
  %v4501 = vadd.f32 %v4421, %v4500
  %v4502 = vpop.f32.mrb[0].mxu0
  %4503 = vdwg.mxu0
  %v4504 = vmax.f32 %v4491, 0.0
  %v4505 = vmax.f32 %v4496, 0.0
  %v4506 = vmax.f32 %v4501, 0.0
  %v4507 = vld [vmem:[%s14 + $0x1] sm:$0x1]
  %v4508 = vlaneseq
  %v4509 = vshrl.u32 %v4508, 7
  %v4510 = vsub.s32 0, %v4509
  %v4511 = vrot.slane %v4507, %v4510
  %v4512 = vmul.f32 %v4504, %v4511
  %v4513 = vmul.f32 %v4505, %v4511
  %v4514 = vmul.f32 %v4506, %v4511
  %v4515 = vld [vmem:[%s14 + $0x2] sm:$0x1]
  %v4516 = vlaneseq
  %v4517 = vshrl.u32 %v4516, 7
  %v4518 = vsub.s32 0, %v4517
  %v4519 = vrot.slane %v4515, %v4518
  %v4520 = vadd.f32 %v4512, %v4519
  %v4521 = vadd.f32 %v4513, %v4519
  %v4522 = vadd.f32 %v4514, %v4519
  %4523 = vst.msk [vmem:[#allocation2] sm:$0xff] %vm2248, %v4520
  %4524 = vst.msk [vmem:[#allocation2 + $0x8] sm:$0xff] %vm2248, %v4521
  %4525 = vst.msk [vmem:[#allocation2 + $0x10] sm:$0xff] %vm2248, %v4522
  %v4526 = vld [vmem:[#allocation2] ss:$2 sm:$0xff]
  %v4527 = vld [vmem:[%s2800] ss:$2 sm:$0xf]
  %v4528 = vld [vmem:[%s2822] ss:$2 sm:$0xff]
  %v4529 = vld [vmem:[%s2824] ss:$2 sm:$0xf]
  %v4530 = vmax.f32 %v4526, %v4528
  %v4531 = vmax.f32 %v4527, %v4529
  %4532 = vst.msk [vmem:[#allocation2] sm:$0xff] %vm2248, %v4530
  %vm4533 = vcmask 257024
  %4534 = vst.msk [vmem:[#allocation2 + $0x8] sm:$0xf] %vm4533, %v4531
  %v4535 = vld [vmem:[#allocation2] ss:$6 sm:$0x3]
  %v4536 = vld [vmem:[%s2822] ss:$6 sm:$0x3]
  %s4537 = scalar_lea.vmem [#allocation2], 2
  %v4538 = vld [vmem:[%s4537] ss:$6 sm:$0x3]
  %s4539 = scalar_lea.vmem [#allocation2], 3
  %v4540 = vld [vmem:[%s4539] ss:$6 sm:$0x3]
  %s4541 = scalar_lea.vmem [#allocation2], 4
  %v4542 = vld [vmem:[%s4541] ss:$6 sm:$0x3]
  %s4543 = scalar_lea.vmem [#allocation2], 5
  %v4544 = vld [vmem:[%s4543] ss:$6 sm:$0x3]
  %4546 = vrot.lane.b32.xlu0 %v4536, 32
  %v4547 = vpop.permute.xlu0 %4546
  %4550 = vrot.lane.b32.xlu0 %v4538, 64
  %v4551 = vpop.permute.xlu0 %4550
  %4554 = vrot.lane.b32.xlu0 %v4540, 96
  %v4555 = vpop.permute.xlu0 %4554
  %4558 = vrot.lane.b32.xlu0 %v4544, 32
  %v4559 = vpop.permute.xlu0 %4558
  %v4561 = vsel %vm2248, %v4535, %v4547
  %v4562 = vsel %vm2348, %v4561, %v4551
  %v4563 = vsel %vm3255, %v4562, %v4555
  %v4564 = vsel %vm2248, %v4542, %v4559
  %v4565 = vld [vmem:[%s16] sm:$0xff]
  %v4566 = vld [vmem:[%s16 + $0x8] sm:$0xff]
  %v4567 = vld [vmem:[%s16 + $0x10] sm:$0xff]
  %v4568 = vld [vmem:[%s16 + $0x18] sm:$0xff]
  %v4569 = vld [vmem:[%s16 + $0x20] sm:$0xff]
  %v4570 = vld [vmem:[%s16 + $0x28] sm:$0xff]
  %v4571 = vld [vmem:[%s16 + $0x30] sm:$0xff]
  %v4572 = vld [vmem:[%s16 + $0x38] sm:$0xff]
  %v4573 = vld [vmem:[%s16 + $0x40] sm:$0xff]
  %v4574 = vld [vmem:[%s16 + $0x48] sm:$0xff]
  %v4575 = vld [vmem:[%s16 + $0x50] sm:$0xff]
  %v4576 = vld [vmem:[%s16 + $0x58] sm:$0xff]
  %v4577 = vld [vmem:[%s16 + $0x60] sm:$0xff]
  %v4578 = vld [vmem:[%s16 + $0x68] sm:$0xff]
  %v4579 = vld [vmem:[%s16 + $0x70] sm:$0xff]
  %v4580 = vld [vmem:[%s16 + $0x78] sm:$0xff]
  %v4581 = vld [vmem:[%s16 + $0x80] sm:$0xff]
  %v4582 = vld [vmem:[%s16 + $0x88] sm:$0xff]
  %v4583 = vld [vmem:[%s16 + $0x90] sm:$0xff]
  %v4584 = vld [vmem:[%s16 + $0x98] sm:$0xff]
  %v4585 = vld [vmem:[%s16 + $0xa0] sm:$0xff]
  %v4586 = vld [vmem:[%s16 + $0xa8] sm:$0xff]
  %v4587 = vld [vmem:[%s16 + $0xb0] sm:$0xff]
  %v4588 = vld [vmem:[%s16 + $0xb8] sm:$0xff]
  %v4589 = vld [vmem:[%s17] sm:$0x1]
  %v4591 = vlaneseq
  %v4592 = vshrl.u32 %v4591, 7
  %v4593 = vsub.s32 0, %v4592
  %v4594 = vrot.slane %v4589, %v4593
  %v4597 = vsel %vm2348, %v4564, 0
  %4599 = vmatprep.subr.mxu0 0.0
  %4600 = vmatpush1.msra.mxu0 %v4565
  %4601 = vmatprep.subr.mxu0 0.0
  %4602 = vmatpush1.msra.mxu0 %v4566
  %4603 = vmatprep.subr.mxu0 0.0
  %4604 = vmatpush1.msra.mxu0 %v4567
  %4605 = vmatprep.subr.mxu0 0.0
  %4606 = vmatpush1.msra.mxu0 %v4568
  %4607 = vmatprep.subr.mxu0 0.0
  %4608 = vmatpush1.msra.mxu0 %v4569
  %4609 = vmatprep.subr.mxu0 0.0
  %4610 = vmatpush1.msra.mxu0 %v4570
  %4611 = vmatprep.subr.mxu0 0.0
  %4612 = vmatpush1.msra.mxu0 %v4571
  %4613 = vmatprep.subr.mxu0 0.0
  %4614 = vmatpush1.msra.mxu0 %v4572
  %4615 = vmatprep.subr.mxu0 0.0
  %4616 = vmatpush1.msra.mxu0 %v4573
  %4617 = vmatprep.subr.mxu0 0.0
  %4618 = vmatpush1.msra.mxu0 %v4574
  %4619 = vmatprep.subr.mxu0 0.0
  %4620 = vmatpush1.msra.mxu0 %v4575
  %4621 = vmatprep.subr.mxu0 0.0
  %4622 = vmatpush1.msra.mxu0 %v4576
  %4623 = vmatprep.subr.mxu0 0.0
  %4624 = vmatpush1.msra.mxu0 %v4577
  %4625 = vmatprep.subr.mxu0 0.0
  %4626 = vmatpush1.msra.mxu0 %v4578
  %4627 = vmatprep.subr.mxu0 0.0
  %4628 = vmatpush1.msra.mxu0 %v4579
  %4629 = vmatprep.subr.mxu0 0.0
  %4630 = vmatpush1.msra.mxu0 %v4580
  %4631 = vmatprep.subr.mxu0 0.0
  %4632 = vmatpush1.msra.mxu0 %v4581
  %4633 = vmatprep.subr.mxu0 0.0
  %4634 = vmatpush1.msra.mxu0 %v4582
  %4635 = vmatprep.subr.mxu0 0.0
  %4636 = vmatpush1.msra.mxu0 %v4583
  %4637 = vmatprep.subr.mxu0 0.0
  %4638 = vmatpush1.msra.mxu0 %v4584
  %4639 = vmatprep.subr.mxu0 0.0
  %4640 = vmatpush1.msra.mxu0 %v4585
  %4641 = vmatprep.subr.mxu0 0.0
  %4642 = vmatpush1.msra.mxu0 %v4586
  %4643 = vmatprep.subr.mxu0 0.0
  %4644 = vmatpush1.msra.mxu0 %v4587
  %4645 = vmatprep.subr.mxu0 0.0
  %4646 = vmatpush1.msra.mxu0 %v4588
  %4647 = vmatprep.subr.mxu0 0.0
  %4648 = vmatpush1.msra.mxu0 0.0
  %4649 = vmatprep.subr.mxu0 0.0
  %4650 = vmatpush1.msra.mxu0 0.0
  %4651 = vmatprep.subr.mxu0 0.0
  %4652 = vmatpush1.msra.mxu0 0.0
  %4653 = vmatprep.subr.mxu0 0.0
  %4654 = vmatpush1.msra.mxu0 0.0
  %4655 = vmatprep.subr.mxu0 0.0
  %4656 = vmatpush1.msra.mxu0 0.0
  %4657 = vmatprep.subr.mxu0 0.0
  %4658 = vmatpush1.msra.mxu0 0.0
  %4659 = vmatprep.subr.mxu0 0.0
  %4660 = vmatpush1.msra.mxu0 0.0
  %4661 = vmatprep.subr.mxu0 0.0
  %4662 = vmatpush1.msra.mxu0 0.0
  %4663 = vmatprep.mubr.f32.mxu0 %v4597
  %4664 = vmatmul.mubr.f32.gmra.mrb[0].mxu0 %v4563
  %v4665 = vpop.f32.mrb[0].mxu0
  %v4666 = vadd.f32 %v4594, %v4665
  %v4667 = vpop.f32.mrb[0].mxu0
  %4668 = vdwg.mxu0
  %vm4669 = vcmask 17416
  %v4670 = vsel %vm4669, %v4666, -inf
  %4671 = vmax.xlane.f32.xlu0 %v4670
  %v4672 = vpop.xlane.xlu0 %4671
  %v4673 = vsub.f32 %v4666, %v4672
  %v4674 = vmul.f32 %v4673, 1.442695
  %v4675 = vpow.pop %v4674
  %4677 = vrot.lane.b32.xlu0 %v4675, 127
  %v4678 = vpop.permute.xlu0 %4677
  %vm4680 = vcmask 9216
  %v4681 = vsel %vm4680, %v4678, 0.0
  %4682 = vadd.xlane.f32.xlu0 %v4681
  %v4683 = vpop.xlane.xlu0 %4682
  %v4684 = vrcp.pop %v4683
  %v4685 = vmul.f32 %v4675, %v4684
  %4687 = vrot.lane.b32.xlu0 %v4685, 2
  %v4688 = vpop.permute.xlu0 %4687
  %v4690 = vsel %vm881, %v4666, %v4688
  %v4691 = vsel %vm931, %v4690, 0.0
  %vm4692 = vcmask 58368
  %4693 = vst.msk [vmem:[%s18] sm:$0x3] %vm4692, %v4691
  // Predicated region
  $region74: #{forward.1} parent=0 // pred_check
    _
  $region75: #{forward.1} parent=0 // pred_check_branch
    %4695 = sbr.rel (0) target = $region77
  $region76: #{forward.1} parent=0 // pred_region
    _
  $region77: #{forward.1} parent=0 // pred_fallthru
    _
  // Predicated region
  $region78: #{forward.1} parent=0 // pred_check
    _
  $region79: #{forward.1} parent=0 // pred_check_branch
    %4697 = sbr.rel (0) target = $region81
  $region80: #{forward.1} parent=0 // pred_region
    _
  $region81: #{forward.1} parent=0 // pred_fallthru
    _

</llo_original>
